<compile_context>
chip_gen: v6e
topology: v6e:2x2x1
jax: 0.10.0
libtpu: 0.0.40
codegen_flags: <defaults>
</compile_context>

<pallas_src>
import jax
import jax.numpy as jnp
from jax import lax
from jax.experimental import pallas as pl
from jax.experimental.pallas import tpu as pltpu


# ----------------------------- Pallas kernel --------------------------------

_SH_IDX = {-2: 0, -1: 1, 1: 2, 2: 3}   # row index into the stacked (H,H) shift mats


def _c2f_lska_kernel(x_ref, sh_ref,
                     cv1m0_ref, cv1m1_ref, cv1s0_ref, cv1b0_ref, cv1s1_ref, cv1b1_ref,
                     a1_ref, m1s_ref, m1b_ref,
                     a2_ref, m2s_ref, m2b_ref,
                     dh1_ref, bh1_ref, wv1_ref, bv1_ref,
                     dh2_ref, bh2_ref, wv2_ref, bv2_ref,
                     w1m_ref, b1r_ref,
                     c20_ref, c21_ref, c22_ref, c2s_ref, c2b_ref,
                     o_ref):
    f32 = jnp.float32

    def mm(a, b):
        return jnp.dot(a, b, preferred_element_type=f32)

    def silu(v):
        return v * jax.nn.sigmoid(v)

    def hshift(v, dy):
        # rows of the result are the input rows shifted by dy (zero padded),
        # implemented as a small (H, H) matmul on the otherwise idle MXU.
        if dy == 0:
            return v
        return mm(sh_ref[_SH_IDX[dy]], v)

    x = x_ref[0]                                               # (H, W*C1)

    # ---- cv1: 1x1 conv + BN + SiLU, emitted directly as the two c-chunks ----
    y0 = silu(mm(x, cv1m0_ref[...]) * cv1s0_ref[...] + cv1b0_ref[...])   # (H, W*c)
    y1 = silu(mm(x, cv1m1_ref[...]) * cv1s1_ref[...] + cv1b1_ref[...])   # (H, W*c)

    # ---- Bottleneck: two dense 3x3 convs (+BN+SiLU), all taps on the MXU ----
    def dense3x3(v, a_ref, s_ref, b_ref):
        acc = mm(v, a_ref[1])                                  # dy = 0 taps
        acc = acc + hshift(mm(v, a_ref[0]), -1)                # dy = -1 taps
        acc = acc + hshift(mm(v, a_ref[2]), +1)                # dy = +1 taps
        return silu(acc * s_ref[...] + b_ref[...])

    h1 = dense3x3(y1, a1_ref, m1s_ref, m1b_ref)
    u = dense3x3(h1, a2_ref, m2s_ref, m2b_ref)                 # LSKA residual "u"

    # ---- LSKA(dim, k_size=7) ----
    a = mm(u, dh1_ref[...]) + bh1_ref[...]                     # conv0h (1x3 dw)
    t = a * wv1_ref[1]                                         # conv0v (3x1 dw)
    t = t + hshift(a * wv1_ref[0], -1)
    t = t + hshift(a * wv1_ref[2], +1)
    a = t + bv1_ref[...]
    a = mm(a, dh2_ref[...]) + bh2_ref[...]                     # conv_spatial_h (dil 2)
    t = a * wv2_ref[1]                                         # conv_spatial_v (dil 2)
    t = t + hshift(a * wv2_ref[0], -2)
    t = t + hshift(a * wv2_ref[2], +2)
    a = t + bv2_ref[...]
    attn = mm(a, w1m_ref[...]) + b1r_ref[...]                  # conv1 (1x1 + bias)
    y2 = u * attn

    # ---- cv2: 1x1 conv over concat(y0, y1, y2) + BN + SiLU ----
    z = mm(y0, c20_ref[...]) + mm(y1, c21_ref[...]) + mm(y2, c22_ref[...])
    o_ref[0] = silu(z * c2s_ref[...] + c2b_ref[...])


# ----------------------------- operand building ------------------------------

def _row(v, W):
    # per-channel vector -> per-lane row for the (H, W*C) layout (lane = w*C + c)
    return jnp.tile(v, W).reshape(1, -1)


def _pixel_mix(wmat, W):
    # wmat: (Cout, Cin).  X (H, W*Cin) @ result -> (H, W*Cout)  (1x1 conv)
    return jnp.kron(jnp.eye(W, dtype=jnp.float32), wmat.T)


def _build_operands(x_nchw, p):
    N, c1, H, W = x_nchw.shape
    c = p["c"]
    c2 = p["cv2_w"].shape[0]
    f32 = jnp.float32
    eyeW = lambda k: jnp.eye(W, k=k, dtype=f32)

    # NCHW -> (N, H, W*c1) with channel-minor lanes (lane index = w*c1 + ci)
    x = jnp.transpose(x_nchw.astype(f32), (0, 2, 3, 1)).reshape(N, H, W * c1)

    # vertical (row) shift matrices, order: dy = -2, -1, +1, +2
    sh = jnp.stack([jnp.eye(H, k=k, dtype=f32) for k in (-2, -1, 1, 2)])

    # cv1 (c1 -> 2c): split output channels into the two c-wide halves
    cv1m0 = _pixel_mix(p["cv1_w"][:c], W)
    cv1m1 = _pixel_mix(p["cv1_w"][c:], W)
    cv1s0, cv1b0 = _row(p["cv1_s"][:c], W), _row(p["cv1_b"][:c], W)
    cv1s1, cv1b1 = _row(p["cv1_s"][c:], W), _row(p["cv1_b"][c:], W)

    # dense 3x3 convs: per-dy matrices that combine the horizontal shift with
    # the channel mixing of the three dx taps
    def dense_mats(k_oihw):
        mats = []
        for dy in (-1, 0, 1):
            m = jnp.zeros((W * c, W * c), f32)
            for dx in (-1, 0, 1):
                m = m + jnp.kron(eyeW(-dx), k_oihw[:, :, dy + 1, dx + 1].T)
            mats.append(m)
        return jnp.stack(mats)                                 # (3, W*c, W*c)

    m1A = dense_mats(p["m_cv1_w"])
    m2A = dense_mats(p["m_cv2_w"])
    m1s, m1b = _row(p["m_cv1_s"], W), _row(p["m_cv1_b"], W)
    m2s, m2b = _row(p["m_cv2_s"], W), _row(p["m_cv2_b"], W)

    lp = p["lska"]

    def dw_h_mat(wk, dil):
        # depthwise (1,3) conv with dilation `dil`, per-channel taps wk (c, 3)
        m = jnp.zeros((W * c, W * c), f32)
        for i in range(3):
            m = m + jnp.kron(eyeW(-dil * (i - 1)), jnp.diag(wk[:, i]))
        return m

    dh1, bh1 = dw_h_mat(lp["w0h"], 1), _row(lp["b0h"], W)
    dh2, bh2 = dw_h_mat(lp["wsh"], 2), _row(lp["bsh"], W)
    wv1 = jnp.stack([_row(lp["w0v"][:, j], W) for j in range(3)])   # (3, 1, W*c)
    wv2 = jnp.stack([_row(lp["wsv"][:, j], W) for j in range(3)])
    bv1, bv2 = _row(lp["b0v"], W), _row(lp["bsv"], W)
    w1m, b1r = _pixel_mix(lp["w1"], W), _row(lp["b1"], W)

    # cv2 ((2+n)*c -> c2): one mixing matrix per concatenated branch (no XLA concat)
    c20 = _pixel_mix(p["cv2_w"][:, 0 * c:1 * c], W)
    c21 = _pixel_mix(p["cv2_w"][:, 1 * c:2 * c], W)
    c22 = _pixel_mix(p["cv2_w"][:, 2 * c:3 * c], W)
    c2s, c2b = _row(p["cv2_s"], W), _row(p["cv2_b"], W)

    operands = [x, sh,
                cv1m0, cv1m1, cv1s0, cv1b0, cv1s1, cv1b1,
                m1A, m1s, m1b, m2A, m2s, m2b,
                dh1, bh1, wv1, bv1, dh2, bh2, wv2, bv2, w1m, b1r,
                c20, c21, c22, c2s, c2b]
    return operands, (N, H, W, c1, c, c2)


# ----------------------------- forward wrapper --------------------------------

def c2f_lska_forward(x_nchw, p):
    operands, (N, H, W, c1, c, c2) = _build_operands(x_nchw, p)

    in_specs = [pl.BlockSpec((1, H, W * c1), lambda n: (n, 0, 0))]
    for arr in operands[1:]:
        in_specs.append(pl.BlockSpec(arr.shape, lambda n, nd=arr.ndim: (0,) * nd))

    out = pl.pallas_call(
        _c2f_lska_kernel,
        out_shape=jax.ShapeDtypeStruct((N, H, W * c2), jnp.float32),
        grid=(N,),
        in_specs=in_specs,
        out_specs=pl.BlockSpec((1, H, W * c2), lambda n: (n, 0, 0)),
        compiler_params=pltpu.CompilerParams(
            dimension_semantics=("parallel",)),
    )(*operands)

    # (N, H, W*c2) -> (N, c2, H, W)
    return jnp.transpose(out.reshape(N, H, W, c2), (0, 3, 1, 2))


# ----------------------------- parameters ------------------------------------

def _bn_fold(key, ch):
    k1, k2, k3, k4 = jax.random.split(key, 4)
    gamma = jax.random.uniform(k1, (ch,), jnp.float32, 0.5, 1.5)
    beta = 0.1 * jax.random.normal(k2, (ch,), jnp.float32)
    mean = 0.1 * jax.random.normal(k3, (ch,), jnp.float32)
    var = jax.random.uniform(k4, (ch,), jnp.float32, 0.5, 1.5)
    scale = gamma / jnp.sqrt(var + 1e-5)
    bias = beta - mean * scale
    return scale, bias


def init_params(key, c1, c2, e=0.5):
    c = int(c2 * e)
    ks = jax.random.split(key, 20)

    def nrm(k, shape, s=0.25):
        return s * jax.random.normal(k, shape, jnp.float32)

    p = {"c": c}
    p["cv1_w"] = nrm(ks[0], (2 * c, c1))                     # 1x1 (out, in)
    p["cv1_s"], p["cv1_b"] = _bn_fold(ks[1], 2 * c)
    p["cv2_w"] = nrm(ks[2], (c2, 3 * c))
    p["cv2_s"], p["cv2_b"] = _bn_fold(ks[3], c2)
    p["m_cv1_w"] = nrm(ks[4], (c, c, 3, 3))                  # OIHW
    p["m_cv1_s"], p["m_cv1_b"] = _bn_fold(ks[5], c)
    p["m_cv2_w"] = nrm(ks[6], (c, c, 3, 3))
    p["m_cv2_s"], p["m_cv2_b"] = _bn_fold(ks[7], c)
    lp = {}
    lp["w0h"] = nrm(ks[8], (c, 3), 0.3);  lp["b0h"] = nrm(ks[9], (c,), 0.1)
    lp["w0v"] = nrm(ks[10], (c, 3), 0.3); lp["b0v"] = nrm(ks[11], (c,), 0.1)
    lp["wsh"] = nrm(ks[12], (c, 3), 0.3); lp["bsh"] = nrm(ks[13], (c,), 0.1)
    lp["wsv"] = nrm(ks[14], (c, 3), 0.3); lp["bsv"] = nrm(ks[15], (c,), 0.1)
    lp["w1"] = nrm(ks[16], (c, c), 0.25); lp["b1"] = nrm(ks[17], (c,), 0.1)
    p["lska"] = lp
    return p


# ----------------------------- pure-JAX reference -----------------------------

def _ref_forward(x_nchw, p):
    x = x_nchw.astype(jnp.float32)
    c = p["c"]
    dn = ("NCHW", "OIHW", "NCHW")
    HIGH = lax.Precision.HIGHEST
    silu = lambda v: v * jax.nn.sigmoid(v)

    def cbr(v, w_oihw, s, b, padding):
        y = lax.conv_general_dilated(v, w_oihw, (1, 1), padding,
                                     dimension_numbers=dn, precision=HIGH)
        y = y * s.reshape(1, -1, 1, 1) + b.reshape(1, -1, 1, 1)
        return silu(y)

    def dw(v, w_oihw, bias, padding, rhs_dilation):
        C = v.shape[1]
        y = lax.conv_general_dilated(v, w_oihw, (1, 1), padding,
                                     rhs_dilation=rhs_dilation,
                                     dimension_numbers=dn,
                                     feature_group_count=C, precision=HIGH)
        return y + bias.reshape(1, -1, 1, 1)

    lp = p["lska"]

    t = cbr(x, p["cv1_w"].reshape(2 * c, -1, 1, 1), p["cv1_s"], p["cv1_b"],
            ((0, 0), (0, 0)))
    y0, y1 = t[:, :c], t[:, c:]
    h1 = cbr(y1, p["m_cv1_w"], p["m_cv1_s"], p["m_cv1_b"], ((1, 1), (1, 1)))
    u = cbr(h1, p["m_cv2_w"], p["m_cv2_s"], p["m_cv2_b"], ((1, 1), (1, 1)))

    a = dw(u, lp["w0h"].reshape(c, 1, 1, 3), lp["b0h"], ((0, 0), (1, 1)), (1, 1))
    a = dw(a, lp["w0v"].reshape(c, 1, 3, 1), lp["b0v"], ((1, 1), (0, 0)), (1, 1))
    a = dw(a, lp["wsh"].reshape(c, 1, 1, 3), lp["bsh"], ((0, 0), (2, 2)), (1, 2))
    a = dw(a, lp["wsv"].reshape(c, 1, 3, 1), lp["bsv"], ((2, 2), (0, 0)), (2, 1))
    a = lax.conv_general_dilated(a, lp["w1"].reshape(c, c, 1, 1), (1, 1),
                                 ((0, 0), (0, 0)), dimension_numbers=dn,
                                 precision=HIGH) + lp["b1"].reshape(1, -1, 1, 1)
    y2 = u * a

    cat = jnp.concatenate([y0, y1, y2], axis=1)
    out = cbr(cat, p["cv2_w"].reshape(p["cv2_w"].shape[0], -1, 1, 1),
              p["cv2_s"], p["cv2_b"], ((0, 0), (0, 0)))
    return out


# ----------------------------- main -------------------------------------------

if __name__ == "__main__":
    key = jax.random.PRNGKey(0)
    kx, kp = jax.random.split(key)
    N, C1, C2, H, W = 2, 16, 16, 16, 16          # NCHW input, PyTorch convention
    x = jax.random.normal(kx, (N, C1, H, W), dtype=jnp.float32)
    params = init_params(kp, C1, C2)

    out = c2f_lska_forward(x, params)
    out = jax.block_until_ready(out)
    assert out.shape == (N, C2, H, W), out.shape

    ref = _ref_forward(x, params)
    err = float(jnp.max(jnp.abs(out - ref)))
    assert err < 1e-2, f"max abs err {err}"
    print("KERNEL_OK")
</pallas_src>

<mosaic_0001>
module attributes {stable_mosaic.version = 11 : i64} {
  func.func @_c2f_lska_kernel(%arg0: i32, %arg1: memref<1x16x256xf32, #tpu.memory_space<vmem>>, %arg2: memref<4x16x16xf32, #tpu.memory_space<vmem>>, %arg3: memref<256x128xf32, #tpu.memory_space<vmem>>, %arg4: memref<256x128xf32, #tpu.memory_space<vmem>>, %arg5: memref<1x128xf32, #tpu.memory_space<vmem>>, %arg6: memref<1x128xf32, #tpu.memory_space<vmem>>, %arg7: memref<1x128xf32, #tpu.memory_space<vmem>>, %arg8: memref<1x128xf32, #tpu.memory_space<vmem>>, %arg9: memref<3x128x128xf32, #tpu.memory_space<vmem>>, %arg10: memref<1x128xf32, #tpu.memory_space<vmem>>, %arg11: memref<1x128xf32, #tpu.memory_space<vmem>>, %arg12: memref<3x128x128xf32, #tpu.memory_space<vmem>>, %arg13: memref<1x128xf32, #tpu.memory_space<vmem>>, %arg14: memref<1x128xf32, #tpu.memory_space<vmem>>, %arg15: memref<128x128xf32, #tpu.memory_space<vmem>>, %arg16: memref<1x128xf32, #tpu.memory_space<vmem>>, %arg17: memref<3x1x128xf32, #tpu.memory_space<vmem>>, %arg18: memref<1x128xf32, #tpu.memory_space<vmem>>, %arg19: memref<128x128xf32, #tpu.memory_space<vmem>>, %arg20: memref<1x128xf32, #tpu.memory_space<vmem>>, %arg21: memref<3x1x128xf32, #tpu.memory_space<vmem>>, %arg22: memref<1x128xf32, #tpu.memory_space<vmem>>, %arg23: memref<128x128xf32, #tpu.memory_space<vmem>>, %arg24: memref<1x128xf32, #tpu.memory_space<vmem>>, %arg25: memref<128x256xf32, #tpu.memory_space<vmem>>, %arg26: memref<128x256xf32, #tpu.memory_space<vmem>>, %arg27: memref<128x256xf32, #tpu.memory_space<vmem>>, %arg28: memref<1x256xf32, #tpu.memory_space<vmem>>, %arg29: memref<1x256xf32, #tpu.memory_space<vmem>>, %arg30: memref<1x16x256xf32, #tpu.memory_space<vmem>>) attributes {dimension_semantics = [#tpu.dimension_semantics<parallel>], iteration_bounds = array<i64: 2>, scalar_prefetch = 0 : i64, scratch_operands = 0 : i64, tpu.core_type = #tpu.core_type<tc>, window_params = [{transform_indices = @transform_0, window_bounds = array<i64: 1, 16, 256>}, {pipeline_mode = #tpu.pipeline_mode<synchronous>, transform_indices = @transform_1, window_bounds = array<i64: 4, 16, 16>}, {pipeline_mode = #tpu.pipeline_mode<synchronous>, transform_indices = @transform_2, window_bounds = array<i64: 256, 128>}, {pipeline_mode = #tpu.pipeline_mode<synchronous>, transform_indices = @transform_3, window_bounds = array<i64: 256, 128>}, {pipeline_mode = #tpu.pipeline_mode<synchronous>, transform_indices = @transform_4, window_bounds = array<i64: 1, 128>}, {pipeline_mode = #tpu.pipeline_mode<synchronous>, transform_indices = @transform_5, window_bounds = array<i64: 1, 128>}, {pipeline_mode = #tpu.pipeline_mode<synchronous>, transform_indices = @transform_6, window_bounds = array<i64: 1, 128>}, {pipeline_mode = #tpu.pipeline_mode<synchronous>, transform_indices = @transform_7, window_bounds = array<i64: 1, 128>}, {pipeline_mode = #tpu.pipeline_mode<synchronous>, transform_indices = @transform_8, window_bounds = array<i64: 3, 128, 128>}, {pipeline_mode = #tpu.pipeline_mode<synchronous>, transform_indices = @transform_9, window_bounds = array<i64: 1, 128>}, {pipeline_mode = #tpu.pipeline_mode<synchronous>, transform_indices = @transform_10, window_bounds = array<i64: 1, 128>}, {pipeline_mode = #tpu.pipeline_mode<synchronous>, transform_indices = @transform_11, window_bounds = array<i64: 3, 128, 128>}, {pipeline_mode = #tpu.pipeline_mode<synchronous>, transform_indices = @transform_12, window_bounds = array<i64: 1, 128>}, {pipeline_mode = #tpu.pipeline_mode<synchronous>, transform_indices = @transform_13, window_bounds = array<i64: 1, 128>}, {pipeline_mode = #tpu.pipeline_mode<synchronous>, transform_indices = @transform_14, window_bounds = array<i64: 128, 128>}, {pipeline_mode = #tpu.pipeline_mode<synchronous>, transform_indices = @transform_15, window_bounds = array<i64: 1, 128>}, {pipeline_mode = #tpu.pipeline_mode<synchronous>, transform_indices = @transform_16, window_bounds = array<i64: 3, 1, 128>}, {pipeline_mode = #tpu.pipeline_mode<synchronous>, transform_indices = @transform_17, window_bounds = array<i64: 1, 128>}, {pipeline_mode = #tpu.pipeline_mode<synchronous>, transform_indices = @transform_18, window_bounds = array<i64: 128, 128>}, {pipeline_mode = #tpu.pipeline_mode<synchronous>, transform_indices = @transform_19, window_bounds = array<i64: 1, 128>}, {pipeline_mode = #tpu.pipeline_mode<synchronous>, transform_indices = @transform_20, window_bounds = array<i64: 3, 1, 128>}, {pipeline_mode = #tpu.pipeline_mode<synchronous>, transform_indices = @transform_21, window_bounds = array<i64: 1, 128>}, {pipeline_mode = #tpu.pipeline_mode<synchronous>, transform_indices = @transform_22, window_bounds = array<i64: 128, 128>}, {pipeline_mode = #tpu.pipeline_mode<synchronous>, transform_indices = @transform_23, window_bounds = array<i64: 1, 128>}, {pipeline_mode = #tpu.pipeline_mode<synchronous>, transform_indices = @transform_24, window_bounds = array<i64: 128, 256>}, {pipeline_mode = #tpu.pipeline_mode<synchronous>, transform_indices = @transform_25, window_bounds = array<i64: 128, 256>}, {pipeline_mode = #tpu.pipeline_mode<synchronous>, transform_indices = @transform_26, window_bounds = array<i64: 128, 256>}, {pipeline_mode = #tpu.pipeline_mode<synchronous>, transform_indices = @transform_27, window_bounds = array<i64: 1, 256>}, {pipeline_mode = #tpu.pipeline_mode<synchronous>, transform_indices = @transform_28, window_bounds = array<i64: 1, 256>}, {transform_indices = @transform_29, window_bounds = array<i64: 1, 16, 256>}]} {
    %c0 = arith.constant 0 : index
    %c0_0 = arith.constant 0 : index
    %c0_1 = arith.constant 0 : index
    %0 = vector.load %arg1[%c0, %c0_0, %c0_1] : memref<1x16x256xf32, #tpu.memory_space<vmem>>, vector<1x16x256xf32>
    %1 = vector.shape_cast %0 : vector<1x16x256xf32> to vector<16x256xf32>
    %c0_2 = arith.constant 0 : index
    %c0_3 = arith.constant 0 : index
    %2 = vector.load %arg3[%c0_2, %c0_3] : memref<256x128xf32, #tpu.memory_space<vmem>>, vector<256x128xf32>
    %cst = arith.constant dense<0.000000e+00> : vector<16x128xf32>
    %3 = tpu.matmul %1, %2, %cst {dimension_numbers = #tpu.dot_dimension_numbers<[1], [0], [0], [1], [0, 0, 1, 1], [], []>} : vector<16x256xf32>, vector<256x128xf32>, vector<16x128xf32> -> vector<16x128xf32>
    %c0_4 = arith.constant 0 : index
    %c0_5 = arith.constant 0 : index
    %4 = vector.load %arg5[%c0_4, %c0_5] : memref<1x128xf32, #tpu.memory_space<vmem>>, vector<1x128xf32>
    %5 = vector.broadcast %4 : vector<1x128xf32> to vector<16x128xf32>
    %6 = arith.mulf %3, %5 : vector<16x128xf32>
    %c0_6 = arith.constant 0 : index
    %c0_7 = arith.constant 0 : index
    %7 = vector.load %arg6[%c0_6, %c0_7] : memref<1x128xf32, #tpu.memory_space<vmem>>, vector<1x128xf32>
    %8 = vector.broadcast %7 : vector<1x128xf32> to vector<16x128xf32>
    %9 = arith.addf %6, %8 : vector<16x128xf32>
    %10 = arith.negf %9 : vector<16x128xf32>
    %11 = math.exp %10 : vector<16x128xf32>
    %cst_8 = arith.constant 1.000000e+00 : f32
    %12 = vector.broadcast %cst_8 : f32 to vector<16x128xf32>
    %13 = arith.addf %12, %11 : vector<16x128xf32>
    %14 = arith.divf %12, %13 : vector<16x128xf32>
    %15 = arith.mulf %9, %14 : vector<16x128xf32>
    %c0_9 = arith.constant 0 : index
    %c0_10 = arith.constant 0 : index
    %16 = vector.load %arg4[%c0_9, %c0_10] : memref<256x128xf32, #tpu.memory_space<vmem>>, vector<256x128xf32>
    %cst_11 = arith.constant dense<0.000000e+00> : vector<16x128xf32>
    %17 = tpu.matmul %1, %16, %cst_11 {dimension_numbers = #tpu.dot_dimension_numbers<[1], [0], [0], [1], [0, 0, 1, 1], [], []>} : vector<16x256xf32>, vector<256x128xf32>, vector<16x128xf32> -> vector<16x128xf32>
    %c0_12 = arith.constant 0 : index
    %c0_13 = arith.constant 0 : index
    %18 = vector.load %arg7[%c0_12, %c0_13] : memref<1x128xf32, #tpu.memory_space<vmem>>, vector<1x128xf32>
    %19 = vector.broadcast %18 : vector<1x128xf32> to vector<16x128xf32>
    %20 = arith.mulf %17, %19 : vector<16x128xf32>
    %c0_14 = arith.constant 0 : index
    %c0_15 = arith.constant 0 : index
    %21 = vector.load %arg8[%c0_14, %c0_15] : memref<1x128xf32, #tpu.memory_space<vmem>>, vector<1x128xf32>
    %22 = vector.broadcast %21 : vector<1x128xf32> to vector<16x128xf32>
    %23 = arith.addf %20, %22 : vector<16x128xf32>
    %24 = arith.negf %23 : vector<16x128xf32>
    %25 = math.exp %24 : vector<16x128xf32>
    %cst_16 = arith.constant 1.000000e+00 : f32
    %26 = vector.broadcast %cst_16 : f32 to vector<16x128xf32>
    %27 = arith.addf %26, %25 : vector<16x128xf32>
    %28 = arith.divf %26, %27 : vector<16x128xf32>
    %29 = arith.mulf %23, %28 : vector<16x128xf32>
    %c1 = arith.constant 1 : index
    %c0_17 = arith.constant 0 : index
    %c0_18 = arith.constant 0 : index
    %30 = vector.load %arg9[%c1, %c0_17, %c0_18] : memref<3x128x128xf32, #tpu.memory_space<vmem>>, vector<1x128x128xf32>
    %31 = vector.shape_cast %30 : vector<1x128x128xf32> to vector<128x128xf32>
    %cst_19 = arith.constant dense<0.000000e+00> : vector<16x128xf32>
    %32 = tpu.matmul %29, %31, %cst_19 {dimension_numbers = #tpu.dot_dimension_numbers<[1], [0], [0], [1], [0, 0, 1, 1], [], []>} : vector<16x128xf32>, vector<128x128xf32>, vector<16x128xf32> -> vector<16x128xf32>
    %c0_20 = arith.constant 0 : index
    %c0_21 = arith.constant 0 : index
    %c0_22 = arith.constant 0 : index
    %33 = vector.load %arg9[%c0_20, %c0_21, %c0_22] : memref<3x128x128xf32, #tpu.memory_space<vmem>>, vector<1x128x128xf32>
    %34 = vector.shape_cast %33 : vector<1x128x128xf32> to vector<128x128xf32>
    %cst_23 = arith.constant dense<0.000000e+00> : vector<16x128xf32>
    %35 = tpu.matmul %29, %34, %cst_23 {dimension_numbers = #tpu.dot_dimension_numbers<[1], [0], [0], [1], [0, 0, 1, 1], [], []>} : vector<16x128xf32>, vector<128x128xf32>, vector<16x128xf32> -> vector<16x128xf32>
    %c1_24 = arith.constant 1 : index
    %c0_25 = arith.constant 0 : index
    %c0_26 = arith.constant 0 : index
    %36 = vector.load %arg2[%c1_24, %c0_25, %c0_26] : memref<4x16x16xf32, #tpu.memory_space<vmem>>, vector<1x16x16xf32>
    %37 = vector.shape_cast %36 : vector<1x16x16xf32> to vector<16x16xf32>
    %cst_27 = arith.constant dense<0.000000e+00> : vector<16x128xf32>
    %38 = tpu.matmul %37, %35, %cst_27 {dimension_numbers = #tpu.dot_dimension_numbers<[1], [0], [0], [1], [0, 0, 1, 1], [], []>} : vector<16x16xf32>, vector<16x128xf32>, vector<16x128xf32> -> vector<16x128xf32>
    %39 = arith.addf %32, %38 : vector<16x128xf32>
    %c2 = arith.constant 2 : index
    %c0_28 = arith.constant 0 : index
    %c0_29 = arith.constant 0 : index
    %40 = vector.load %arg9[%c2, %c0_28, %c0_29] : memref<3x128x128xf32, #tpu.memory_space<vmem>>, vector<1x128x128xf32>
    %41 = vector.shape_cast %40 : vector<1x128x128xf32> to vector<128x128xf32>
    %cst_30 = arith.constant dense<0.000000e+00> : vector<16x128xf32>
    %42 = tpu.matmul %29, %41, %cst_30 {dimension_numbers = #tpu.dot_dimension_numbers<[1], [0], [0], [1], [0, 0, 1, 1], [], []>} : vector<16x128xf32>, vector<128x128xf32>, vector<16x128xf32> -> vector<16x128xf32>
    %c2_31 = arith.constant 2 : index
    %c0_32 = arith.constant 0 : index
    %c0_33 = arith.constant 0 : index
    %43 = vector.load %arg2[%c2_31, %c0_32, %c0_33] : memref<4x16x16xf32, #tpu.memory_space<vmem>>, vector<1x16x16xf32>
    %44 = vector.shape_cast %43 : vector<1x16x16xf32> to vector<16x16xf32>
    %cst_34 = arith.constant dense<0.000000e+00> : vector<16x128xf32>
    %45 = tpu.matmul %44, %42, %cst_34 {dimension_numbers = #tpu.dot_dimension_numbers<[1], [0], [0], [1], [0, 0, 1, 1], [], []>} : vector<16x16xf32>, vector<16x128xf32>, vector<16x128xf32> -> vector<16x128xf32>
    %46 = arith.addf %39, %45 : vector<16x128xf32>
    %c0_35 = arith.constant 0 : index
    %c0_36 = arith.constant 0 : index
    %47 = vector.load %arg10[%c0_35, %c0_36] : memref<1x128xf32, #tpu.memory_space<vmem>>, vector<1x128xf32>
    %48 = vector.broadcast %47 : vector<1x128xf32> to vector<16x128xf32>
    %49 = arith.mulf %46, %48 : vector<16x128xf32>
    %c0_37 = arith.constant 0 : index
    %c0_38 = arith.constant 0 : index
    %50 = vector.load %arg11[%c0_37, %c0_38] : memref<1x128xf32, #tpu.memory_space<vmem>>, vector<1x128xf32>
    %51 = vector.broadcast %50 : vector<1x128xf32> to vector<16x128xf32>
    %52 = arith.addf %49, %51 : vector<16x128xf32>
    %53 = arith.negf %52 : vector<16x128xf32>
    %54 = math.exp %53 : vector<16x128xf32>
    %cst_39 = arith.constant 1.000000e+00 : f32
    %55 = vector.broadcast %cst_39 : f32 to vector<16x128xf32>
    %56 = arith.addf %55, %54 : vector<16x128xf32>
    %57 = arith.divf %55, %56 : vector<16x128xf32>
    %58 = arith.mulf %52, %57 : vector<16x128xf32>
    %c1_40 = arith.constant 1 : index
    %c0_41 = arith.constant 0 : index
    %c0_42 = arith.constant 0 : index
    %59 = vector.load %arg12[%c1_40, %c0_41, %c0_42] : memref<3x128x128xf32, #tpu.memory_space<vmem>>, vector<1x128x128xf32>
    %60 = vector.shape_cast %59 : vector<1x128x128xf32> to vector<128x128xf32>
    %cst_43 = arith.constant dense<0.000000e+00> : vector<16x128xf32>
    %61 = tpu.matmul %58, %60, %cst_43 {dimension_numbers = #tpu.dot_dimension_numbers<[1], [0], [0], [1], [0, 0, 1, 1], [], []>} : vector<16x128xf32>, vector<128x128xf32>, vector<16x128xf32> -> vector<16x128xf32>
    %c0_44 = arith.constant 0 : index
    %c0_45 = arith.constant 0 : index
    %c0_46 = arith.constant 0 : index
    %62 = vector.load %arg12[%c0_44, %c0_45, %c0_46] : memref<3x128x128xf32, #tpu.memory_space<vmem>>, vector<1x128x128xf32>
    %63 = vector.shape_cast %62 : vector<1x128x128xf32> to vector<128x128xf32>
    %cst_47 = arith.constant dense<0.000000e+00> : vector<16x128xf32>
    %64 = tpu.matmul %58, %63, %cst_47 {dimension_numbers = #tpu.dot_dimension_numbers<[1], [0], [0], [1], [0, 0, 1, 1], [], []>} : vector<16x128xf32>, vector<128x128xf32>, vector<16x128xf32> -> vector<16x128xf32>
    %c1_48 = arith.constant 1 : index
    %c0_49 = arith.constant 0 : index
    %c0_50 = arith.constant 0 : index
    %65 = vector.load %arg2[%c1_48, %c0_49, %c0_50] : memref<4x16x16xf32, #tpu.memory_space<vmem>>, vector<1x16x16xf32>
    %66 = vector.shape_cast %65 : vector<1x16x16xf32> to vector<16x16xf32>
    %cst_51 = arith.constant dense<0.000000e+00> : vector<16x128xf32>
    %67 = tpu.matmul %66, %64, %cst_51 {dimension_numbers = #tpu.dot_dimension_numbers<[1], [0], [0], [1], [0, 0, 1, 1], [], []>} : vector<16x16xf32>, vector<16x128xf32>, vector<16x128xf32> -> vector<16x128xf32>
    %68 = arith.addf %61, %67 : vector<16x128xf32>
    %c2_52 = arith.constant 2 : index
    %c0_53 = arith.constant 0 : index
    %c0_54 = arith.constant 0 : index
    %69 = vector.load %arg12[%c2_52, %c0_53, %c0_54] : memref<3x128x128xf32, #tpu.memory_space<vmem>>, vector<1x128x128xf32>
    %70 = vector.shape_cast %69 : vector<1x128x128xf32> to vector<128x128xf32>
    %cst_55 = arith.constant dense<0.000000e+00> : vector<16x128xf32>
    %71 = tpu.matmul %58, %70, %cst_55 {dimension_numbers = #tpu.dot_dimension_numbers<[1], [0], [0], [1], [0, 0, 1, 1], [], []>} : vector<16x128xf32>, vector<128x128xf32>, vector<16x128xf32> -> vector<16x128xf32>
    %c2_56 = arith.constant 2 : index
    %c0_57 = arith.constant 0 : index
    %c0_58 = arith.constant 0 : index
    %72 = vector.load %arg2[%c2_56, %c0_57, %c0_58] : memref<4x16x16xf32, #tpu.memory_space<vmem>>, vector<1x16x16xf32>
    %73 = vector.shape_cast %72 : vector<1x16x16xf32> to vector<16x16xf32>
    %cst_59 = arith.constant dense<0.000000e+00> : vector<16x128xf32>
    %74 = tpu.matmul %73, %71, %cst_59 {dimension_numbers = #tpu.dot_dimension_numbers<[1], [0], [0], [1], [0, 0, 1, 1], [], []>} : vector<16x16xf32>, vector<16x128xf32>, vector<16x128xf32> -> vector<16x128xf32>
    %75 = arith.addf %68, %74 : vector<16x128xf32>
    %c0_60 = arith.constant 0 : index
    %c0_61 = arith.constant 0 : index
    %76 = vector.load %arg13[%c0_60, %c0_61] : memref<1x128xf32, #tpu.memory_space<vmem>>, vector<1x128xf32>
    %77 = vector.broadcast %76 : vector<1x128xf32> to vector<16x128xf32>
    %78 = arith.mulf %75, %77 : vector<16x128xf32>
    %c0_62 = arith.constant 0 : index
    %c0_63 = arith.constant 0 : index
    %79 = vector.load %arg14[%c0_62, %c0_63] : memref<1x128xf32, #tpu.memory_space<vmem>>, vector<1x128xf32>
    %80 = vector.broadcast %79 : vector<1x128xf32> to vector<16x128xf32>
    %81 = arith.addf %78, %80 : vector<16x128xf32>
    %82 = arith.negf %81 : vector<16x128xf32>
    %83 = math.exp %82 : vector<16x128xf32>
    %cst_64 = arith.constant 1.000000e+00 : f32
    %84 = vector.broadcast %cst_64 : f32 to vector<16x128xf32>
    %85 = arith.addf %84, %83 : vector<16x128xf32>
    %86 = arith.divf %84, %85 : vector<16x128xf32>
    %87 = arith.mulf %81, %86 : vector<16x128xf32>
    %c0_65 = arith.constant 0 : index
    %c0_66 = arith.constant 0 : index
    %88 = vector.load %arg15[%c0_65, %c0_66] : memref<128x128xf32, #tpu.memory_space<vmem>>, vector<128x128xf32>
    %cst_67 = arith.constant dense<0.000000e+00> : vector<16x128xf32>
    %89 = tpu.matmul %87, %88, %cst_67 {dimension_numbers = #tpu.dot_dimension_numbers<[1], [0], [0], [1], [0, 0, 1, 1], [], []>} : vector<16x128xf32>, vector<128x128xf32>, vector<16x128xf32> -> vector<16x128xf32>
    %c0_68 = arith.constant 0 : index
    %c0_69 = arith.constant 0 : index
    %90 = vector.load %arg16[%c0_68, %c0_69] : memref<1x128xf32, #tpu.memory_space<vmem>>, vector<1x128xf32>
    %91 = vector.broadcast %90 : vector<1x128xf32> to vector<16x128xf32>
    %92 = arith.addf %89, %91 : vector<16x128xf32>
    %c1_70 = arith.constant 1 : index
    %c0_71 = arith.constant 0 : index
    %c0_72 = arith.constant 0 : index
    %93 = vector.load %arg17[%c1_70, %c0_71, %c0_72] : memref<3x1x128xf32, #tpu.memory_space<vmem>>, vector<1x1x128xf32>
    %94 = vector.shape_cast %93 : vector<1x1x128xf32> to vector<1x128xf32>
    %95 = vector.broadcast %94 : vector<1x128xf32> to vector<16x128xf32>
    %96 = arith.mulf %92, %95 : vector<16x128xf32>
    %c0_73 = arith.constant 0 : index
    %c0_74 = arith.constant 0 : index
    %c0_75 = arith.constant 0 : index
    %97 = vector.load %arg17[%c0_73, %c0_74, %c0_75] : memref<3x1x128xf32, #tpu.memory_space<vmem>>, vector<1x1x128xf32>
    %98 = vector.shape_cast %97 : vector<1x1x128xf32> to vector<1x128xf32>
    %99 = vector.broadcast %98 : vector<1x128xf32> to vector<16x128xf32>
    %100 = arith.mulf %92, %99 : vector<16x128xf32>
    %c1_76 = arith.constant 1 : index
    %c0_77 = arith.constant 0 : index
    %c0_78 = arith.constant 0 : index
    %101 = vector.load %arg2[%c1_76, %c0_77, %c0_78] : memref<4x16x16xf32, #tpu.memory_space<vmem>>, vector<1x16x16xf32>
    %102 = vector.shape_cast %101 : vector<1x16x16xf32> to vector<16x16xf32>
    %cst_79 = arith.constant dense<0.000000e+00> : vector<16x128xf32>
    %103 = tpu.matmul %102, %100, %cst_79 {dimension_numbers = #tpu.dot_dimension_numbers<[1], [0], [0], [1], [0, 0, 1, 1], [], []>} : vector<16x16xf32>, vector<16x128xf32>, vector<16x128xf32> -> vector<16x128xf32>
    %104 = arith.addf %96, %103 : vector<16x128xf32>
    %c2_80 = arith.constant 2 : index
    %c0_81 = arith.constant 0 : index
    %c0_82 = arith.constant 0 : index
    %105 = vector.load %arg17[%c2_80, %c0_81, %c0_82] : memref<3x1x128xf32, #tpu.memory_space<vmem>>, vector<1x1x128xf32>
    %106 = vector.shape_cast %105 : vector<1x1x128xf32> to vector<1x128xf32>
    %107 = vector.broadcast %106 : vector<1x128xf32> to vector<16x128xf32>
    %108 = arith.mulf %92, %107 : vector<16x128xf32>
    %c2_83 = arith.constant 2 : index
    %c0_84 = arith.constant 0 : index
    %c0_85 = arith.constant 0 : index
    %109 = vector.load %arg2[%c2_83, %c0_84, %c0_85] : memref<4x16x16xf32, #tpu.memory_space<vmem>>, vector<1x16x16xf32>
    %110 = vector.shape_cast %109 : vector<1x16x16xf32> to vector<16x16xf32>
    %cst_86 = arith.constant dense<0.000000e+00> : vector<16x128xf32>
    %111 = tpu.matmul %110, %108, %cst_86 {dimension_numbers = #tpu.dot_dimension_numbers<[1], [0], [0], [1], [0, 0, 1, 1], [], []>} : vector<16x16xf32>, vector<16x128xf32>, vector<16x128xf32> -> vector<16x128xf32>
    %112 = arith.addf %104, %111 : vector<16x128xf32>
    %c0_87 = arith.constant 0 : index
    %c0_88 = arith.constant 0 : index
    %113 = vector.load %arg18[%c0_87, %c0_88] : memref<1x128xf32, #tpu.memory_space<vmem>>, vector<1x128xf32>
    %114 = vector.broadcast %113 : vector<1x128xf32> to vector<16x128xf32>
    %115 = arith.addf %112, %114 : vector<16x128xf32>
    %c0_89 = arith.constant 0 : index
    %c0_90 = arith.constant 0 : index
    %116 = vector.load %arg19[%c0_89, %c0_90] : memref<128x128xf32, #tpu.memory_space<vmem>>, vector<128x128xf32>
    %cst_91 = arith.constant dense<0.000000e+00> : vector<16x128xf32>
    %117 = tpu.matmul %115, %116, %cst_91 {dimension_numbers = #tpu.dot_dimension_numbers<[1], [0], [0], [1], [0, 0, 1, 1], [], []>} : vector<16x128xf32>, vector<128x128xf32>, vector<16x128xf32> -> vector<16x128xf32>
    %c0_92 = arith.constant 0 : index
    %c0_93 = arith.constant 0 : index
    %118 = vector.load %arg20[%c0_92, %c0_93] : memref<1x128xf32, #tpu.memory_space<vmem>>, vector<1x128xf32>
    %119 = vector.broadcast %118 : vector<1x128xf32> to vector<16x128xf32>
    %120 = arith.addf %117, %119 : vector<16x128xf32>
    %c1_94 = arith.constant 1 : index
    %c0_95 = arith.constant 0 : index
    %c0_96 = arith.constant 0 : index
    %121 = vector.load %arg21[%c1_94, %c0_95, %c0_96] : memref<3x1x128xf32, #tpu.memory_space<vmem>>, vector<1x1x128xf32>
    %122 = vector.shape_cast %121 : vector<1x1x128xf32> to vector<1x128xf32>
    %123 = vector.broadcast %122 : vector<1x128xf32> to vector<16x128xf32>
    %124 = arith.mulf %120, %123 : vector<16x128xf32>
    %c0_97 = arith.constant 0 : index
    %c0_98 = arith.constant 0 : index
    %c0_99 = arith.constant 0 : index
    %125 = vector.load %arg21[%c0_97, %c0_98, %c0_99] : memref<3x1x128xf32, #tpu.memory_space<vmem>>, vector<1x1x128xf32>
    %126 = vector.shape_cast %125 : vector<1x1x128xf32> to vector<1x128xf32>
    %127 = vector.broadcast %126 : vector<1x128xf32> to vector<16x128xf32>
    %128 = arith.mulf %120, %127 : vector<16x128xf32>
    %c0_100 = arith.constant 0 : index
    %c0_101 = arith.constant 0 : index
    %c0_102 = arith.constant 0 : index
    %129 = vector.load %arg2[%c0_100, %c0_101, %c0_102] : memref<4x16x16xf32, #tpu.memory_space<vmem>>, vector<1x16x16xf32>
    %130 = vector.shape_cast %129 : vector<1x16x16xf32> to vector<16x16xf32>
    %cst_103 = arith.constant dense<0.000000e+00> : vector<16x128xf32>
    %131 = tpu.matmul %130, %128, %cst_103 {dimension_numbers = #tpu.dot_dimension_numbers<[1], [0], [0], [1], [0, 0, 1, 1], [], []>} : vector<16x16xf32>, vector<16x128xf32>, vector<16x128xf32> -> vector<16x128xf32>
    %132 = arith.addf %124, %131 : vector<16x128xf32>
    %c2_104 = arith.constant 2 : index
    %c0_105 = arith.constant 0 : index
    %c0_106 = arith.constant 0 : index
    %133 = vector.load %arg21[%c2_104, %c0_105, %c0_106] : memref<3x1x128xf32, #tpu.memory_space<vmem>>, vector<1x1x128xf32>
    %134 = vector.shape_cast %133 : vector<1x1x128xf32> to vector<1x128xf32>
    %135 = vector.broadcast %134 : vector<1x128xf32> to vector<16x128xf32>
    %136 = arith.mulf %120, %135 : vector<16x128xf32>
    %c3 = arith.constant 3 : index
    %c0_107 = arith.constant 0 : index
    %c0_108 = arith.constant 0 : index
    %137 = vector.load %arg2[%c3, %c0_107, %c0_108] : memref<4x16x16xf32, #tpu.memory_space<vmem>>, vector<1x16x16xf32>
    %138 = vector.shape_cast %137 : vector<1x16x16xf32> to vector<16x16xf32>
    %cst_109 = arith.constant dense<0.000000e+00> : vector<16x128xf32>
    %139 = tpu.matmul %138, %136, %cst_109 {dimension_numbers = #tpu.dot_dimension_numbers<[1], [0], [0], [1], [0, 0, 1, 1], [], []>} : vector<16x16xf32>, vector<16x128xf32>, vector<16x128xf32> -> vector<16x128xf32>
    %140 = arith.addf %132, %139 : vector<16x128xf32>
    %c0_110 = arith.constant 0 : index
    %c0_111 = arith.constant 0 : index
    %141 = vector.load %arg22[%c0_110, %c0_111] : memref<1x128xf32, #tpu.memory_space<vmem>>, vector<1x128xf32>
    %142 = vector.broadcast %141 : vector<1x128xf32> to vector<16x128xf32>
    %143 = arith.addf %140, %142 : vector<16x128xf32>
    %c0_112 = arith.constant 0 : index
    %c0_113 = arith.constant 0 : index
    %144 = vector.load %arg23[%c0_112, %c0_113] : memref<128x128xf32, #tpu.memory_space<vmem>>, vector<128x128xf32>
    %cst_114 = arith.constant dense<0.000000e+00> : vector<16x128xf32>
    %145 = tpu.matmul %143, %144, %cst_114 {dimension_numbers = #tpu.dot_dimension_numbers<[1], [0], [0], [1], [0, 0, 1, 1], [], []>} : vector<16x128xf32>, vector<128x128xf32>, vector<16x128xf32> -> vector<16x128xf32>
    %c0_115 = arith.constant 0 : index
    %c0_116 = arith.constant 0 : index
    %146 = vector.load %arg24[%c0_115, %c0_116] : memref<1x128xf32, #tpu.memory_space<vmem>>, vector<1x128xf32>
    %147 = vector.broadcast %146 : vector<1x128xf32> to vector<16x128xf32>
    %148 = arith.addf %145, %147 : vector<16x128xf32>
    %149 = arith.mulf %87, %148 : vector<16x128xf32>
    %c0_117 = arith.constant 0 : index
    %c0_118 = arith.constant 0 : index
    %150 = vector.load %arg25[%c0_117, %c0_118] : memref<128x256xf32, #tpu.memory_space<vmem>>, vector<128x256xf32>
    %cst_119 = arith.constant dense<0.000000e+00> : vector<16x256xf32>
    %151 = tpu.matmul %15, %150, %cst_119 {dimension_numbers = #tpu.dot_dimension_numbers<[1], [0], [0], [1], [0, 0, 1, 1], [], []>} : vector<16x128xf32>, vector<128x256xf32>, vector<16x256xf32> -> vector<16x256xf32>
    %c0_120 = arith.constant 0 : index
    %c0_121 = arith.constant 0 : index
    %152 = vector.load %arg26[%c0_120, %c0_121] : memref<128x256xf32, #tpu.memory_space<vmem>>, vector<128x256xf32>
    %cst_122 = arith.constant dense<0.000000e+00> : vector<16x256xf32>
    %153 = tpu.matmul %29, %152, %cst_122 {dimension_numbers = #tpu.dot_dimension_numbers<[1], [0], [0], [1], [0, 0, 1, 1], [], []>} : vector<16x128xf32>, vector<128x256xf32>, vector<16x256xf32> -> vector<16x256xf32>
    %154 = arith.addf %151, %153 : vector<16x256xf32>
    %c0_123 = arith.constant 0 : index
    %c0_124 = arith.constant 0 : index
    %155 = vector.load %arg27[%c0_123, %c0_124] : memref<128x256xf32, #tpu.memory_space<vmem>>, vector<128x256xf32>
    %cst_125 = arith.constant dense<0.000000e+00> : vector<16x256xf32>
    %156 = tpu.matmul %149, %155, %cst_125 {dimension_numbers = #tpu.dot_dimension_numbers<[1], [0], [0], [1], [0, 0, 1, 1], [], []>} : vector<16x128xf32>, vector<128x256xf32>, vector<16x256xf32> -> vector<16x256xf32>
    %157 = arith.addf %154, %156 : vector<16x256xf32>
    %c0_126 = arith.constant 0 : index
    %c0_127 = arith.constant 0 : index
    %158 = vector.load %arg28[%c0_126, %c0_127] : memref<1x256xf32, #tpu.memory_space<vmem>>, vector<1x256xf32>
    %159 = vector.broadcast %158 : vector<1x256xf32> to vector<16x256xf32>
    %160 = arith.mulf %157, %159 : vector<16x256xf32>
    %c0_128 = arith.constant 0 : index
    %c0_129 = arith.constant 0 : index
    %161 = vector.load %arg29[%c0_128, %c0_129] : memref<1x256xf32, #tpu.memory_space<vmem>>, vector<1x256xf32>
    %162 = vector.broadcast %161 : vector<1x256xf32> to vector<16x256xf32>
    %163 = arith.addf %160, %162 : vector<16x256xf32>
    %164 = arith.negf %163 : vector<16x256xf32>
    %165 = math.exp %164 : vector<16x256xf32>
    %cst_130 = arith.constant 1.000000e+00 : f32
    %166 = vector.broadcast %cst_130 : f32 to vector<16x256xf32>
    %167 = arith.addf %166, %165 : vector<16x256xf32>
    %168 = arith.divf %166, %167 : vector<16x256xf32>
    %169 = arith.mulf %163, %168 : vector<16x256xf32>
    %c0_131 = arith.constant 0 : index
    %c0_132 = arith.constant 0 : index
    %c0_133 = arith.constant 0 : index
    %170 = vector.load %arg30[%c0_131, %c0_132, %c0_133] : memref<1x16x256xf32, #tpu.memory_space<vmem>>, vector<1x16x256xf32>
    %171 = vector.shape_cast %170 : vector<1x16x256xf32> to vector<16x256xf32>
    %172 = vector.shape_cast %169 : vector<16x256xf32> to vector<1x16x256xf32>
    tpu.vector_store %arg30[%c0_131, %c0_132, %c0_133], %172 {strides = array<i32>} : memref<1x16x256xf32, #tpu.memory_space<vmem>>, vector<1x16x256xf32>,
    return
  }
  func.func @transform_0(%arg0: i32) -> (i32, i32, i32) {
    %c0_i32 = arith.constant 0 : i32
    %c0_i32_0 = arith.constant 0 : i32
    %c0_i32_1 = arith.constant 0 : i32
    return %arg0, %c0_i32, %c0_i32_0 : i32, i32, i32
  }
  func.func @transform_1(%arg0: i32) -> (i32, i32, i32) {
    %c0_i32 = arith.constant 0 : i32
    %c0_i32_0 = arith.constant 0 : i32
    %c0_i32_1 = arith.constant 0 : i32
    %c0_i32_2 = arith.constant 0 : i32
    return %c0_i32, %c0_i32_0, %c0_i32_1 : i32, i32, i32
  }
  func.func @transform_2(%arg0: i32) -> (i32, i32) {
    %c0_i32 = arith.constant 0 : i32
    %c0_i32_0 = arith.constant 0 : i32
    %c0_i32_1 = arith.constant 0 : i32
    return %c0_i32, %c0_i32_0 : i32, i32
  }
  func.func @transform_3(%arg0: i32) -> (i32, i32) {
    %c0_i32 = arith.constant 0 : i32
    %c0_i32_0 = arith.constant 0 : i32
    %c0_i32_1 = arith.constant 0 : i32
    return %c0_i32, %c0_i32_0 : i32, i32
  }
  func.func @transform_4(%arg0: i32) -> (i32, i32) {
    %c0_i32 = arith.constant 0 : i32
    %c0_i32_0 = arith.constant 0 : i32
    %c0_i32_1 = arith.constant 0 : i32
    return %c0_i32, %c0_i32_0 : i32, i32
  }
  func.func @transform_5(%arg0: i32) -> (i32, i32) {
    %c0_i32 = arith.constant 0 : i32
    %c0_i32_0 = arith.constant 0 : i32
    %c0_i32_1 = arith.constant 0 : i32
    return %c0_i32, %c0_i32_0 : i32, i32
  }
  func.func @transform_6(%arg0: i32) -> (i32, i32) {
    %c0_i32 = arith.constant 0 : i32
    %c0_i32_0 = arith.constant 0 : i32
    %c0_i32_1 = arith.constant 0 : i32
    return %c0_i32, %c0_i32_0 : i32, i32
  }
  func.func @transform_7(%arg0: i32) -> (i32, i32) {
    %c0_i32 = arith.constant 0 : i32
    %c0_i32_0 = arith.constant 0 : i32
    %c0_i32_1 = arith.constant 0 : i32
    return %c0_i32, %c0_i32_0 : i32, i32
  }
  func.func @transform_8(%arg0: i32) -> (i32, i32, i32) {
    %c0_i32 = arith.constant 0 : i32
    %c0_i32_0 = arith.constant 0 : i32
    %c0_i32_1 = arith.constant 0 : i32
    %c0_i32_2 = arith.constant 0 : i32
    return %c0_i32, %c0_i32_0, %c0_i32_1 : i32, i32, i32
  }
  func.func @transform_9(%arg0: i32) -> (i32, i32) {
    %c0_i32 = arith.constant 0 : i32
    %c0_i32_0 = arith.constant 0 : i32
    %c0_i32_1 = arith.constant 0 : i32
    return %c0_i32, %c0_i32_0 : i32, i32
  }
  func.func @transform_10(%arg0: i32) -> (i32, i32) {
    %c0_i32 = arith.constant 0 : i32
    %c0_i32_0 = arith.constant 0 : i32
    %c0_i32_1 = arith.constant 0 : i32
    return %c0_i32, %c0_i32_0 : i32, i32
  }
  func.func @transform_11(%arg0: i32) -> (i32, i32, i32) {
    %c0_i32 = arith.constant 0 : i32
    %c0_i32_0 = arith.constant 0 : i32
    %c0_i32_1 = arith.constant 0 : i32
    %c0_i32_2 = arith.constant 0 : i32
    return %c0_i32, %c0_i32_0, %c0_i32_1 : i32, i32, i32
  }
  func.func @transform_12(%arg0: i32) -> (i32, i32) {
    %c0_i32 = arith.constant 0 : i32
    %c0_i32_0 = arith.constant 0 : i32
    %c0_i32_1 = arith.constant 0 : i32
    return %c0_i32, %c0_i32_0 : i32, i32
  }
  func.func @transform_13(%arg0: i32) -> (i32, i32) {
    %c0_i32 = arith.constant 0 : i32
    %c0_i32_0 = arith.constant 0 : i32
    %c0_i32_1 = arith.constant 0 : i32
    return %c0_i32, %c0_i32_0 : i32, i32
  }
  func.func @transform_14(%arg0: i32) -> (i32, i32) {
    %c0_i32 = arith.constant 0 : i32
    %c0_i32_0 = arith.constant 0 : i32
    %c0_i32_1 = arith.constant 0 : i32
    return %c0_i32, %c0_i32_0 : i32, i32
  }
  func.func @transform_15(%arg0: i32) -> (i32, i32) {
    %c0_i32 = arith.constant 0 : i32
    %c0_i32_0 = arith.constant 0 : i32
    %c0_i32_1 = arith.constant 0 : i32
    return %c0_i32, %c0_i32_0 : i32, i32
  }
  func.func @transform_16(%arg0: i32) -> (i32, i32, i32) {
    %c0_i32 = arith.constant 0 : i32
    %c0_i32_0 = arith.constant 0 : i32
    %c0_i32_1 = arith.constant 0 : i32
    %c0_i32_2 = arith.constant 0 : i32
    return %c0_i32, %c0_i32_0, %c0_i32_1 : i32, i32, i32
  }
  func.func @transform_17(%arg0: i32) -> (i32, i32) {
    %c0_i32 = arith.constant 0 : i32
    %c0_i32_0 = arith.constant 0 : i32
    %c0_i32_1 = arith.constant 0 : i32
    return %c0_i32, %c0_i32_0 : i32, i32
  }
  func.func @transform_18(%arg0: i32) -> (i32, i32) {
    %c0_i32 = arith.constant 0 : i32
    %c0_i32_0 = arith.constant 0 : i32
    %c0_i32_1 = arith.constant 0 : i32
    return %c0_i32, %c0_i32_0 : i32, i32
  }
  func.func @transform_19(%arg0: i32) -> (i32, i32) {
    %c0_i32 = arith.constant 0 : i32
    %c0_i32_0 = arith.constant 0 : i32
    %c0_i32_1 = arith.constant 0 : i32
    return %c0_i32, %c0_i32_0 : i32, i32
  }
  func.func @transform_20(%arg0: i32) -> (i32, i32, i32) {
    %c0_i32 = arith.constant 0 : i32
    %c0_i32_0 = arith.constant 0 : i32
    %c0_i32_1 = arith.constant 0 : i32
    %c0_i32_2 = arith.constant 0 : i32
    return %c0_i32, %c0_i32_0, %c0_i32_1 : i32, i32, i32
  }
  func.func @transform_21(%arg0: i32) -> (i32, i32) {
    %c0_i32 = arith.constant 0 : i32
    %c0_i32_0 = arith.constant 0 : i32
    %c0_i32_1 = arith.constant 0 : i32
    return %c0_i32, %c0_i32_0 : i32, i32
  }
  func.func @transform_22(%arg0: i32) -> (i32, i32) {
    %c0_i32 = arith.constant 0 : i32
    %c0_i32_0 = arith.constant 0 : i32
    %c0_i32_1 = arith.constant 0 : i32
    return %c0_i32, %c0_i32_0 : i32, i32
  }
  func.func @transform_23(%arg0: i32) -> (i32, i32) {
    %c0_i32 = arith.constant 0 : i32
    %c0_i32_0 = arith.constant 0 : i32
    %c0_i32_1 = arith.constant 0 : i32
    return %c0_i32, %c0_i32_0 : i32, i32
  }
  func.func @transform_24(%arg0: i32) -> (i32, i32) {
    %c0_i32 = arith.constant 0 : i32
    %c0_i32_0 = arith.constant 0 : i32
    %c0_i32_1 = arith.constant 0 : i32
    return %c0_i32, %c0_i32_0 : i32, i32
  }
  func.func @transform_25(%arg0: i32) -> (i32, i32) {
    %c0_i32 = arith.constant 0 : i32
    %c0_i32_0 = arith.constant 0 : i32
    %c0_i32_1 = arith.constant 0 : i32
    return %c0_i32, %c0_i32_0 : i32, i32
  }
  func.func @transform_26(%arg0: i32) -> (i32, i32) {
    %c0_i32 = arith.constant 0 : i32
    %c0_i32_0 = arith.constant 0 : i32
    %c0_i32_1 = arith.constant 0 : i32
    return %c0_i32, %c0_i32_0 : i32, i32
  }
  func.func @transform_27(%arg0: i32) -> (i32, i32) {
    %c0_i32 = arith.constant 0 : i32
    %c0_i32_0 = arith.constant 0 : i32
    %c0_i32_1 = arith.constant 0 : i32
    return %c0_i32, %c0_i32_0 : i32, i32
  }
  func.func @transform_28(%arg0: i32) -> (i32, i32) {
    %c0_i32 = arith.constant 0 : i32
    %c0_i32_0 = arith.constant 0 : i32
    %c0_i32_1 = arith.constant 0 : i32
    return %c0_i32, %c0_i32_0 : i32, i32
  }
  func.func @transform_29(%arg0: i32) -> (i32, i32, i32) {
    %c0_i32 = arith.constant 0 : i32
    %c0_i32_0 = arith.constant 0 : i32
    %c0_i32_1 = arith.constant 0 : i32
    return %arg0, %c0_i32, %c0_i32_0 : i32, i32, i32
  }
}

</mosaic_0001>

<llo_original>
// kernel: tpu_custom_call.1
$region0: #{tpu_custom_call.1}
  #allocation0 [shape = 'u32[]', space=smem, size = 0x4, offset = 0x4, fixed_abs, tag = 'smem constant byte address 0x4 - core index']
  #allocation1 [shape = 'u32[144,128]{1,0:T(1,128)}', space=vmem, size = 0x12000, scoped, tag = 'internal scratch']
  %s0 = inlined_call_operand.smem [shape: u32[30], index: -1, kind: input, shape index: {}]
  %s1 = sld [smem:[%s0]]
  %s2 = scalar_lea.smem %s0, 1
  %s3 = sld [smem:[%s2]]
  %s4 = scalar_lea.smem %s0, 2
  %s5 = sld [smem:[%s4]]
  %s6 = scalar_lea.smem %s0, 3
  %s7 = sld [smem:[%s6]]
  %s8 = scalar_lea.smem %s0, 4
  %s9 = sld [smem:[%s8]]
  %s10 = scalar_lea.smem %s0, 5
  %s11 = sld [smem:[%s10]]
  %s12 = scalar_lea.smem %s0, 6
  %s13 = sld [smem:[%s12]]
  %s14 = scalar_lea.smem %s0, 7
  %s15 = sld [smem:[%s14]]
  %s16 = scalar_lea.smem %s0, 8
  %s17 = sld [smem:[%s16]]
  %s18 = scalar_lea.smem %s0, 9
  %s19 = sld [smem:[%s18]]
  %s20 = scalar_lea.smem %s0, 10
  %s21 = sld [smem:[%s20]]
  %s22 = scalar_lea.smem %s0, 11
  %s23 = sld [smem:[%s22]]
  %s24 = scalar_lea.smem %s0, 12
  %s25 = sld [smem:[%s24]]
  %s26 = scalar_lea.smem %s0, 13
  %s27 = sld [smem:[%s26]]
  %s28 = scalar_lea.smem %s0, 14
  %s29 = sld [smem:[%s28]]
  %s30 = scalar_lea.smem %s0, 15
  %s31 = sld [smem:[%s30]]
  %s32 = scalar_lea.smem %s0, 16
  %s33 = sld [smem:[%s32]]
  %s34 = scalar_lea.smem %s0, 17
  %s35 = sld [smem:[%s34]]
  %s36 = scalar_lea.smem %s0, 18
  %s37 = sld [smem:[%s36]]
  %s38 = scalar_lea.smem %s0, 19
  %s39 = sld [smem:[%s38]]
  %s40 = scalar_lea.smem %s0, 20
  %s41 = sld [smem:[%s40]]
  %s42 = scalar_lea.smem %s0, 21
  %s43 = sld [smem:[%s42]]
  %s44 = scalar_lea.smem %s0, 22
  %s45 = sld [smem:[%s44]]
  %s46 = scalar_lea.smem %s0, 23
  %s47 = sld [smem:[%s46]]
  %s48 = scalar_lea.smem %s0, 24
  %s49 = sld [smem:[%s48]]
  %s50 = scalar_lea.smem %s0, 25
  %s51 = sld [smem:[%s50]]
  %s52 = scalar_lea.smem %s0, 26
  %s53 = sld [smem:[%s52]]
  %s54 = scalar_lea.smem %s0, 27
  %s55 = sld [smem:[%s54]]
  %s56 = scalar_lea.smem %s0, 28
  %s57 = sld [smem:[%s56]]
  %s58 = scalar_lea.smem %s0, 29
  %s59 = sld [smem:[%s58]]
  %s60 = sld [smem:[#allocation0]]
  $region209: #{tpu_custom_call.1} parent=0
    _
  %s62 = ssub.s32 1, %s60
  %s63 = scalar_select 0, %s62, %s60
  $region1: #{tpu_custom_call.1} parent=0
    #allocation2 [shape = 'u8[32768]{0}', space=vmem, size = 0x8000, scoped, tag = 'input window, operand 0']
    #allocation3 [shape = 's32[2]{0}', space=sflag, size = 0x8, scoped, tag = 'scoped memory for tpu_custom_call.1']
    #allocation4 [shape = 's32[2]{0}', space=sflag, size = 0x8, scoped, tag = 'scoped memory for tpu_custom_call.1']
    #allocation5 [shape = 'u8[32768]{0}', space=vmem, size = 0x8000, scoped, tag = 'input window, operand 1, single buffered']
    #allocation6 [shape = 's32[1]{0}', space=sflag, size = 0x4, scoped, tag = 'scoped memory for tpu_custom_call.1']
    #allocation7 [shape = 'u8[131072]{0}', space=vmem, size = 0x20000, scoped, tag = 'input window, operand 2, single buffered']
    #allocation8 [shape = 'u8[131072]{0}', space=vmem, size = 0x20000, scoped, tag = 'input window, operand 3, single buffered']
    #allocation9 [shape = 's32[1]{0}', space=sflag, size = 0x4, scoped, tag = 'scoped memory for tpu_custom_call.1']
    #allocation10 [shape = 'u8[512]{0}', space=vmem, size = 0x400, scoped, tag = 'input window, operand 4, single buffered']
    #allocation11 [shape = 'u8[512]{0}', space=vmem, size = 0x400, scoped, tag = 'input window, operand 5, single buffered']
    #allocation12 [shape = 's32[1]{0}', space=sflag, size = 0x4, scoped, tag = 'scoped memory for tpu_custom_call.1']
    #allocation13 [shape = 'u8[512]{0}', space=vmem, size = 0x400, scoped, tag = 'input window, operand 6, single buffered']
    #allocation14 [shape = 'u8[196608]{0}', space=vmem, size = 0x30000, scoped, tag = 'input window, operand 8, single buffered']
    #allocation15 [shape = 's32[1]{0}', space=sflag, size = 0x4, scoped, tag = 'scoped memory for tpu_custom_call.1']
    #allocation16 [shape = 'u8[196608]{0}', space=vmem, size = 0x30000, scoped, tag = 'input window, operand 11, single buffered']
    #allocation17 [shape = 'u8[65536]{0}', space=vmem, size = 0x10000, scoped, tag = 'input window, operand 14, single buffered']
    #allocation18 [shape = 's32[1]{0}', space=sflag, size = 0x4, scoped, tag = 'scoped memory for tpu_custom_call.1']
    #allocation19 [shape = 'u8[65536]{0}', space=vmem, size = 0x10000, scoped, tag = 'input window, operand 18, single buffered']
    #allocation20 [shape = 'u8[65536]{0}', space=vmem, size = 0x10000, scoped, tag = 'input window, operand 22, single buffered']
    #allocation21 [shape = 's32[1]{0}', space=sflag, size = 0x4, scoped, tag = 'scoped memory for tpu_custom_call.1']
    #allocation22 [shape = 'u8[131072]{0}', space=vmem, size = 0x20000, scoped, tag = 'input window, operand 24, single buffered']
    #allocation23 [shape = 'u8[131072]{0}', space=vmem, size = 0x20000, scoped, tag = 'input window, operand 25, single buffered']
    #allocation24 [shape = 's32[1]{0}', space=sflag, size = 0x4, scoped, tag = 'scoped memory for tpu_custom_call.1']
    #allocation25 [shape = 'u8[131072]{0}', space=vmem, size = 0x20000, scoped, tag = 'input window, operand 26, single buffered']
    #allocation26 [shape = 'u8[32768]{0}', space=vmem, size = 0x8000, scoped, tag = 'output window, operand 0']
    %64 = vsyncpa [#allocation3], 0
    %s65 = scalar_lea.sflag [#allocation3], 1
    %66 = vsyncpa %s65, 0
    %67 = vsyncpa [#allocation6], 0
    %68 = vsyncpa [#allocation9], 0
    %69 = vsyncpa [#allocation12], 0
    %70 = vsyncpa [#allocation15], 0
    %71 = vsyncpa [#allocation18], 0
    %72 = vsyncpa [#allocation21], 0
    %73 = vsyncpa [#allocation24], 0
    %74 = vsyncpa [#allocation4], 0
    %s75 = scalar_lea.sflag [#allocation4], 1
    %76 = vsyncpa %s75, 0
    loop: start=0, step=1, limit=4
    $region2: #{tpu_custom_call.1} parent=1 // loop_pre_header
      _
    $region3: #{tpu_custom_call.1} parent=1 // loop_header
      %s78 = sphi 0, %s82
      %p79 = scmp.ge.s32.totalorder %s78, 4
      %s88 = sphi 0, %s90
      %s91 = sphi 0, %s88
      %s92 = sphi 0, %s91
      %s108 = sphi 0, %s92
      %s112 = sphi 0, %s112
      %s114 = sphi 0, %s112
      %s115 = sphi 0, %s114
      %s129 = sphi 0, %s115
      %s133 = sphi 0, %s133
      %s135 = sphi 0, %s133
      %s136 = sphi 0, %s135
      %s150 = sphi 0, %s136
      %s154 = sphi 0, %s154
      %s156 = sphi 0, %s154
      %s157 = sphi 0, %s156
      %s171 = sphi 0, %s157
      %s175 = sphi 0, %s175
      %s177 = sphi 0, %s175
      %s178 = sphi 0, %s177
      %s192 = sphi 0, %s178
      %s196 = sphi 0, %s196
      %s198 = sphi 0, %s196
      %s199 = sphi 0, %s198
      %s213 = sphi 0, %s199
      %s217 = sphi 0, %s217
      %s219 = sphi 0, %s217
      %s220 = sphi 0, %s219
      %s234 = sphi 0, %s220
      %s238 = sphi 0, %s238
      %s240 = sphi 0, %s238
      %s241 = sphi 0, %s240
      %s255 = sphi 0, %s241
      %s259 = sphi 0, %s259
      %s261 = sphi 0, %s259
      %s262 = sphi 0, %s261
      %s276 = sphi 0, %s262
      %s280 = sphi 0, %s280
      %s282 = sphi 0, %s280
      %s283 = sphi 0, %s282
      %s297 = sphi 0, %s283
      %s301 = sphi 0, %s301
      %s303 = sphi 0, %s301
      %s304 = sphi 0, %s303
      %s318 = sphi 0, %s304
      %s322 = sphi 0, %s322
      %s324 = sphi 0, %s322
      %s325 = sphi 0, %s324
      %s339 = sphi 0, %s325
      %s343 = sphi 0, %s343
      %s345 = sphi 0, %s343
      %s346 = sphi 0, %s345
      %s360 = sphi 0, %s346
      %s364 = sphi 0, %s364
      %s366 = sphi 0, %s364
      %s367 = sphi 0, %s366
      %s381 = sphi 0, %s367
      %s385 = sphi 0, %s385
      %s387 = sphi 0, %s385
      %s388 = sphi 0, %s387
      %s402 = sphi 0, %s388
      %s406 = sphi 0, %s406
      %s408 = sphi 0, %s406
      %s409 = sphi 0, %s408
      %s423 = sphi 0, %s409
      %s427 = sphi 0, %s427
      %s429 = sphi 0, %s427
      %s430 = sphi 0, %s429
      %s444 = sphi 0, %s430
      %s448 = sphi 0, %s448
      %s450 = sphi 0, %s448
      %s451 = sphi 0, %s450
      %s465 = sphi 0, %s451
      %s469 = sphi 0, %s469
      %s471 = sphi 0, %s469
      %s472 = sphi 0, %s471
      %s486 = sphi 0, %s472
      %s490 = sphi 0, %s490
      %s492 = sphi 0, %s490
      %s493 = sphi 0, %s492
      %s507 = sphi 0, %s493
      %s511 = sphi 0, %s511
      %s513 = sphi 0, %s511
      %s514 = sphi 0, %s513
      %s528 = sphi 0, %s514
      %s532 = sphi 0, %s532
      %s534 = sphi 0, %s532
      %s535 = sphi 0, %s534
      %s549 = sphi 0, %s535
      %s553 = sphi 0, %s553
      %s555 = sphi 0, %s553
      %s556 = sphi 0, %s555
      %s570 = sphi 0, %s556
      %s574 = sphi 0, %s574
      %s576 = sphi 0, %s574
      %s577 = sphi 0, %s576
      %s591 = sphi 0, %s577
      %s595 = sphi 0, %s595
      %s597 = sphi 0, %s595
      %s598 = sphi 0, %s597
      %s612 = sphi 0, %s598
      %s616 = sphi 0, %s616
      %s618 = sphi 0, %s616
      %s619 = sphi 0, %s618
      %s633 = sphi 0, %s619
      %s637 = sphi 0, %s637
      %s639 = sphi 0, %s637
      %s640 = sphi 0, %s639
      %s654 = sphi 0, %s640
      %s658 = sphi 0, %s658
      %s660 = sphi 0, %s658
      %s661 = sphi 0, %s660
      %s675 = sphi 0, %s661
      %s679 = sphi 0, %s679
      %s681 = sphi 0, %s679
      %s682 = sphi 0, %s681
      %s696 = sphi 0, %s682
      %s702 = sphi 0, %s704
      %s705 = sphi 0, %s702
      %s706 = sphi 0, %s705
      %s722 = sphi 0, %s706
    $region4: #{tpu_custom_call.1} parent=1 // loop_header_branch
      %81 = sbr.rel (%p79) target = $region8
    $region5: #{tpu_custom_call.1} parent=1 // loop_body
      %s83 = ssub.s32 %s78, 1
      %s84 = ssub.s32 %s78, 2
      %s85 = sadd.s32 %s78, 1
      %s86 = ssub.s32 %s78, %s85
      %p87 = scmp.eq.s32.totalorder %s86, 0
      %s89 = sadd.s32 %s88, 1
      %s90 = scalar_select %p87, %s88, %s89
      %p93 = pneg %p87
      %p94 = scmp.eq.s32.totalorder %s78, 1
      %p95 = por %p93, %p94
      %p96 = scmp.ne.s32.totalorder %s88, %s91
      %p97 = scmp.eq.s32.totalorder %s78, 0
      %p98 = por %p96, %p97
      %p99 = scmp.ne.s32.totalorder %s88, %s91
      %p100 = scmp.eq.s32.totalorder %s83, 1
      %p101 = por %p99, %p100
      %p102 = scmp.ne.s32.totalorder %s91, %s92
      %p103 = scmp.eq.s32.totalorder %s83, 0
      %p104 = por %p102, %p103
      %p105 = scmp.ne.s32.totalorder %s91, %s92
      %p106 = scmp.eq.s32.totalorder %s84, 1
      %p107 = por %p105, %p106
      %p109 = scmp.ne.s32.totalorder %s92, %s108
      %p110 = scmp.eq.s32.totalorder %s84, 0
      %p111 = por %p109, %p110
      %s113 = sadd.s32 %s112, 1
      %p116 = scmp.eq.s32.totalorder %s78, 1
      %p117 = scmp.ne.s32.totalorder %s112, %s114
      %p118 = scmp.eq.s32.totalorder %s78, 0
      %p119 = por %p117, %p118
      %p120 = scmp.ne.s32.totalorder %s112, %s114
      %p121 = scmp.eq.s32.totalorder %s83, 1
      %p122 = por %p120, %p121
      %p123 = scmp.ne.s32.totalorder %s114, %s115
      %p124 = scmp.eq.s32.totalorder %s83, 0
      %p125 = por %p123, %p124
      %p126 = scmp.ne.s32.totalorder %s114, %s115
      %p127 = scmp.eq.s32.totalorder %s84, 1
      %p128 = por %p126, %p127
      %p130 = scmp.ne.s32.totalorder %s115, %s129
      %p131 = scmp.eq.s32.totalorder %s84, 0
      %p132 = por %p130, %p131
      %s134 = sadd.s32 %s133, 1
      %p137 = scmp.eq.s32.totalorder %s78, 1
      %p138 = scmp.ne.s32.totalorder %s133, %s135
      %p139 = scmp.eq.s32.totalorder %s78, 0
      %p140 = por %p138, %p139
      %p141 = scmp.ne.s32.totalorder %s133, %s135
      %p142 = scmp.eq.s32.totalorder %s83, 1
      %p143 = por %p141, %p142
      %p144 = scmp.ne.s32.totalorder %s135, %s136
      %p145 = scmp.eq.s32.totalorder %s83, 0
      %p146 = por %p144, %p145
      %p147 = scmp.ne.s32.totalorder %s135, %s136
      %p148 = scmp.eq.s32.totalorder %s84, 1
      %p149 = por %p147, %p148
      %p151 = scmp.ne.s32.totalorder %s136, %s150
      %p152 = scmp.eq.s32.totalorder %s84, 0
      %p153 = por %p151, %p152
      %s155 = sadd.s32 %s154, 1
      %p158 = scmp.eq.s32.totalorder %s78, 1
      %p159 = scmp.ne.s32.totalorder %s154, %s156
      %p160 = scmp.eq.s32.totalorder %s78, 0
      %p161 = por %p159, %p160
      %p162 = scmp.ne.s32.totalorder %s154, %s156
      %p163 = scmp.eq.s32.totalorder %s83, 1
      %p164 = por %p162, %p163
      %p165 = scmp.ne.s32.totalorder %s156, %s157
      %p166 = scmp.eq.s32.totalorder %s83, 0
      %p167 = por %p165, %p166
      %p168 = scmp.ne.s32.totalorder %s156, %s157
      %p169 = scmp.eq.s32.totalorder %s84, 1
      %p170 = por %p168, %p169
      %p172 = scmp.ne.s32.totalorder %s157, %s171
      %p173 = scmp.eq.s32.totalorder %s84, 0
      %p174 = por %p172, %p173
      %s176 = sadd.s32 %s175, 1
      %p179 = scmp.eq.s32.totalorder %s78, 1
      %p180 = scmp.ne.s32.totalorder %s175, %s177
      %p181 = scmp.eq.s32.totalorder %s78, 0
      %p182 = por %p180, %p181
      %p183 = scmp.ne.s32.totalorder %s175, %s177
      %p184 = scmp.eq.s32.totalorder %s83, 1
      %p185 = por %p183, %p184
      %p186 = scmp.ne.s32.totalorder %s177, %s178
      %p187 = scmp.eq.s32.totalorder %s83, 0
      %p188 = por %p186, %p187
      %p189 = scmp.ne.s32.totalorder %s177, %s178
      %p190 = scmp.eq.s32.totalorder %s84, 1
      %p191 = por %p189, %p190
      %p193 = scmp.ne.s32.totalorder %s178, %s192
      %p194 = scmp.eq.s32.totalorder %s84, 0
      %p195 = por %p193, %p194
      %s197 = sadd.s32 %s196, 1
      %p200 = scmp.eq.s32.totalorder %s78, 1
      %p201 = scmp.ne.s32.totalorder %s196, %s198
      %p202 = scmp.eq.s32.totalorder %s78, 0
      %p203 = por %p201, %p202
      %p204 = scmp.ne.s32.totalorder %s196, %s198
      %p205 = scmp.eq.s32.totalorder %s83, 1
      %p206 = por %p204, %p205
      %p207 = scmp.ne.s32.totalorder %s198, %s199
      %p208 = scmp.eq.s32.totalorder %s83, 0
      %p209 = por %p207, %p208
      %p210 = scmp.ne.s32.totalorder %s198, %s199
      %p211 = scmp.eq.s32.totalorder %s84, 1
      %p212 = por %p210, %p211
      %p214 = scmp.ne.s32.totalorder %s199, %s213
      %p215 = scmp.eq.s32.totalorder %s84, 0
      %p216 = por %p214, %p215
      %s218 = sadd.s32 %s217, 1
      %p221 = scmp.eq.s32.totalorder %s78, 1
      %p222 = scmp.ne.s32.totalorder %s217, %s219
      %p223 = scmp.eq.s32.totalorder %s78, 0
      %p224 = por %p222, %p223
      %p225 = scmp.ne.s32.totalorder %s217, %s219
      %p226 = scmp.eq.s32.totalorder %s83, 1
      %p227 = por %p225, %p226
      %p228 = scmp.ne.s32.totalorder %s219, %s220
      %p229 = scmp.eq.s32.totalorder %s83, 0
      %p230 = por %p228, %p229
      %p231 = scmp.ne.s32.totalorder %s219, %s220
      %p232 = scmp.eq.s32.totalorder %s84, 1
      %p233 = por %p231, %p232
      %p235 = scmp.ne.s32.totalorder %s220, %s234
      %p236 = scmp.eq.s32.totalorder %s84, 0
      %p237 = por %p235, %p236
      %s239 = sadd.s32 %s238, 1
      %p242 = scmp.eq.s32.totalorder %s78, 1
      %p243 = scmp.ne.s32.totalorder %s238, %s240
      %p244 = scmp.eq.s32.totalorder %s78, 0
      %p245 = por %p243, %p244
      %p246 = scmp.ne.s32.totalorder %s238, %s240
      %p247 = scmp.eq.s32.totalorder %s83, 1
      %p248 = por %p246, %p247
      %p249 = scmp.ne.s32.totalorder %s240, %s241
      %p250 = scmp.eq.s32.totalorder %s83, 0
      %p251 = por %p249, %p250
      %p252 = scmp.ne.s32.totalorder %s240, %s241
      %p253 = scmp.eq.s32.totalorder %s84, 1
      %p254 = por %p252, %p253
      %p256 = scmp.ne.s32.totalorder %s241, %s255
      %p257 = scmp.eq.s32.totalorder %s84, 0
      %p258 = por %p256, %p257
      %s260 = sadd.s32 %s259, 1
      %p263 = scmp.eq.s32.totalorder %s78, 1
      %p264 = scmp.ne.s32.totalorder %s259, %s261
      %p265 = scmp.eq.s32.totalorder %s78, 0
      %p266 = por %p264, %p265
      %p267 = scmp.ne.s32.totalorder %s259, %s261
      %p268 = scmp.eq.s32.totalorder %s83, 1
      %p269 = por %p267, %p268
      %p270 = scmp.ne.s32.totalorder %s261, %s262
      %p271 = scmp.eq.s32.totalorder %s83, 0
      %p272 = por %p270, %p271
      %p273 = scmp.ne.s32.totalorder %s261, %s262
      %p274 = scmp.eq.s32.totalorder %s84, 1
      %p275 = por %p273, %p274
      %p277 = scmp.ne.s32.totalorder %s262, %s276
      %p278 = scmp.eq.s32.totalorder %s84, 0
      %p279 = por %p277, %p278
      %s281 = sadd.s32 %s280, 1
      %p284 = scmp.eq.s32.totalorder %s78, 1
      %p285 = scmp.ne.s32.totalorder %s280, %s282
      %p286 = scmp.eq.s32.totalorder %s78, 0
      %p287 = por %p285, %p286
      %p288 = scmp.ne.s32.totalorder %s280, %s282
      %p289 = scmp.eq.s32.totalorder %s83, 1
      %p290 = por %p288, %p289
      %p291 = scmp.ne.s32.totalorder %s282, %s283
      %p292 = scmp.eq.s32.totalorder %s83, 0
      %p293 = por %p291, %p292
      %p294 = scmp.ne.s32.totalorder %s282, %s283
      %p295 = scmp.eq.s32.totalorder %s84, 1
      %p296 = por %p294, %p295
      %p298 = scmp.ne.s32.totalorder %s283, %s297
      %p299 = scmp.eq.s32.totalorder %s84, 0
      %p300 = por %p298, %p299
      %s302 = sadd.s32 %s301, 1
      %p305 = scmp.eq.s32.totalorder %s78, 1
      %p306 = scmp.ne.s32.totalorder %s301, %s303
      %p307 = scmp.eq.s32.totalorder %s78, 0
      %p308 = por %p306, %p307
      %p309 = scmp.ne.s32.totalorder %s301, %s303
      %p310 = scmp.eq.s32.totalorder %s83, 1
      %p311 = por %p309, %p310
      %p312 = scmp.ne.s32.totalorder %s303, %s304
      %p313 = scmp.eq.s32.totalorder %s83, 0
      %p314 = por %p312, %p313
      %p315 = scmp.ne.s32.totalorder %s303, %s304
      %p316 = scmp.eq.s32.totalorder %s84, 1
      %p317 = por %p315, %p316
      %p319 = scmp.ne.s32.totalorder %s304, %s318
      %p320 = scmp.eq.s32.totalorder %s84, 0
      %p321 = por %p319, %p320
      %s323 = sadd.s32 %s322, 1
      %p326 = scmp.eq.s32.totalorder %s78, 1
      %p327 = scmp.ne.s32.totalorder %s322, %s324
      %p328 = scmp.eq.s32.totalorder %s78, 0
      %p329 = por %p327, %p328
      %p330 = scmp.ne.s32.totalorder %s322, %s324
      %p331 = scmp.eq.s32.totalorder %s83, 1
      %p332 = por %p330, %p331
      %p333 = scmp.ne.s32.totalorder %s324, %s325
      %p334 = scmp.eq.s32.totalorder %s83, 0
      %p335 = por %p333, %p334
      %p336 = scmp.ne.s32.totalorder %s324, %s325
      %p337 = scmp.eq.s32.totalorder %s84, 1
      %p338 = por %p336, %p337
      %p340 = scmp.ne.s32.totalorder %s325, %s339
      %p341 = scmp.eq.s32.totalorder %s84, 0
      %p342 = por %p340, %p341
      %s344 = sadd.s32 %s343, 1
      %p347 = scmp.eq.s32.totalorder %s78, 1
      %p348 = scmp.ne.s32.totalorder %s343, %s345
      %p349 = scmp.eq.s32.totalorder %s78, 0
      %p350 = por %p348, %p349
      %p351 = scmp.ne.s32.totalorder %s343, %s345
      %p352 = scmp.eq.s32.totalorder %s83, 1
      %p353 = por %p351, %p352
      %p354 = scmp.ne.s32.totalorder %s345, %s346
      %p355 = scmp.eq.s32.totalorder %s83, 0
      %p356 = por %p354, %p355
      %p357 = scmp.ne.s32.totalorder %s345, %s346
      %p358 = scmp.eq.s32.totalorder %s84, 1
      %p359 = por %p357, %p358
      %p361 = scmp.ne.s32.totalorder %s346, %s360
      %p362 = scmp.eq.s32.totalorder %s84, 0
      %p363 = por %p361, %p362
      %s365 = sadd.s32 %s364, 1
      %p368 = scmp.eq.s32.totalorder %s78, 1
      %p369 = scmp.ne.s32.totalorder %s364, %s366
      %p370 = scmp.eq.s32.totalorder %s78, 0
      %p371 = por %p369, %p370
      %p372 = scmp.ne.s32.totalorder %s364, %s366
      %p373 = scmp.eq.s32.totalorder %s83, 1
      %p374 = por %p372, %p373
      %p375 = scmp.ne.s32.totalorder %s366, %s367
      %p376 = scmp.eq.s32.totalorder %s83, 0
      %p377 = por %p375, %p376
      %p378 = scmp.ne.s32.totalorder %s366, %s367
      %p379 = scmp.eq.s32.totalorder %s84, 1
      %p380 = por %p378, %p379
      %p382 = scmp.ne.s32.totalorder %s367, %s381
      %p383 = scmp.eq.s32.totalorder %s84, 0
      %p384 = por %p382, %p383
      %s386 = sadd.s32 %s385, 1
      %p389 = scmp.eq.s32.totalorder %s78, 1
      %p390 = scmp.ne.s32.totalorder %s385, %s387
      %p391 = scmp.eq.s32.totalorder %s78, 0
      %p392 = por %p390, %p391
      %p393 = scmp.ne.s32.totalorder %s385, %s387
      %p394 = scmp.eq.s32.totalorder %s83, 1
      %p395 = por %p393, %p394
      %p396 = scmp.ne.s32.totalorder %s387, %s388
      %p397 = scmp.eq.s32.totalorder %s83, 0
      %p398 = por %p396, %p397
      %p399 = scmp.ne.s32.totalorder %s387, %s388
      %p400 = scmp.eq.s32.totalorder %s84, 1
      %p401 = por %p399, %p400
      %p403 = scmp.ne.s32.totalorder %s388, %s402
      %p404 = scmp.eq.s32.totalorder %s84, 0
      %p405 = por %p403, %p404
      %s407 = sadd.s32 %s406, 1
      %p410 = scmp.eq.s32.totalorder %s78, 1
      %p411 = scmp.ne.s32.totalorder %s406, %s408
      %p412 = scmp.eq.s32.totalorder %s78, 0
      %p413 = por %p411, %p412
      %p414 = scmp.ne.s32.totalorder %s406, %s408
      %p415 = scmp.eq.s32.totalorder %s83, 1
      %p416 = por %p414, %p415
      %p417 = scmp.ne.s32.totalorder %s408, %s409
      %p418 = scmp.eq.s32.totalorder %s83, 0
      %p419 = por %p417, %p418
      %p420 = scmp.ne.s32.totalorder %s408, %s409
      %p421 = scmp.eq.s32.totalorder %s84, 1
      %p422 = por %p420, %p421
      %p424 = scmp.ne.s32.totalorder %s409, %s423
      %p425 = scmp.eq.s32.totalorder %s84, 0
      %p426 = por %p424, %p425
      %s428 = sadd.s32 %s427, 1
      %p431 = scmp.eq.s32.totalorder %s78, 1
      %p432 = scmp.ne.s32.totalorder %s427, %s429
      %p433 = scmp.eq.s32.totalorder %s78, 0
      %p434 = por %p432, %p433
      %p435 = scmp.ne.s32.totalorder %s427, %s429
      %p436 = scmp.eq.s32.totalorder %s83, 1
      %p437 = por %p435, %p436
      %p438 = scmp.ne.s32.totalorder %s429, %s430
      %p439 = scmp.eq.s32.totalorder %s83, 0
      %p440 = por %p438, %p439
      %p441 = scmp.ne.s32.totalorder %s429, %s430
      %p442 = scmp.eq.s32.totalorder %s84, 1
      %p443 = por %p441, %p442
      %p445 = scmp.ne.s32.totalorder %s430, %s444
      %p446 = scmp.eq.s32.totalorder %s84, 0
      %p447 = por %p445, %p446
      %s449 = sadd.s32 %s448, 1
      %p452 = scmp.eq.s32.totalorder %s78, 1
      %p453 = scmp.ne.s32.totalorder %s448, %s450
      %p454 = scmp.eq.s32.totalorder %s78, 0
      %p455 = por %p453, %p454
      %p456 = scmp.ne.s32.totalorder %s448, %s450
      %p457 = scmp.eq.s32.totalorder %s83, 1
      %p458 = por %p456, %p457
      %p459 = scmp.ne.s32.totalorder %s450, %s451
      %p460 = scmp.eq.s32.totalorder %s83, 0
      %p461 = por %p459, %p460
      %p462 = scmp.ne.s32.totalorder %s450, %s451
      %p463 = scmp.eq.s32.totalorder %s84, 1
      %p464 = por %p462, %p463
      %p466 = scmp.ne.s32.totalorder %s451, %s465
      %p467 = scmp.eq.s32.totalorder %s84, 0
      %p468 = por %p466, %p467
      %s470 = sadd.s32 %s469, 1
      %p473 = scmp.eq.s32.totalorder %s78, 1
      %p474 = scmp.ne.s32.totalorder %s469, %s471
      %p475 = scmp.eq.s32.totalorder %s78, 0
      %p476 = por %p474, %p475
      %p477 = scmp.ne.s32.totalorder %s469, %s471
      %p478 = scmp.eq.s32.totalorder %s83, 1
      %p479 = por %p477, %p478
      %p480 = scmp.ne.s32.totalorder %s471, %s472
      %p481 = scmp.eq.s32.totalorder %s83, 0
      %p482 = por %p480, %p481
      %p483 = scmp.ne.s32.totalorder %s471, %s472
      %p484 = scmp.eq.s32.totalorder %s84, 1
      %p485 = por %p483, %p484
      %p487 = scmp.ne.s32.totalorder %s472, %s486
      %p488 = scmp.eq.s32.totalorder %s84, 0
      %p489 = por %p487, %p488
      %s491 = sadd.s32 %s490, 1
      %p494 = scmp.eq.s32.totalorder %s78, 1
      %p495 = scmp.ne.s32.totalorder %s490, %s492
      %p496 = scmp.eq.s32.totalorder %s78, 0
      %p497 = por %p495, %p496
      %p498 = scmp.ne.s32.totalorder %s490, %s492
      %p499 = scmp.eq.s32.totalorder %s83, 1
      %p500 = por %p498, %p499
      %p501 = scmp.ne.s32.totalorder %s492, %s493
      %p502 = scmp.eq.s32.totalorder %s83, 0
      %p503 = por %p501, %p502
      %p504 = scmp.ne.s32.totalorder %s492, %s493
      %p505 = scmp.eq.s32.totalorder %s84, 1
      %p506 = por %p504, %p505
      %p508 = scmp.ne.s32.totalorder %s493, %s507
      %p509 = scmp.eq.s32.totalorder %s84, 0
      %p510 = por %p508, %p509
      %s512 = sadd.s32 %s511, 1
      %p515 = scmp.eq.s32.totalorder %s78, 1
      %p516 = scmp.ne.s32.totalorder %s511, %s513
      %p517 = scmp.eq.s32.totalorder %s78, 0
      %p518 = por %p516, %p517
      %p519 = scmp.ne.s32.totalorder %s511, %s513
      %p520 = scmp.eq.s32.totalorder %s83, 1
      %p521 = por %p519, %p520
      %p522 = scmp.ne.s32.totalorder %s513, %s514
      %p523 = scmp.eq.s32.totalorder %s83, 0
      %p524 = por %p522, %p523
      %p525 = scmp.ne.s32.totalorder %s513, %s514
      %p526 = scmp.eq.s32.totalorder %s84, 1
      %p527 = por %p525, %p526
      %p529 = scmp.ne.s32.totalorder %s514, %s528
      %p530 = scmp.eq.s32.totalorder %s84, 0
      %p531 = por %p529, %p530
      %s533 = sadd.s32 %s532, 1
      %p536 = scmp.eq.s32.totalorder %s78, 1
      %p537 = scmp.ne.s32.totalorder %s532, %s534
      %p538 = scmp.eq.s32.totalorder %s78, 0
      %p539 = por %p537, %p538
      %p540 = scmp.ne.s32.totalorder %s532, %s534
      %p541 = scmp.eq.s32.totalorder %s83, 1
      %p542 = por %p540, %p541
      %p543 = scmp.ne.s32.totalorder %s534, %s535
      %p544 = scmp.eq.s32.totalorder %s83, 0
      %p545 = por %p543, %p544
      %p546 = scmp.ne.s32.totalorder %s534, %s535
      %p547 = scmp.eq.s32.totalorder %s84, 1
      %p548 = por %p546, %p547
      %p550 = scmp.ne.s32.totalorder %s535, %s549
      %p551 = scmp.eq.s32.totalorder %s84, 0
      %p552 = por %p550, %p551
      %s554 = sadd.s32 %s553, 1
      %p557 = scmp.eq.s32.totalorder %s78, 1
      %p558 = scmp.ne.s32.totalorder %s553, %s555
      %p559 = scmp.eq.s32.totalorder %s78, 0
      %p560 = por %p558, %p559
      %p561 = scmp.ne.s32.totalorder %s553, %s555
      %p562 = scmp.eq.s32.totalorder %s83, 1
      %p563 = por %p561, %p562
      %p564 = scmp.ne.s32.totalorder %s555, %s556
      %p565 = scmp.eq.s32.totalorder %s83, 0
      %p566 = por %p564, %p565
      %p567 = scmp.ne.s32.totalorder %s555, %s556
      %p568 = scmp.eq.s32.totalorder %s84, 1
      %p569 = por %p567, %p568
      %p571 = scmp.ne.s32.totalorder %s556, %s570
      %p572 = scmp.eq.s32.totalorder %s84, 0
      %p573 = por %p571, %p572
      %s575 = sadd.s32 %s574, 1
      %p578 = scmp.eq.s32.totalorder %s78, 1
      %p579 = scmp.ne.s32.totalorder %s574, %s576
      %p580 = scmp.eq.s32.totalorder %s78, 0
      %p581 = por %p579, %p580
      %p582 = scmp.ne.s32.totalorder %s574, %s576
      %p583 = scmp.eq.s32.totalorder %s83, 1
      %p584 = por %p582, %p583
      %p585 = scmp.ne.s32.totalorder %s576, %s577
      %p586 = scmp.eq.s32.totalorder %s83, 0
      %p587 = por %p585, %p586
      %p588 = scmp.ne.s32.totalorder %s576, %s577
      %p589 = scmp.eq.s32.totalorder %s84, 1
      %p590 = por %p588, %p589
      %p592 = scmp.ne.s32.totalorder %s577, %s591
      %p593 = scmp.eq.s32.totalorder %s84, 0
      %p594 = por %p592, %p593
      %s596 = sadd.s32 %s595, 1
      %p599 = scmp.eq.s32.totalorder %s78, 1
      %p600 = scmp.ne.s32.totalorder %s595, %s597
      %p601 = scmp.eq.s32.totalorder %s78, 0
      %p602 = por %p600, %p601
      %p603 = scmp.ne.s32.totalorder %s595, %s597
      %p604 = scmp.eq.s32.totalorder %s83, 1
      %p605 = por %p603, %p604
      %p606 = scmp.ne.s32.totalorder %s597, %s598
      %p607 = scmp.eq.s32.totalorder %s83, 0
      %p608 = por %p606, %p607
      %p609 = scmp.ne.s32.totalorder %s597, %s598
      %p610 = scmp.eq.s32.totalorder %s84, 1
      %p611 = por %p609, %p610
      %p613 = scmp.ne.s32.totalorder %s598, %s612
      %p614 = scmp.eq.s32.totalorder %s84, 0
      %p615 = por %p613, %p614
      %s617 = sadd.s32 %s616, 1
      %p620 = scmp.eq.s32.totalorder %s78, 1
      %p621 = scmp.ne.s32.totalorder %s616, %s618
      %p622 = scmp.eq.s32.totalorder %s78, 0
      %p623 = por %p621, %p622
      %p624 = scmp.ne.s32.totalorder %s616, %s618
      %p625 = scmp.eq.s32.totalorder %s83, 1
      %p626 = por %p624, %p625
      %p627 = scmp.ne.s32.totalorder %s618, %s619
      %p628 = scmp.eq.s32.totalorder %s83, 0
      %p629 = por %p627, %p628
      %p630 = scmp.ne.s32.totalorder %s618, %s619
      %p631 = scmp.eq.s32.totalorder %s84, 1
      %p632 = por %p630, %p631
      %p634 = scmp.ne.s32.totalorder %s619, %s633
      %p635 = scmp.eq.s32.totalorder %s84, 0
      %p636 = por %p634, %p635
      %s638 = sadd.s32 %s637, 1
      %p641 = scmp.eq.s32.totalorder %s78, 1
      %p642 = scmp.ne.s32.totalorder %s637, %s639
      %p643 = scmp.eq.s32.totalorder %s78, 0
      %p644 = por %p642, %p643
      %p645 = scmp.ne.s32.totalorder %s637, %s639
      %p646 = scmp.eq.s32.totalorder %s83, 1
      %p647 = por %p645, %p646
      %p648 = scmp.ne.s32.totalorder %s639, %s640
      %p649 = scmp.eq.s32.totalorder %s83, 0
      %p650 = por %p648, %p649
      %p651 = scmp.ne.s32.totalorder %s639, %s640
      %p652 = scmp.eq.s32.totalorder %s84, 1
      %p653 = por %p651, %p652
      %p655 = scmp.ne.s32.totalorder %s640, %s654
      %p656 = scmp.eq.s32.totalorder %s84, 0
      %p657 = por %p655, %p656
      %s659 = sadd.s32 %s658, 1
      %p662 = scmp.eq.s32.totalorder %s78, 1
      %p663 = scmp.ne.s32.totalorder %s658, %s660
      %p664 = scmp.eq.s32.totalorder %s78, 0
      %p665 = por %p663, %p664
      %p666 = scmp.ne.s32.totalorder %s658, %s660
      %p667 = scmp.eq.s32.totalorder %s83, 1
      %p668 = por %p666, %p667
      %p669 = scmp.ne.s32.totalorder %s660, %s661
      %p670 = scmp.eq.s32.totalorder %s83, 0
      %p671 = por %p669, %p670
      %p672 = scmp.ne.s32.totalorder %s660, %s661
      %p673 = scmp.eq.s32.totalorder %s84, 1
      %p674 = por %p672, %p673
      %p676 = scmp.ne.s32.totalorder %s661, %s675
      %p677 = scmp.eq.s32.totalorder %s84, 0
      %p678 = por %p676, %p677
      %s680 = sadd.s32 %s679, 1
      %p683 = scmp.eq.s32.totalorder %s78, 1
      %p684 = scmp.ne.s32.totalorder %s679, %s681
      %p685 = scmp.eq.s32.totalorder %s78, 0
      %p686 = por %p684, %p685
      %p687 = scmp.ne.s32.totalorder %s679, %s681
      %p688 = scmp.eq.s32.totalorder %s83, 1
      %p689 = por %p687, %p688
      %p690 = scmp.ne.s32.totalorder %s681, %s682
      %p691 = scmp.eq.s32.totalorder %s83, 0
      %p692 = por %p690, %p691
      %p693 = scmp.ne.s32.totalorder %s681, %s682
      %p694 = scmp.eq.s32.totalorder %s84, 1
      %p695 = por %p693, %p694
      %p697 = scmp.ne.s32.totalorder %s682, %s696
      %p698 = scmp.eq.s32.totalorder %s84, 0
      %p699 = por %p697, %p698
      %s700 = ssub.s32 %s78, %s85
      %p701 = scmp.eq.s32.totalorder %s700, 0
      %s703 = sadd.s32 %s702, 1
      %s704 = scalar_select %p701, %s702, %s703
      %p707 = pneg %p701
      %p708 = scmp.eq.s32.totalorder %s78, 1
      %p709 = por %p707, %p708
      %p710 = scmp.ne.s32.totalorder %s702, %s705
      %p711 = scmp.eq.s32.totalorder %s78, 0
      %p712 = por %p710, %p711
      %p713 = scmp.ne.s32.totalorder %s702, %s705
      %p714 = scmp.eq.s32.totalorder %s83, 1
      %p715 = por %p713, %p714
      %p716 = scmp.ne.s32.totalorder %s705, %s706
      %p717 = scmp.eq.s32.totalorder %s83, 0
      %p718 = por %p716, %p717
      %p719 = scmp.ne.s32.totalorder %s705, %s706
      %p720 = scmp.eq.s32.totalorder %s84, 1
      %p721 = por %p719, %p720
      %p723 = scmp.ne.s32.totalorder %s706, %s722
      %p724 = scmp.eq.s32.totalorder %s84, 0
      %p725 = por %p723, %p724
      %p726 = scmp.le.s32.totalorder 1, %s78
      %p727 = scmp.lt.s32.totalorder %s78, 3
      %p728 = pnand %p726, %p727
      %p729 = pneg %p728
      // Predicated region
      $region9: #{tpu_custom_call.1} parent=5 // pred_check
        _
      $region10: #{tpu_custom_call.1} parent=5 // pred_check_branch
        %731 = sbr.rel (%p728) target = $region12
      $region11: #{tpu_custom_call.1} parent=5 // pred_region
        %s732 = ssub.s32 %s78, 1
        // Predicated region
        $region13: #{tpu_custom_call.1} parent=11 // pred_check
          %p733 = pneg %p125
        $region14: #{tpu_custom_call.1} parent=11 // pred_check_branch
          %735 = sbr.rel (%p733) target = $region16
        $region15: #{tpu_custom_call.1} parent=11 // pred_region
          %s737 = ssub.s32 1024, 1024
          %738 = vsyncadd [#allocation6], %s737
          %s739 = sshll.u32 [#allocation5], 4
          %s740 = int_to_ptr.vmem [resolvable:$true] %s739
          %745 = dma.hbm_to_vmem [thread:$0]  %s3, 1024, %s740, [#allocation6], 128, 128, 8
        $region16: #{tpu_custom_call.1} parent=11 // pred_fallthru
          _
        // Predicated region
        $region17: #{tpu_custom_call.1} parent=11 // pred_check
          %p746 = pneg %p146
        $region18: #{tpu_custom_call.1} parent=11 // pred_check_branch
          %748 = sbr.rel (%p746) target = $region20
        $region19: #{tpu_custom_call.1} parent=11 // pred_region
          %s750 = ssub.s32 4096, 4096
          %751 = vsyncadd [#allocation6], %s750
          %s752 = sshll.u32 [#allocation7], 4
          %s753 = int_to_ptr.vmem [resolvable:$true] %s752
          %758 = dma.hbm_to_vmem [thread:$0]  %s5, 4096, %s753, [#allocation6], 128, 128, 8
        $region20: #{tpu_custom_call.1} parent=11 // pred_fallthru
          _
        // Predicated region
        $region21: #{tpu_custom_call.1} parent=11 // pred_check
          %p759 = pneg %p167
        $region22: #{tpu_custom_call.1} parent=11 // pred_check_branch
          %761 = sbr.rel (%p759) target = $region24
        $region23: #{tpu_custom_call.1} parent=11 // pred_region
          %s763 = ssub.s32 4096, 4096
          %764 = vsyncadd [#allocation9], %s763
          %s765 = sshll.u32 [#allocation8], 4
          %s766 = int_to_ptr.vmem [resolvable:$true] %s765
          %771 = dma.hbm_to_vmem [thread:$0]  %s7, 4096, %s766, [#allocation9], 128, 128, 8
        $region24: #{tpu_custom_call.1} parent=11 // pred_fallthru
          _
        // Predicated region
        $region25: #{tpu_custom_call.1} parent=11 // pred_check
          %p772 = pneg %p188
        $region26: #{tpu_custom_call.1} parent=11 // pred_check_branch
          %774 = sbr.rel (%p772) target = $region28
        $region27: #{tpu_custom_call.1} parent=11 // pred_region
          %s776 = ssub.s32 16, 16
          %777 = vsyncadd [#allocation9], %s776
          %s779 = sshll.u32 [#allocation10], 4
          %s780 = int_to_ptr.vmem [resolvable:$true] %s779
          %782 = dma.hbm_to_vmem [thread:$0]  %s9, 16, %s780, [#allocation9]
        $region28: #{tpu_custom_call.1} parent=11 // pred_fallthru
          _
        // Predicated region
        $region29: #{tpu_custom_call.1} parent=11 // pred_check
          %p783 = pneg %p209
        $region30: #{tpu_custom_call.1} parent=11 // pred_check_branch
          %785 = sbr.rel (%p783) target = $region32
        $region31: #{tpu_custom_call.1} parent=11 // pred_region
          %s787 = ssub.s32 16, 16
          %788 = vsyncadd [#allocation12], %s787
          %s790 = sshll.u32 [#allocation11], 4
          %s791 = int_to_ptr.vmem [resolvable:$true] %s790
          %793 = dma.hbm_to_vmem [thread:$0]  %s11, 16, %s791, [#allocation12]
        $region32: #{tpu_custom_call.1} parent=11 // pred_fallthru
          _
        // Predicated region
        $region33: #{tpu_custom_call.1} parent=11 // pred_check
          %p794 = pneg %p230
        $region34: #{tpu_custom_call.1} parent=11 // pred_check_branch
          %796 = sbr.rel (%p794) target = $region36
        $region35: #{tpu_custom_call.1} parent=11 // pred_region
          %s798 = ssub.s32 16, 16
          %799 = vsyncadd [#allocation12], %s798
          %s801 = sshll.u32 [#allocation13], 4
          %s802 = int_to_ptr.vmem [resolvable:$true] %s801
          %804 = dma.hbm_to_vmem [thread:$0]  %s13, 16, %s802, [#allocation12]
        $region36: #{tpu_custom_call.1} parent=11 // pred_fallthru
          _
        // Predicated region
        $region37: #{tpu_custom_call.1} parent=11 // pred_check
          %p805 = pneg %p251
        $region38: #{tpu_custom_call.1} parent=11 // pred_check_branch
          %807 = sbr.rel (%p805) target = $region40
        $region39: #{tpu_custom_call.1} parent=11 // pred_region
          _
        $region40: #{tpu_custom_call.1} parent=11 // pred_fallthru
          _
        // Predicated region
        $region41: #{tpu_custom_call.1} parent=11 // pred_check
          %p808 = pneg %p272
        $region42: #{tpu_custom_call.1} parent=11 // pred_check_branch
          %810 = sbr.rel (%p808) target = $region44
        $region43: #{tpu_custom_call.1} parent=11 // pred_region
          %s812 = ssub.s32 6144, 6144
          %813 = vsyncadd [#allocation15], %s812
          %s814 = sshll.u32 [#allocation14], 4
          %s815 = int_to_ptr.vmem [resolvable:$true] %s814
          %820 = dma.hbm_to_vmem [thread:$0]  %s17, 6144, %s815, [#allocation15], 128, 128, 8
        $region44: #{tpu_custom_call.1} parent=11 // pred_fallthru
          _
        // Predicated region
        $region45: #{tpu_custom_call.1} parent=11 // pred_check
          %p821 = pneg %p293
        $region46: #{tpu_custom_call.1} parent=11 // pred_check_branch
          %823 = sbr.rel (%p821) target = $region48
        $region47: #{tpu_custom_call.1} parent=11 // pred_region
          _
        $region48: #{tpu_custom_call.1} parent=11 // pred_fallthru
          _
        // Predicated region
        $region49: #{tpu_custom_call.1} parent=11 // pred_check
          %p824 = pneg %p314
        $region50: #{tpu_custom_call.1} parent=11 // pred_check_branch
          %826 = sbr.rel (%p824) target = $region52
        $region51: #{tpu_custom_call.1} parent=11 // pred_region
          _
        $region52: #{tpu_custom_call.1} parent=11 // pred_fallthru
          _
        // Predicated region
        $region53: #{tpu_custom_call.1} parent=11 // pred_check
          %p827 = pneg %p335
        $region54: #{tpu_custom_call.1} parent=11 // pred_check_branch
          %829 = sbr.rel (%p827) target = $region56
        $region55: #{tpu_custom_call.1} parent=11 // pred_region
          %s831 = ssub.s32 6144, 6144
          %832 = vsyncadd [#allocation15], %s831
          %s833 = sshll.u32 [#allocation16], 4
          %s834 = int_to_ptr.vmem [resolvable:$true] %s833
          %839 = dma.hbm_to_vmem [thread:$0]  %s23, 6144, %s834, [#allocation15], 128, 128, 8
        $region56: #{tpu_custom_call.1} parent=11 // pred_fallthru
          _
        // Predicated region
        $region57: #{tpu_custom_call.1} parent=11 // pred_check
          %p840 = pneg %p356
        $region58: #{tpu_custom_call.1} parent=11 // pred_check_branch
          %842 = sbr.rel (%p840) target = $region60
        $region59: #{tpu_custom_call.1} parent=11 // pred_region
          _
        $region60: #{tpu_custom_call.1} parent=11 // pred_fallthru
          _
        // Predicated region
        $region61: #{tpu_custom_call.1} parent=11 // pred_check
          %p843 = pneg %p377
        $region62: #{tpu_custom_call.1} parent=11 // pred_check_branch
          %845 = sbr.rel (%p843) target = $region64
        $region63: #{tpu_custom_call.1} parent=11 // pred_region
          _
        $region64: #{tpu_custom_call.1} parent=11 // pred_fallthru
          _
        // Predicated region
        $region65: #{tpu_custom_call.1} parent=11 // pred_check
          %p846 = pneg %p398
        $region66: #{tpu_custom_call.1} parent=11 // pred_check_branch
          %848 = sbr.rel (%p846) target = $region68
        $region67: #{tpu_custom_call.1} parent=11 // pred_region
          %s850 = ssub.s32 2048, 2048
          %851 = vsyncadd [#allocation18], %s850
          %s852 = sshll.u32 [#allocation17], 4
          %s853 = int_to_ptr.vmem [resolvable:$true] %s852
          %858 = dma.hbm_to_vmem [thread:$0]  %s29, 2048, %s853, [#allocation18], 128, 128, 8
        $region68: #{tpu_custom_call.1} parent=11 // pred_fallthru
          _
        // Predicated region
        $region69: #{tpu_custom_call.1} parent=11 // pred_check
          %p859 = pneg %p419
        $region70: #{tpu_custom_call.1} parent=11 // pred_check_branch
          %861 = sbr.rel (%p859) target = $region72
        $region71: #{tpu_custom_call.1} parent=11 // pred_region
          _
        $region72: #{tpu_custom_call.1} parent=11 // pred_fallthru
          _
        // Predicated region
        $region73: #{tpu_custom_call.1} parent=11 // pred_check
          %p862 = pneg %p440
        $region74: #{tpu_custom_call.1} parent=11 // pred_check_branch
          %864 = sbr.rel (%p862) target = $region76
        $region75: #{tpu_custom_call.1} parent=11 // pred_region
          _
        $region76: #{tpu_custom_call.1} parent=11 // pred_fallthru
          _
        // Predicated region
        $region77: #{tpu_custom_call.1} parent=11 // pred_check
          %p865 = pneg %p461
        $region78: #{tpu_custom_call.1} parent=11 // pred_check_branch
          %867 = sbr.rel (%p865) target = $region80
        $region79: #{tpu_custom_call.1} parent=11 // pred_region
          _
        $region80: #{tpu_custom_call.1} parent=11 // pred_fallthru
          _
        // Predicated region
        $region81: #{tpu_custom_call.1} parent=11 // pred_check
          %p868 = pneg %p482
        $region82: #{tpu_custom_call.1} parent=11 // pred_check_branch
          %870 = sbr.rel (%p868) target = $region84
        $region83: #{tpu_custom_call.1} parent=11 // pred_region
          %s872 = ssub.s32 2048, 2048
          %873 = vsyncadd [#allocation18], %s872
          %s874 = sshll.u32 [#allocation19], 4
          %s875 = int_to_ptr.vmem [resolvable:$true] %s874
          %880 = dma.hbm_to_vmem [thread:$0]  %s37, 2048, %s875, [#allocation18], 128, 128, 8
        $region84: #{tpu_custom_call.1} parent=11 // pred_fallthru
          _
        // Predicated region
        $region85: #{tpu_custom_call.1} parent=11 // pred_check
          %p881 = pneg %p503
        $region86: #{tpu_custom_call.1} parent=11 // pred_check_branch
          %883 = sbr.rel (%p881) target = $region88
        $region87: #{tpu_custom_call.1} parent=11 // pred_region
          _
        $region88: #{tpu_custom_call.1} parent=11 // pred_fallthru
          _
        // Predicated region
        $region89: #{tpu_custom_call.1} parent=11 // pred_check
          %p884 = pneg %p524
        $region90: #{tpu_custom_call.1} parent=11 // pred_check_branch
          %886 = sbr.rel (%p884) target = $region92
        $region91: #{tpu_custom_call.1} parent=11 // pred_region
          _
        $region92: #{tpu_custom_call.1} parent=11 // pred_fallthru
          _
        // Predicated region
        $region93: #{tpu_custom_call.1} parent=11 // pred_check
          %p887 = pneg %p545
        $region94: #{tpu_custom_call.1} parent=11 // pred_check_branch
          %889 = sbr.rel (%p887) target = $region96
        $region95: #{tpu_custom_call.1} parent=11 // pred_region
          _
        $region96: #{tpu_custom_call.1} parent=11 // pred_fallthru
          _
        // Predicated region
        $region97: #{tpu_custom_call.1} parent=11 // pred_check
          %p890 = pneg %p566
        $region98: #{tpu_custom_call.1} parent=11 // pred_check_branch
          %892 = sbr.rel (%p890) target = $region100
        $region99: #{tpu_custom_call.1} parent=11 // pred_region
          %s894 = ssub.s32 2048, 2048
          %895 = vsyncadd [#allocation21], %s894
          %s896 = sshll.u32 [#allocation20], 4
          %s897 = int_to_ptr.vmem [resolvable:$true] %s896
          %902 = dma.hbm_to_vmem [thread:$0]  %s45, 2048, %s897, [#allocation21], 128, 128, 8
        $region100: #{tpu_custom_call.1} parent=11 // pred_fallthru
          _
        // Predicated region
        $region101: #{tpu_custom_call.1} parent=11 // pred_check
          %p903 = pneg %p587
        $region102: #{tpu_custom_call.1} parent=11 // pred_check_branch
          %905 = sbr.rel (%p903) target = $region104
        $region103: #{tpu_custom_call.1} parent=11 // pred_region
          _
        $region104: #{tpu_custom_call.1} parent=11 // pred_fallthru
          _
        // Predicated region
        $region105: #{tpu_custom_call.1} parent=11 // pred_check
          %p906 = pneg %p608
        $region106: #{tpu_custom_call.1} parent=11 // pred_check_branch
          %908 = sbr.rel (%p906) target = $region108
        $region107: #{tpu_custom_call.1} parent=11 // pred_region
          %s910 = ssub.s32 4096, 4096
          %911 = vsyncadd [#allocation21], %s910
          %s912 = sshll.u32 [#allocation22], 4
          %s913 = int_to_ptr.vmem [resolvable:$true] %s912
          %918 = dma.hbm_to_vmem [thread:$0]  %s49, 4096, %s913, [#allocation21], 256, 256, 16
        $region108: #{tpu_custom_call.1} parent=11 // pred_fallthru
          _
        // Predicated region
        $region109: #{tpu_custom_call.1} parent=11 // pred_check
          %p919 = pneg %p629
        $region110: #{tpu_custom_call.1} parent=11 // pred_check_branch
          %921 = sbr.rel (%p919) target = $region112
        $region111: #{tpu_custom_call.1} parent=11 // pred_region
          %s923 = ssub.s32 4096, 4096
          %924 = vsyncadd [#allocation24], %s923
          %s925 = sshll.u32 [#allocation23], 4
          %s926 = int_to_ptr.vmem [resolvable:$true] %s925
          %931 = dma.hbm_to_vmem [thread:$0]  %s51, 4096, %s926, [#allocation24], 256, 256, 16
        $region112: #{tpu_custom_call.1} parent=11 // pred_fallthru
          _
        // Predicated region
        $region113: #{tpu_custom_call.1} parent=11 // pred_check
          %p932 = pneg %p650
        $region114: #{tpu_custom_call.1} parent=11 // pred_check_branch
          %934 = sbr.rel (%p932) target = $region116
        $region115: #{tpu_custom_call.1} parent=11 // pred_region
          %s936 = ssub.s32 4096, 4096
          %937 = vsyncadd [#allocation24], %s936
          %s938 = sshll.u32 [#allocation25], 4
          %s939 = int_to_ptr.vmem [resolvable:$true] %s938
          %944 = dma.hbm_to_vmem [thread:$0]  %s53, 4096, %s939, [#allocation24], 256, 256, 16
        $region116: #{tpu_custom_call.1} parent=11 // pred_fallthru
          _
        // Predicated region
        $region117: #{tpu_custom_call.1} parent=11 // pred_check
          %p945 = pneg %p671
        $region118: #{tpu_custom_call.1} parent=11 // pred_check_branch
          %947 = sbr.rel (%p945) target = $region120
        $region119: #{tpu_custom_call.1} parent=11 // pred_region
          _
        $region120: #{tpu_custom_call.1} parent=11 // pred_fallthru
          _
        // Predicated region
        $region121: #{tpu_custom_call.1} parent=11 // pred_check
          %p948 = pneg %p692
        $region122: #{tpu_custom_call.1} parent=11 // pred_check_branch
          %950 = sbr.rel (%p948) target = $region124
        $region123: #{tpu_custom_call.1} parent=11 // pred_region
          _
        $region124: #{tpu_custom_call.1} parent=11 // pred_fallthru
          _
      $region12: #{tpu_custom_call.1} parent=5 // pred_fallthru
        _
      %p951 = scmp.lt.s32.totalorder %s78, 2
      // Predicated region
      $region125: #{tpu_custom_call.1} parent=5 // pred_check
        %p952 = pneg %p951
      $region126: #{tpu_custom_call.1} parent=5 // pred_check_branch
        %954 = sbr.rel (%p952) target = $region128
      $region127: #{tpu_custom_call.1} parent=5 // pred_region
        // Predicated region
        $region129: #{tpu_custom_call.1} parent=127 // pred_check
          %p955 = pneg %p98
        $region130: #{tpu_custom_call.1} parent=127 // pred_check_branch
          %957 = sbr.rel (%p955) target = $region132
        $region131: #{tpu_custom_call.1} parent=127 // pred_region
          %s958 = sand.u32 %s88, 1
          %s959 = scalar_lea.sflag [#allocation3], %s958
          %s960 = sand.u32 %s88, 1
          %s961 = smul.addr %s960, 32
          %s962 = scalar_lea.vmem [#allocation2], %s961
          %s964 = ssub.s32 512, 512
          %965 = vsyncadd %s959, %s964
          %s966 = smul.addr %s78, 4
          %s967 = smul.addr %s966, 128
          %s968 = scalar_lea.hbm %s1, %s967
          %s969 = sshll.u32 %s962, 4
          %s970 = int_to_ptr.vmem [resolvable:$true] %s969
          %975 = dma.hbm_to_vmem [thread:$0]  %s968, 512, %s970, %s959, 256, 256, 16
        $region132: #{tpu_custom_call.1} parent=127 // pred_fallthru
          _
      $region128: #{tpu_custom_call.1} parent=5 // pred_fallthru
        _
      %p976 = scmp.le.s32.totalorder 1, %s78
      %p977 = scmp.lt.s32.totalorder %s78, 3
      %p978 = pnand %p976, %p977
      %p979 = pneg %p978
      // Predicated region
      $region133: #{tpu_custom_call.1} parent=5 // pred_check
        _
      $region134: #{tpu_custom_call.1} parent=5 // pred_check_branch
        %981 = sbr.rel (%p978) target = $region136
      $region135: #{tpu_custom_call.1} parent=5 // pred_region
        %s982 = ssub.s32 %s78, 1
        %s983 = sand.u32 %s91, 1
        %s984 = scalar_lea.sflag [#allocation3], %s983
        %s985 = sand.u32 %s91, 1
        %s986 = smul.addr %s985, 32
        %s987 = scalar_lea.vmem [#allocation2], %s986
        // Predicated region
        $region137: #{tpu_custom_call.1} parent=135 // pred_check
          %p988 = pneg %p104
        $region138: #{tpu_custom_call.1} parent=135 // pred_check_branch
          %990 = sbr.rel (%p988) target = $region140
        $region139: #{tpu_custom_call.1} parent=135 // pred_region
          %991 = dma.done %s984, 512
        $region140: #{tpu_custom_call.1} parent=135 // pred_fallthru
          _
        // Predicated region
        $region141: #{tpu_custom_call.1} parent=135 // pred_check
          %p992 = pneg %p125
        $region142: #{tpu_custom_call.1} parent=135 // pred_check_branch
          %994 = sbr.rel (%p992) target = $region144
        $region143: #{tpu_custom_call.1} parent=135 // pred_region
          %995 = dma.done [#allocation6], 1024
        $region144: #{tpu_custom_call.1} parent=135 // pred_fallthru
          _
        // Predicated region
        $region145: #{tpu_custom_call.1} parent=135 // pred_check
          %p996 = pneg %p146
        $region146: #{tpu_custom_call.1} parent=135 // pred_check_branch
          %998 = sbr.rel (%p996) target = $region148
        $region147: #{tpu_custom_call.1} parent=135 // pred_region
          %999 = dma.done [#allocation6], 4096
        $region148: #{tpu_custom_call.1} parent=135 // pred_fallthru
          _
        // Predicated region
        $region149: #{tpu_custom_call.1} parent=135 // pred_check
          %p1000 = pneg %p167
        $region150: #{tpu_custom_call.1} parent=135 // pred_check_branch
          %1002 = sbr.rel (%p1000) target = $region152
        $region151: #{tpu_custom_call.1} parent=135 // pred_region
          %1003 = dma.done [#allocation9], 4096
        $region152: #{tpu_custom_call.1} parent=135 // pred_fallthru
          _
        // Predicated region
        $region153: #{tpu_custom_call.1} parent=135 // pred_check
          %p1004 = pneg %p188
        $region154: #{tpu_custom_call.1} parent=135 // pred_check_branch
          %1006 = sbr.rel (%p1004) target = $region156
        $region155: #{tpu_custom_call.1} parent=135 // pred_region
          %1007 = dma.done [#allocation9], 16
        $region156: #{tpu_custom_call.1} parent=135 // pred_fallthru
          _
        // Predicated region
        $region157: #{tpu_custom_call.1} parent=135 // pred_check
          %p1008 = pneg %p209
        $region158: #{tpu_custom_call.1} parent=135 // pred_check_branch
          %1010 = sbr.rel (%p1008) target = $region160
        $region159: #{tpu_custom_call.1} parent=135 // pred_region
          %1011 = dma.done [#allocation12], 16
        $region160: #{tpu_custom_call.1} parent=135 // pred_fallthru
          _
        // Predicated region
        $region161: #{tpu_custom_call.1} parent=135 // pred_check
          %p1012 = pneg %p230
        $region162: #{tpu_custom_call.1} parent=135 // pred_check_branch
          %1014 = sbr.rel (%p1012) target = $region164
        $region163: #{tpu_custom_call.1} parent=135 // pred_region
          %1015 = dma.done [#allocation12], 16
        $region164: #{tpu_custom_call.1} parent=135 // pred_fallthru
          _
        // Predicated region
        $region165: #{tpu_custom_call.1} parent=135 // pred_check
          %p1016 = pneg %p272
        $region166: #{tpu_custom_call.1} parent=135 // pred_check_branch
          %1018 = sbr.rel (%p1016) target = $region168
        $region167: #{tpu_custom_call.1} parent=135 // pred_region
          %1019 = dma.done [#allocation15], 6144
        $region168: #{tpu_custom_call.1} parent=135 // pred_fallthru
          _
        // Predicated region
        $region169: #{tpu_custom_call.1} parent=135 // pred_check
          %p1020 = pneg %p335
        $region170: #{tpu_custom_call.1} parent=135 // pred_check_branch
          %1022 = sbr.rel (%p1020) target = $region172
        $region171: #{tpu_custom_call.1} parent=135 // pred_region
          %1023 = dma.done [#allocation15], 6144
        $region172: #{tpu_custom_call.1} parent=135 // pred_fallthru
          _
        // Predicated region
        $region173: #{tpu_custom_call.1} parent=135 // pred_check
          %p1024 = pneg %p398
        $region174: #{tpu_custom_call.1} parent=135 // pred_check_branch
          %1026 = sbr.rel (%p1024) target = $region176
        $region175: #{tpu_custom_call.1} parent=135 // pred_region
          %1027 = dma.done [#allocation18], 2048
        $region176: #{tpu_custom_call.1} parent=135 // pred_fallthru
          _
        // Predicated region
        $region177: #{tpu_custom_call.1} parent=135 // pred_check
          %p1028 = pneg %p482
        $region178: #{tpu_custom_call.1} parent=135 // pred_check_branch
          %1030 = sbr.rel (%p1028) target = $region180
        $region179: #{tpu_custom_call.1} parent=135 // pred_region
          %1031 = dma.done [#allocation18], 2048
        $region180: #{tpu_custom_call.1} parent=135 // pred_fallthru
          _
        // Predicated region
        $region181: #{tpu_custom_call.1} parent=135 // pred_check
          %p1032 = pneg %p566
        $region182: #{tpu_custom_call.1} parent=135 // pred_check_branch
          %1034 = sbr.rel (%p1032) target = $region184
        $region183: #{tpu_custom_call.1} parent=135 // pred_region
          %1035 = dma.done [#allocation21], 2048
        $region184: #{tpu_custom_call.1} parent=135 // pred_fallthru
          _
        // Predicated region
        $region185: #{tpu_custom_call.1} parent=135 // pred_check
          %p1036 = pneg %p608
        $region186: #{tpu_custom_call.1} parent=135 // pred_check_branch
          %1038 = sbr.rel (%p1036) target = $region188
        $region187: #{tpu_custom_call.1} parent=135 // pred_region
          %1039 = dma.done [#allocation21], 4096
        $region188: #{tpu_custom_call.1} parent=135 // pred_fallthru
          _
        // Predicated region
        $region189: #{tpu_custom_call.1} parent=135 // pred_check
          %p1040 = pneg %p629
        $region190: #{tpu_custom_call.1} parent=135 // pred_check_branch
          %1042 = sbr.rel (%p1040) target = $region192
        $region191: #{tpu_custom_call.1} parent=135 // pred_region
          %1043 = dma.done [#allocation24], 4096
        $region192: #{tpu_custom_call.1} parent=135 // pred_fallthru
          _
        // Predicated region
        $region193: #{tpu_custom_call.1} parent=135 // pred_check
          %p1044 = pneg %p650
        $region194: #{tpu_custom_call.1} parent=135 // pred_check_branch
          %1046 = sbr.rel (%p1044) target = $region196
        $region195: #{tpu_custom_call.1} parent=135 // pred_region
          %1047 = dma.done [#allocation24], 4096
        $region196: #{tpu_custom_call.1} parent=135 // pred_fallthru
          _
        %s1048 = sand.u32 %s91, 1
        %s1049 = scalar_lea.sflag [#allocation3], %s1048
        %s1050 = sand.u32 %s91, 1
        %s1051 = smul.addr %s1050, 32
        %s1052 = scalar_lea.vmem [#allocation2], %s1051
        %p1053 = pneg %p104
        %p1054 = pneg %p101
        %p1055 = pneg %p125
        %p1056 = pneg %p122
        %p1057 = pneg %p146
        %p1058 = pneg %p143
        %p1059 = pneg %p167
        %p1060 = pneg %p164
        %p1061 = pneg %p188
        %p1062 = pneg %p185
        %p1063 = pneg %p209
        %p1064 = pneg %p206
        %p1065 = pneg %p230
        %p1066 = pneg %p227
        %p1067 = pneg %p251
        %p1068 = pneg %p248
        %p1069 = pneg %p272
        %p1070 = pneg %p269
        %p1071 = pneg %p293
        %p1072 = pneg %p290
        %p1073 = pneg %p314
        %p1074 = pneg %p311
        %p1075 = pneg %p335
        %p1076 = pneg %p332
        %p1077 = pneg %p356
        %p1078 = pneg %p353
        %p1079 = pneg %p377
        %p1080 = pneg %p374
        %p1081 = pneg %p398
        %p1082 = pneg %p395
        %p1083 = pneg %p419
        %p1084 = pneg %p416
        %p1085 = pneg %p440
        %p1086 = pneg %p437
        %p1087 = pneg %p461
        %p1088 = pneg %p458
        %p1089 = pneg %p482
        %p1090 = pneg %p479
        %p1091 = pneg %p503
        %p1092 = pneg %p500
        %p1093 = pneg %p524
        %p1094 = pneg %p521
        %p1095 = pneg %p545
        %p1096 = pneg %p542
        %p1097 = pneg %p566
        %p1098 = pneg %p563
        %p1099 = pneg %p587
        %p1100 = pneg %p584
        %p1101 = pneg %p608
        %p1102 = pneg %p605
        %p1103 = pneg %p629
        %p1104 = pneg %p626
        %p1105 = pneg %p650
        %p1106 = pneg %p647
        %p1107 = pneg %p671
        %p1108 = pneg %p668
        %p1109 = pneg %p692
        %p1110 = pneg %p689
        %p1111 = pneg %p718
        %p1112 = pneg %p715
        %s1113 = sand.u32 %s705, 1
        %s1114 = scalar_lea.sflag [#allocation4], %s1113
        %s1115 = sand.u32 %s705, 1
        %s1116 = smul.addr %s1115, 32
        %s1117 = scalar_lea.vmem [#allocation26], %s1116
        %v1118 = vld [vmem:[%s987] sm:$0xff]
        %v1119 = vld [vmem:[%s987 + $0x8] sm:$0xff]
        %v1120 = vld [vmem:[%s987 + $0x10] sm:$0xff]
        %v1121 = vld [vmem:[%s987 + $0x18] sm:$0xff]
        %v1122 = vld [vmem:[#allocation7] sm:$0xff]
        %v1123 = vld [vmem:[#allocation7 + $0x8] sm:$0xff]
        %v1124 = vld [vmem:[#allocation7 + $0x10] sm:$0xff]
        %v1125 = vld [vmem:[#allocation7 + $0x18] sm:$0xff]
        %v1126 = vld [vmem:[#allocation7 + $0x20] sm:$0xff]
        %v1127 = vld [vmem:[#allocation7 + $0x28] sm:$0xff]
        %v1128 = vld [vmem:[#allocation7 + $0x30] sm:$0xff]
        %v1129 = vld [vmem:[#allocation7 + $0x38] sm:$0xff]
        %v1130 = vld [vmem:[#allocation7 + $0x40] sm:$0xff]
        %v1131 = vld [vmem:[#allocation7 + $0x48] sm:$0xff]
        %v1132 = vld [vmem:[#allocation7 + $0x50] sm:$0xff]
        %v1133 = vld [vmem:[#allocation7 + $0x58] sm:$0xff]
        %v1134 = vld [vmem:[#allocation7 + $0x60] sm:$0xff]
        %v1135 = vld [vmem:[#allocation7 + $0x68] sm:$0xff]
        %v1136 = vld [vmem:[#allocation7 + $0x70] sm:$0xff]
        %v1137 = vld [vmem:[#allocation7 + $0x78] sm:$0xff]
        %v1138 = vld [vmem:[#allocation7 + $0x80] sm:$0xff]
        %v1139 = vld [vmem:[#allocation7 + $0x88] sm:$0xff]
        %v1140 = vld [vmem:[#allocation7 + $0x90] sm:$0xff]
        %v1141 = vld [vmem:[#allocation7 + $0x98] sm:$0xff]
        %v1142 = vld [vmem:[#allocation7 + $0xa0] sm:$0xff]
        %v1143 = vld [vmem:[#allocation7 + $0xa8] sm:$0xff]
        %v1144 = vld [vmem:[#allocation7 + $0xb0] sm:$0xff]
        %v1145 = vld [vmem:[#allocation7 + $0xb8] sm:$0xff]
        %v1146 = vld [vmem:[#allocation7 + $0xc0] sm:$0xff]
        %v1147 = vld [vmem:[#allocation7 + $0xc8] sm:$0xff]
        %v1148 = vld [vmem:[#allocation7 + $0xd0] sm:$0xff]
        %v1149 = vld [vmem:[#allocation7 + $0xd8] sm:$0xff]
        %v1150 = vld [vmem:[#allocation7 + $0xe0] sm:$0xff]
        %v1151 = vld [vmem:[#allocation7 + $0xe8] sm:$0xff]
        %v1152 = vld [vmem:[#allocation7 + $0xf0] sm:$0xff]
        %v1153 = vld [vmem:[#allocation7 + $0xf8] sm:$0xff]
        %1154 = vmatprep.subr.mxu0 0.0
        %1155 = vmatpush1.msra.mxu0 %v1137
        %1156 = vmatprep.subr.mxu0 0.0
        %1157 = vmatpush1.msra.mxu0 %v1136
        %1158 = vmatprep.subr.mxu0 0.0
        %1159 = vmatpush1.msra.mxu0 %v1135
        %1160 = vmatprep.subr.mxu0 0.0
        %1161 = vmatpush1.msra.mxu0 %v1134
        %1162 = vmatprep.subr.mxu0 0.0
        %1163 = vmatpush1.msra.mxu0 %v1133
        %1164 = vmatprep.subr.mxu0 0.0
        %1165 = vmatpush1.msra.mxu0 %v1132
        %1166 = vmatprep.subr.mxu0 0.0
        %1167 = vmatpush1.msra.mxu0 %v1131
        %1168 = vmatprep.subr.mxu0 0.0
        %1169 = vmatpush1.msra.mxu0 %v1130
        %1170 = vmatprep.subr.mxu0 0.0
        %1171 = vmatpush1.msra.mxu0 %v1129
        %1172 = vmatprep.subr.mxu0 0.0
        %1173 = vmatpush1.msra.mxu0 %v1128
        %1174 = vmatprep.subr.mxu0 0.0
        %1175 = vmatpush1.msra.mxu0 %v1127
        %1176 = vmatprep.subr.mxu0 0.0
        %1177 = vmatpush1.msra.mxu0 %v1126
        %1178 = vmatprep.subr.mxu0 0.0
        %1179 = vmatpush1.msra.mxu0 %v1125
        %1180 = vmatprep.subr.mxu0 0.0
        %1181 = vmatpush1.msra.mxu0 %v1124
        %1182 = vmatprep.subr.mxu0 0.0
        %1183 = vmatpush1.msra.mxu0 %v1123
        %1184 = vmatprep.subr.mxu0 0.0
        %1185 = vmatpush1.msra.mxu0 %v1122
        %1186 = vmatprep.subr.mxu0 0.0
        %1187 = vmatpush2.msra.mxu0 %v1153
        %1188 = vmatprep.subr.mxu0 0.0
        %1189 = vmatpush2.msra.mxu0 %v1152
        %1190 = vmatprep.subr.mxu0 0.0
        %1191 = vmatpush2.msra.mxu0 %v1151
        %1192 = vmatprep.subr.mxu0 0.0
        %1193 = vmatpush2.msra.mxu0 %v1150
        %1194 = vmatprep.subr.mxu0 0.0
        %1195 = vmatpush2.msra.mxu0 %v1149
        %1196 = vmatprep.subr.mxu0 0.0
        %1197 = vmatpush2.msra.mxu0 %v1148
        %1198 = vmatprep.subr.mxu0 0.0
        %1199 = vmatpush2.msra.mxu0 %v1147
        %1200 = vmatprep.subr.mxu0 0.0
        %1201 = vmatpush2.msra.mxu0 %v1146
        %1202 = vmatprep.subr.mxu0 0.0
        %1203 = vmatpush2.msra.mxu0 %v1145
        %1204 = vmatprep.subr.mxu0 0.0
        %1205 = vmatpush2.msra.mxu0 %v1144
        %1206 = vmatprep.subr.mxu0 0.0
        %1207 = vmatpush2.msra.mxu0 %v1143
        %1208 = vmatprep.subr.mxu0 0.0
        %1209 = vmatpush2.msra.mxu0 %v1142
        %1210 = vmatprep.subr.mxu0 0.0
        %1211 = vmatpush2.msra.mxu0 %v1141
        %1212 = vmatprep.subr.mxu0 0.0
        %1213 = vmatpush2.msra.mxu0 %v1140
        %1214 = vmatprep.subr.mxu0 0.0
        %1215 = vmatpush2.msra.mxu0 %v1139
        %1216 = vmatprep.subr.mxu0 0.0
        %1217 = vmatpush2.msra.mxu0 %v1138
        %1218 = vmatprep.mubr.f32.mxu0 %v1119
        %1219 = vmatmul.mubr.f32.gmra.mxu0 %v1118
        %v1220 = vpop.f32.mrf.mxu0
        %v1221 = vadd.f32 0.0, %v1220
        %v1222 = vpop.f32.mrf.mxu0
        %1223 = vmatprep.mubr.f32.mxu0 %v1121
        %1224 = vmatmul.mubr.f32.gmra.mxu0 %v1120
        %v1225 = vpop.f32.mrf.mxu0
        %v1226 = vadd.f32 0.0, %v1225
        %v1227 = vpop.f32.mrf.mxu0
        %1228 = vdwg.mxu0
        %v1229 = vld [vmem:[#allocation10] sm:$0x1]
        %v1231 = vlaneseq
        %v1232 = vshrl.u32 %v1231, 7
        %v1233 = vsub.s32 0, %v1232
        %v1234 = vrot.slane %v1229, %v1233
        %v1236 = vmul.f32 %v1221, %v1234
        %v1237 = vmul.f32 %v1226, %v1234
        %v1238 = vld [vmem:[#allocation11] sm:$0x1]
        %v1240 = vlaneseq
        %v1241 = vshrl.u32 %v1240, 7
        %v1242 = vsub.s32 0, %v1241
        %v1243 = vrot.slane %v1238, %v1242
        %v1245 = vadd.f32 %v1236, %v1243
        %v1246 = vadd.f32 %v1237, %v1243
        %v1247 = vxor.u32 %v1245, 2147483648
        %v1248 = vxor.u32 %v1246, 2147483648
        %v1249 = vmul.f32 %v1247, 1.442695
        %v1250 = vpow.pop %v1249
        %v1251 = vmul.f32 %v1248, 1.442695
        %v1252 = vpow.pop %v1251
        %v1253 = vadd.f32 %v1250, 1.0
        %v1254 = vadd.f32 %v1252, 1.0
        %v1255 = vrcp.pop %v1253
        %v1256 = vmul.f32 1.0, %v1255
        %v1257 = vrcp.pop %v1254
        %v1258 = vmul.f32 1.0, %v1257
        %v1259 = vmul.f32 %v1245, %v1256
        %v1260 = vmul.f32 %v1246, %v1258
        %v1261 = vld [vmem:[#allocation8] sm:$0xff]
        %v1262 = vld [vmem:[#allocation8 + $0x8] sm:$0xff]
        %v1263 = vld [vmem:[#allocation8 + $0x10] sm:$0xff]
        %v1264 = vld [vmem:[#allocation8 + $0x18] sm:$0xff]
        %v1265 = vld [vmem:[#allocation8 + $0x20] sm:$0xff]
        %v1266 = vld [vmem:[#allocation8 + $0x28] sm:$0xff]
        %v1267 = vld [vmem:[#allocation8 + $0x30] sm:$0xff]
        %v1268 = vld [vmem:[#allocation8 + $0x38] sm:$0xff]
        %v1269 = vld [vmem:[#allocation8 + $0x40] sm:$0xff]
        %v1270 = vld [vmem:[#allocation8 + $0x48] sm:$0xff]
        %v1271 = vld [vmem:[#allocation8 + $0x50] sm:$0xff]
        %v1272 = vld [vmem:[#allocation8 + $0x58] sm:$0xff]
        %v1273 = vld [vmem:[#allocation8 + $0x60] sm:$0xff]
        %v1274 = vld [vmem:[#allocation8 + $0x68] sm:$0xff]
        %v1275 = vld [vmem:[#allocation8 + $0x70] sm:$0xff]
        %v1276 = vld [vmem:[#allocation8 + $0x78] sm:$0xff]
        %v1277 = vld [vmem:[#allocation8 + $0x80] sm:$0xff]
        %v1278 = vld [vmem:[#allocation8 + $0x88] sm:$0xff]
        %v1279 = vld [vmem:[#allocation8 + $0x90] sm:$0xff]
        %v1280 = vld [vmem:[#allocation8 + $0x98] sm:$0xff]
        %v1281 = vld [vmem:[#allocation8 + $0xa0] sm:$0xff]
        %v1282 = vld [vmem:[#allocation8 + $0xa8] sm:$0xff]
        %v1283 = vld [vmem:[#allocation8 + $0xb0] sm:$0xff]
        %v1284 = vld [vmem:[#allocation8 + $0xb8] sm:$0xff]
        %v1285 = vld [vmem:[#allocation8 + $0xc0] sm:$0xff]
        %v1286 = vld [vmem:[#allocation8 + $0xc8] sm:$0xff]
        %v1287 = vld [vmem:[#allocation8 + $0xd0] sm:$0xff]
        %v1288 = vld [vmem:[#allocation8 + $0xd8] sm:$0xff]
        %v1289 = vld [vmem:[#allocation8 + $0xe0] sm:$0xff]
        %v1290 = vld [vmem:[#allocation8 + $0xe8] sm:$0xff]
        %v1291 = vld [vmem:[#allocation8 + $0xf0] sm:$0xff]
        %v1292 = vld [vmem:[#allocation8 + $0xf8] sm:$0xff]
        %1293 = vmatprep.subr.mxu0 0.0
        %1294 = vmatpush1.msra.mxu0 %v1276
        %1295 = vmatprep.subr.mxu0 0.0
        %1296 = vmatpush1.msra.mxu0 %v1275
        %1297 = vmatprep.subr.mxu0 0.0
        %1298 = vmatpush1.msra.mxu0 %v1274
        %1299 = vmatprep.subr.mxu0 0.0
        %1300 = vmatpush1.msra.mxu0 %v1273
        %1301 = vmatprep.subr.mxu0 0.0
        %1302 = vmatpush1.msra.mxu0 %v1272
        %1303 = vmatprep.subr.mxu0 0.0
        %1304 = vmatpush1.msra.mxu0 %v1271
        %1305 = vmatprep.subr.mxu0 0.0
        %1306 = vmatpush1.msra.mxu0 %v1270
        %1307 = vmatprep.subr.mxu0 0.0
        %1308 = vmatpush1.msra.mxu0 %v1269
        %1309 = vmatprep.subr.mxu0 0.0
        %1310 = vmatpush1.msra.mxu0 %v1268
        %1311 = vmatprep.subr.mxu0 0.0
        %1312 = vmatpush1.msra.mxu0 %v1267
        %1313 = vmatprep.subr.mxu0 0.0
        %1314 = vmatpush1.msra.mxu0 %v1266
        %1315 = vmatprep.subr.mxu0 0.0
        %1316 = vmatpush1.msra.mxu0 %v1265
        %1317 = vmatprep.subr.mxu0 0.0
        %1318 = vmatpush1.msra.mxu0 %v1264
        %1319 = vmatprep.subr.mxu0 0.0
        %1320 = vmatpush1.msra.mxu0 %v1263
        %1321 = vmatprep.subr.mxu0 0.0
        %1322 = vmatpush1.msra.mxu0 %v1262
        %1323 = vmatprep.subr.mxu0 0.0
        %1324 = vmatpush1.msra.mxu0 %v1261
        %1325 = vmatprep.subr.mxu0 0.0
        %1326 = vmatpush2.msra.mxu0 %v1292
        %1327 = vmatprep.subr.mxu0 0.0
        %1328 = vmatpush2.msra.mxu0 %v1291
        %1329 = vmatprep.subr.mxu0 0.0
        %1330 = vmatpush2.msra.mxu0 %v1290
        %1331 = vmatprep.subr.mxu0 0.0
        %1332 = vmatpush2.msra.mxu0 %v1289
        %1333 = vmatprep.subr.mxu0 0.0
        %1334 = vmatpush2.msra.mxu0 %v1288
        %1335 = vmatprep.subr.mxu0 0.0
        %1336 = vmatpush2.msra.mxu0 %v1287
        %1337 = vmatprep.subr.mxu0 0.0
        %1338 = vmatpush2.msra.mxu0 %v1286
        %1339 = vmatprep.subr.mxu0 0.0
        %1340 = vmatpush2.msra.mxu0 %v1285
        %1341 = vmatprep.subr.mxu0 0.0
        %1342 = vmatpush2.msra.mxu0 %v1284
        %1343 = vmatprep.subr.mxu0 0.0
        %1344 = vmatpush2.msra.mxu0 %v1283
        %1345 = vmatprep.subr.mxu0 0.0
        %1346 = vmatpush2.msra.mxu0 %v1282
        %1347 = vmatprep.subr.mxu0 0.0
        %1348 = vmatpush2.msra.mxu0 %v1281
        %1349 = vmatprep.subr.mxu0 0.0
        %1350 = vmatpush2.msra.mxu0 %v1280
        %1351 = vmatprep.subr.mxu0 0.0
        %1352 = vmatpush2.msra.mxu0 %v1279
        %1353 = vmatprep.subr.mxu0 0.0
        %1354 = vmatpush2.msra.mxu0 %v1278
        %1355 = vmatprep.subr.mxu0 0.0
        %1356 = vmatpush2.msra.mxu0 %v1277
        %1357 = vmatprep.mubr.f32.mxu0 %v1119
        %1358 = vmatmul.mubr.f32.gmra.mxu0 %v1118
        %v1359 = vpop.f32.mrf.mxu0
        %v1360 = vadd.f32 0.0, %v1359
        %v1361 = vpop.f32.mrf.mxu0
        %1362 = vmatprep.mubr.f32.mxu0 %v1121
        %1363 = vmatmul.mubr.f32.gmra.mxu0 %v1120
        %v1364 = vpop.f32.mrf.mxu0
        %v1365 = vadd.f32 0.0, %v1364
        %v1366 = vpop.f32.mrf.mxu0
        %1367 = vdwg.mxu0
        %v1368 = vld [vmem:[#allocation13] sm:$0x1]
        %v1370 = vlaneseq
        %v1371 = vshrl.u32 %v1370, 7
        %v1372 = vsub.s32 0, %v1371
        %v1373 = vrot.slane %v1368, %v1372
        %v1375 = vmul.f32 %v1360, %v1373
        %v1376 = vmul.f32 %v1365, %v1373
        %v1377 = vld [vmem:[%s15] sm:$0x1]
        %v1379 = vlaneseq
        %v1380 = vshrl.u32 %v1379, 7
        %v1381 = vsub.s32 0, %v1380
        %v1382 = vrot.slane %v1377, %v1381
        %v1384 = vadd.f32 %v1375, %v1382
        %v1385 = vadd.f32 %v1376, %v1382
        %v1386 = vxor.u32 %v1384, 2147483648
        %v1387 = vxor.u32 %v1385, 2147483648
        %v1388 = vmul.f32 %v1386, 1.442695
        %v1389 = vpow.pop %v1388
        %v1390 = vmul.f32 %v1387, 1.442695
        %v1391 = vpow.pop %v1390
        %v1392 = vadd.f32 %v1389, 1.0
        %v1393 = vadd.f32 %v1391, 1.0
        %v1394 = vrcp.pop %v1392
        %v1395 = vmul.f32 1.0, %v1394
        %v1396 = vrcp.pop %v1393
        %v1397 = vmul.f32 1.0, %v1396
        %v1398 = vmul.f32 %v1384, %v1395
        %v1399 = vmul.f32 %v1385, %v1397
        %s1400 = scalar_lea.vmem [#allocation14], 128
        %v1401 = vld [vmem:[%s1400] sm:$0xff]
        %v1402 = vld [vmem:[%s1400 + $0x8] sm:$0xff]
        %v1403 = vld [vmem:[%s1400 + $0x10] sm:$0xff]
        %v1404 = vld [vmem:[%s1400 + $0x18] sm:$0xff]
        %v1405 = vld [vmem:[%s1400 + $0x20] sm:$0xff]
        %v1406 = vld [vmem:[%s1400 + $0x28] sm:$0xff]
        %v1407 = vld [vmem:[%s1400 + $0x30] sm:$0xff]
        %v1408 = vld [vmem:[%s1400 + $0x38] sm:$0xff]
        %v1409 = vld [vmem:[%s1400 + $0x40] sm:$0xff]
        %v1410 = vld [vmem:[%s1400 + $0x48] sm:$0xff]
        %v1411 = vld [vmem:[%s1400 + $0x50] sm:$0xff]
        %v1412 = vld [vmem:[%s1400 + $0x58] sm:$0xff]
        %v1413 = vld [vmem:[%s1400 + $0x60] sm:$0xff]
        %v1414 = vld [vmem:[%s1400 + $0x68] sm:$0xff]
        %v1415 = vld [vmem:[%s1400 + $0x70] sm:$0xff]
        %v1416 = vld [vmem:[%s1400 + $0x78] sm:$0xff]
        %v1417 = vld [vmem:[#allocation14] sm:$0xff]
        %v1418 = vld [vmem:[#allocation14 + $0x8] sm:$0xff]
        %v1419 = vld [vmem:[#allocation14 + $0x10] sm:$0xff]
        %v1420 = vld [vmem:[#allocation14 + $0x18] sm:$0xff]
        %v1421 = vld [vmem:[#allocation14 + $0x20] sm:$0xff]
        %v1422 = vld [vmem:[#allocation14 + $0x28] sm:$0xff]
        %v1423 = vld [vmem:[#allocation14 + $0x30] sm:$0xff]
        %v1424 = vld [vmem:[#allocation14 + $0x38] sm:$0xff]
        %v1425 = vld [vmem:[#allocation14 + $0x40] sm:$0xff]
        %v1426 = vld [vmem:[#allocation14 + $0x48] sm:$0xff]
        %v1427 = vld [vmem:[#allocation14 + $0x50] sm:$0xff]
        %v1428 = vld [vmem:[#allocation14 + $0x58] sm:$0xff]
        %v1429 = vld [vmem:[#allocation14 + $0x60] sm:$0xff]
        %v1430 = vld [vmem:[#allocation14 + $0x68] sm:$0xff]
        %v1431 = vld [vmem:[#allocation14 + $0x70] sm:$0xff]
        %v1432 = vld [vmem:[#allocation14 + $0x78] sm:$0xff]
        %1433 = vmatprep.subr.mxu0 0.0
        %1434 = vmatpush1.msra.mxu0 %v1432
        %1435 = vmatprep.subr.mxu0 0.0
        %1436 = vmatpush1.msra.mxu0 %v1431
        %1437 = vmatprep.subr.mxu0 0.0
        %1438 = vmatpush1.msra.mxu0 %v1430
        %1439 = vmatprep.subr.mxu0 0.0
        %1440 = vmatpush1.msra.mxu0 %v1429
        %1441 = vmatprep.subr.mxu0 0.0
        %1442 = vmatpush1.msra.mxu0 %v1428
        %1443 = vmatprep.subr.mxu0 0.0
        %1444 = vmatpush1.msra.mxu0 %v1427
        %1445 = vmatprep.subr.mxu0 0.0
        %1446 = vmatpush1.msra.mxu0 %v1426
        %1447 = vmatprep.subr.mxu0 0.0
        %1448 = vmatpush1.msra.mxu0 %v1425
        %1449 = vmatprep.subr.mxu0 0.0
        %1450 = vmatpush1.msra.mxu0 %v1424
        %1451 = vmatprep.subr.mxu0 0.0
        %1452 = vmatpush1.msra.mxu0 %v1423
        %1453 = vmatprep.subr.mxu0 0.0
        %1454 = vmatpush1.msra.mxu0 %v1422
        %1455 = vmatprep.subr.mxu0 0.0
        %1456 = vmatpush1.msra.mxu0 %v1421
        %1457 = vmatprep.subr.mxu0 0.0
        %1458 = vmatpush1.msra.mxu0 %v1420
        %1459 = vmatprep.subr.mxu0 0.0
        %1460 = vmatpush1.msra.mxu0 %v1419
        %1461 = vmatprep.subr.mxu0 0.0
        %1462 = vmatpush1.msra.mxu0 %v1418
        %1463 = vmatprep.subr.mxu0 0.0
        %1464 = vmatpush1.msra.mxu0 %v1417
        %1465 = vmatprep.subr.mxu0 0.0
        %1466 = vmatpush2.msra.mxu0 0.0
        %1467 = vmatprep.subr.mxu0 0.0
        %1468 = vmatpush2.msra.mxu0 0.0
        %1469 = vmatprep.subr.mxu0 0.0
        %1470 = vmatpush2.msra.mxu0 0.0
        %1471 = vmatprep.subr.mxu0 0.0
        %1472 = vmatpush2.msra.mxu0 0.0
        %1473 = vmatprep.subr.mxu0 0.0
        %1474 = vmatpush2.msra.mxu0 0.0
        %1475 = vmatprep.subr.mxu0 0.0
        %1476 = vmatpush2.msra.mxu0 0.0
        %1477 = vmatprep.subr.mxu0 0.0
        %1478 = vmatpush2.msra.mxu0 0.0
        %1479 = vmatprep.subr.mxu0 0.0
        %1480 = vmatpush2.msra.mxu0 0.0
        %1481 = vmatprep.subr.mxu0 0.0
        %1482 = vmatpush2.msra.mxu0 0.0
        %1483 = vmatprep.subr.mxu0 0.0
        %1484 = vmatpush2.msra.mxu0 0.0
        %1485 = vmatprep.subr.mxu0 0.0
        %1486 = vmatpush2.msra.mxu0 0.0
        %1487 = vmatprep.subr.mxu0 0.0
        %1488 = vmatpush2.msra.mxu0 0.0
        %1489 = vmatprep.subr.mxu0 0.0
        %1490 = vmatpush2.msra.mxu0 0.0
        %1491 = vmatprep.subr.mxu0 0.0
        %1492 = vmatpush2.msra.mxu0 0.0
        %1493 = vmatprep.subr.mxu0 0.0
        %1494 = vmatpush2.msra.mxu0 0.0
        %1495 = vmatprep.subr.mxu0 0.0
        %1496 = vmatpush2.msra.mxu0 0.0
        %1497 = vmatprep.mubr.f32.mxu0 0.0
        %1498 = vmatmul.mubr.f32.gmra.mxu0 %v1398
        %v1499 = vpop.f32.mrf.mxu0
        %v1500 = vadd.f32 0.0, %v1499
        %v1501 = vpop.f32.mrf.mxu0
        %1502 = vmatprep.mubr.f32.mxu0 0.0
        %1503 = vmatmul.mubr.f32.gmra.mxu0 %v1399
        %v1504 = vpop.f32.mrf.mxu0
        %v1505 = vadd.f32 0.0, %v1504
        %v1506 = vpop.f32.mrf.mxu0
        %1507 = vdwg.mxu0
        %s1508 = scalar_lea.vmem [#allocation5], 16
        %v1509 = vld [vmem:[%s1508] sm:$0xff]
        %v1510 = vld [vmem:[%s1508 + $0x8] sm:$0xff]
        %vm1511 = vcmask 130048
        %v1513 = vsel %vm1511, %v1509, 0
        %v1516 = vsel %vm1511, %v1510, 0
        %1518 = vmatprep.subr.mxu0 0.0
        %1519 = vmatpush1.msra.mxu0 0.0
        %1520 = vmatprep.subr.mxu0 0.0
        %1521 = vmatpush1.msra.mxu0 0.0
        %1522 = vmatprep.subr.mxu0 0.0
        %1523 = vmatpush1.msra.mxu0 0.0
        %1524 = vmatprep.subr.mxu0 0.0
        %1525 = vmatpush1.msra.mxu0 0.0
        %1526 = vmatprep.subr.mxu0 0.0
        %1527 = vmatpush1.msra.mxu0 0.0
        %1528 = vmatprep.subr.mxu0 0.0
        %1529 = vmatpush1.msra.mxu0 0.0
        %1530 = vmatprep.subr.mxu0 0.0
        %1531 = vmatpush1.msra.mxu0 0.0
        %1532 = vmatprep.subr.mxu0 0.0
        %1533 = vmatpush1.msra.mxu0 0.0
        %1534 = vmatprep.subr.mxu0 0.0
        %1535 = vmatpush1.msra.mxu0 0.0
        %1536 = vmatprep.subr.mxu0 0.0
        %1537 = vmatpush1.msra.mxu0 0.0
        %1538 = vmatprep.subr.mxu0 0.0
        %1539 = vmatpush1.msra.mxu0 0.0
        %1540 = vmatprep.subr.mxu0 0.0
        %1541 = vmatpush1.msra.mxu0 0.0
        %1542 = vmatprep.subr.mxu0 0.0
        %1543 = vmatpush1.msra.mxu0 0.0
        %1544 = vmatprep.subr.mxu0 0.0
        %1545 = vmatpush1.msra.mxu0 0.0
        %1546 = vmatprep.subr.mxu0 0.0
        %1547 = vmatpush1.msra.mxu0 %v1505
        %1548 = vmatprep.subr.mxu0 0.0
        %1549 = vmatpush1.msra.mxu0 %v1500
        %1550 = vmatprep.subr.mxu0 0.0
        %1551 = vmatpush2.msra.mxu0 0.0
        %1552 = vmatprep.subr.mxu0 0.0
        %1553 = vmatpush2.msra.mxu0 0.0
        %1554 = vmatprep.subr.mxu0 0.0
        %1555 = vmatpush2.msra.mxu0 0.0
        %1556 = vmatprep.subr.mxu0 0.0
        %1557 = vmatpush2.msra.mxu0 0.0
        %1558 = vmatprep.subr.mxu0 0.0
        %1559 = vmatpush2.msra.mxu0 0.0
        %1560 = vmatprep.subr.mxu0 0.0
        %1561 = vmatpush2.msra.mxu0 0.0
        %1562 = vmatprep.subr.mxu0 0.0
        %1563 = vmatpush2.msra.mxu0 0.0
        %1564 = vmatprep.subr.mxu0 0.0
        %1565 = vmatpush2.msra.mxu0 0.0
        %1566 = vmatprep.subr.mxu0 0.0
        %1567 = vmatpush2.msra.mxu0 0.0
        %1568 = vmatprep.subr.mxu0 0.0
        %1569 = vmatpush2.msra.mxu0 0.0
        %1570 = vmatprep.subr.mxu0 0.0
        %1571 = vmatpush2.msra.mxu0 0.0
        %1572 = vmatprep.subr.mxu0 0.0
        %1573 = vmatpush2.msra.mxu0 0.0
        %1574 = vmatprep.subr.mxu0 0.0
        %1575 = vmatpush2.msra.mxu0 0.0
        %1576 = vmatprep.subr.mxu0 0.0
        %1577 = vmatpush2.msra.mxu0 0.0
        %1578 = vmatprep.subr.mxu0 0.0
        %1579 = vmatpush2.msra.mxu0 0.0
        %1580 = vmatprep.subr.mxu0 0.0
        %1581 = vmatpush2.msra.mxu0 0.0
        %1582 = vmatprep.mubr.f32.mxu0 0.0
        %1583 = vmatmul.mubr.f32.gmra.mxu0 %v1513
        %v1584 = vpop.f32.mrf.mxu0
        %v1585 = vadd.f32 0.0, %v1584
        %v1586 = vpop.f32.mrf.mxu0
        %1587 = vmatprep.mubr.f32.mxu0 0.0
        %1588 = vmatmul.mubr.f32.gmra.mxu0 %v1516
        %v1589 = vpop.f32.mrf.mxu0
        %v1590 = vadd.f32 0.0, %v1589
        %v1591 = vpop.f32.mrf.mxu0
        %1592 = vdwg.mxu0
        %1593 = vmatprep.subr.mxu0 0.0
        %1594 = vmatpush1.msra.mxu0 %v1416
        %1595 = vmatprep.subr.mxu0 0.0
        %1596 = vmatpush1.msra.mxu0 %v1415
        %1597 = vmatprep.subr.mxu0 0.0
        %1598 = vmatpush1.msra.mxu0 %v1414
        %1599 = vmatprep.subr.mxu0 0.0
        %1600 = vmatpush1.msra.mxu0 %v1413
        %1601 = vmatprep.subr.mxu0 0.0
        %1602 = vmatpush1.msra.mxu0 %v1412
        %1603 = vmatprep.subr.mxu0 0.0
        %1604 = vmatpush1.msra.mxu0 %v1411
        %1605 = vmatprep.subr.mxu0 0.0
        %1606 = vmatpush1.msra.mxu0 %v1410
        %1607 = vmatprep.subr.mxu0 0.0
        %1608 = vmatpush1.msra.mxu0 %v1409
        %1609 = vmatprep.subr.mxu0 0.0
        %1610 = vmatpush1.msra.mxu0 %v1408
        %1611 = vmatprep.subr.mxu0 0.0
        %1612 = vmatpush1.msra.mxu0 %v1407
        %1613 = vmatprep.subr.mxu0 0.0
        %1614 = vmatpush1.msra.mxu0 %v1406
        %1615 = vmatprep.subr.mxu0 0.0
        %1616 = vmatpush1.msra.mxu0 %v1405
        %1617 = vmatprep.subr.mxu0 0.0
        %1618 = vmatpush1.msra.mxu0 %v1404
        %1619 = vmatprep.subr.mxu0 0.0
        %1620 = vmatpush1.msra.mxu0 %v1403
        %1621 = vmatprep.subr.mxu0 0.0
        %1622 = vmatpush1.msra.mxu0 %v1402
        %1623 = vmatprep.subr.mxu0 0.0
        %1624 = vmatpush1.msra.mxu0 %v1401
        %1625 = vmatprep.subr.mxu0 0.0
        %1626 = vmatpush2.msra.mxu0 0.0
        %1627 = vmatprep.subr.mxu0 0.0
        %1628 = vmatpush2.msra.mxu0 0.0
        %1629 = vmatprep.subr.mxu0 0.0
        %1630 = vmatpush2.msra.mxu0 0.0
        %1631 = vmatprep.subr.mxu0 0.0
        %1632 = vmatpush2.msra.mxu0 0.0
        %1633 = vmatprep.subr.mxu0 0.0
        %1634 = vmatpush2.msra.mxu0 0.0
        %1635 = vmatprep.subr.mxu0 0.0
        %1636 = vmatpush2.msra.mxu0 0.0
        %1637 = vmatprep.subr.mxu0 0.0
        %1638 = vmatpush2.msra.mxu0 0.0
        %1639 = vmatprep.subr.mxu0 0.0
        %1640 = vmatpush2.msra.mxu0 0.0
        %1641 = vmatprep.subr.mxu0 0.0
        %1642 = vmatpush2.msra.mxu0 0.0
        %1643 = vmatprep.subr.mxu0 0.0
        %1644 = vmatpush2.msra.mxu0 0.0
        %1645 = vmatprep.subr.mxu0 0.0
        %1646 = vmatpush2.msra.mxu0 0.0
        %1647 = vmatprep.subr.mxu0 0.0
        %1648 = vmatpush2.msra.mxu0 0.0
        %1649 = vmatprep.subr.mxu0 0.0
        %1650 = vmatpush2.msra.mxu0 0.0
        %1651 = vmatprep.subr.mxu0 0.0
        %1652 = vmatpush2.msra.mxu0 0.0
        %1653 = vmatprep.subr.mxu0 0.0
        %1654 = vmatpush2.msra.mxu0 0.0
        %1655 = vmatprep.subr.mxu0 0.0
        %1656 = vmatpush2.msra.mxu0 0.0
        %1657 = vmatprep.mubr.f32.mxu0 0.0
        %1658 = vmatmul.mubr.f32.gmra.mxu0 %v1398
        %v1659 = vpop.f32.mrf.mxu0
        %v1660 = vadd.f32 %v1585, %v1659
        %v1661 = vpop.f32.mrf.mxu0
        %1662 = vmatprep.mubr.f32.mxu0 0.0
        %1663 = vmatmul.mubr.f32.gmra.mxu0 %v1399
        %v1664 = vpop.f32.mrf.mxu0
        %v1665 = vadd.f32 %v1590, %v1664
        %v1666 = vpop.f32.mrf.mxu0
        %1667 = vdwg.mxu0
        %s1668 = scalar_lea.vmem [#allocation14], 256
        %v1669 = vld [vmem:[%s1668] sm:$0xff]
        %v1670 = vld [vmem:[%s1668 + $0x8] sm:$0xff]
        %v1671 = vld [vmem:[%s1668 + $0x10] sm:$0xff]
        %v1672 = vld [vmem:[%s1668 + $0x18] sm:$0xff]
        %v1673 = vld [vmem:[%s1668 + $0x20] sm:$0xff]
        %v1674 = vld [vmem:[%s1668 + $0x28] sm:$0xff]
        %v1675 = vld [vmem:[%s1668 + $0x30] sm:$0xff]
        %v1676 = vld [vmem:[%s1668 + $0x38] sm:$0xff]
        %v1677 = vld [vmem:[%s1668 + $0x40] sm:$0xff]
        %v1678 = vld [vmem:[%s1668 + $0x48] sm:$0xff]
        %v1679 = vld [vmem:[%s1668 + $0x50] sm:$0xff]
        %v1680 = vld [vmem:[%s1668 + $0x58] sm:$0xff]
        %v1681 = vld [vmem:[%s1668 + $0x60] sm:$0xff]
        %v1682 = vld [vmem:[%s1668 + $0x68] sm:$0xff]
        %v1683 = vld [vmem:[%s1668 + $0x70] sm:$0xff]
        %v1684 = vld [vmem:[%s1668 + $0x78] sm:$0xff]
        %1685 = vmatprep.subr.mxu0 0.0
        %1686 = vmatpush1.msra.mxu0 %v1684
        %1687 = vmatprep.subr.mxu0 0.0
        %1688 = vmatpush1.msra.mxu0 %v1683
        %1689 = vmatprep.subr.mxu0 0.0
        %1690 = vmatpush1.msra.mxu0 %v1682
        %1691 = vmatprep.subr.mxu0 0.0
        %1692 = vmatpush1.msra.mxu0 %v1681
        %1693 = vmatprep.subr.mxu0 0.0
        %1694 = vmatpush1.msra.mxu0 %v1680
        %1695 = vmatprep.subr.mxu0 0.0
        %1696 = vmatpush1.msra.mxu0 %v1679
        %1697 = vmatprep.subr.mxu0 0.0
        %1698 = vmatpush1.msra.mxu0 %v1678
        %1699 = vmatprep.subr.mxu0 0.0
        %1700 = vmatpush1.msra.mxu0 %v1677
        %1701 = vmatprep.subr.mxu0 0.0
        %1702 = vmatpush1.msra.mxu0 %v1676
        %1703 = vmatprep.subr.mxu0 0.0
        %1704 = vmatpush1.msra.mxu0 %v1675
        %1705 = vmatprep.subr.mxu0 0.0
        %1706 = vmatpush1.msra.mxu0 %v1674
        %1707 = vmatprep.subr.mxu0 0.0
        %1708 = vmatpush1.msra.mxu0 %v1673
        %1709 = vmatprep.subr.mxu0 0.0
        %1710 = vmatpush1.msra.mxu0 %v1672
        %1711 = vmatprep.subr.mxu0 0.0
        %1712 = vmatpush1.msra.mxu0 %v1671
        %1713 = vmatprep.subr.mxu0 0.0
        %1714 = vmatpush1.msra.mxu0 %v1670
        %1715 = vmatprep.subr.mxu0 0.0
        %1716 = vmatpush1.msra.mxu0 %v1669
        %1717 = vmatprep.subr.mxu0 0.0
        %1718 = vmatpush2.msra.mxu0 0.0
        %1719 = vmatprep.subr.mxu0 0.0
        %1720 = vmatpush2.msra.mxu0 0.0
        %1721 = vmatprep.subr.mxu0 0.0
        %1722 = vmatpush2.msra.mxu0 0.0
        %1723 = vmatprep.subr.mxu0 0.0
        %1724 = vmatpush2.msra.mxu0 0.0
        %1725 = vmatprep.subr.mxu0 0.0
        %1726 = vmatpush2.msra.mxu0 0.0
        %1727 = vmatprep.subr.mxu0 0.0
        %1728 = vmatpush2.msra.mxu0 0.0
        %1729 = vmatprep.subr.mxu0 0.0
        %1730 = vmatpush2.msra.mxu0 0.0
        %1731 = vmatprep.subr.mxu0 0.0
        %1732 = vmatpush2.msra.mxu0 0.0
        %1733 = vmatprep.subr.mxu0 0.0
        %1734 = vmatpush2.msra.mxu0 0.0
        %1735 = vmatprep.subr.mxu0 0.0
        %1736 = vmatpush2.msra.mxu0 0.0
        %1737 = vmatprep.subr.mxu0 0.0
        %1738 = vmatpush2.msra.mxu0 0.0
        %1739 = vmatprep.subr.mxu0 0.0
        %1740 = vmatpush2.msra.mxu0 0.0
        %1741 = vmatprep.subr.mxu0 0.0
        %1742 = vmatpush2.msra.mxu0 0.0
        %1743 = vmatprep.subr.mxu0 0.0
        %1744 = vmatpush2.msra.mxu0 0.0
        %1745 = vmatprep.subr.mxu0 0.0
        %1746 = vmatpush2.msra.mxu0 0.0
        %1747 = vmatprep.subr.mxu0 0.0
        %1748 = vmatpush2.msra.mxu0 0.0
        %1749 = vmatprep.mubr.f32.mxu0 0.0
        %1750 = vmatmul.mubr.f32.gmra.mxu0 %v1398
        %v1751 = vpop.f32.mrf.mxu0
        %v1752 = vadd.f32 0.0, %v1751
        %v1753 = vpop.f32.mrf.mxu0
        %1754 = vmatprep.mubr.f32.mxu0 0.0
        %1755 = vmatmul.mubr.f32.gmra.mxu0 %v1399
        %v1756 = vpop.f32.mrf.mxu0
        %v1757 = vadd.f32 0.0, %v1756
        %v1758 = vpop.f32.mrf.mxu0
        %1759 = vdwg.mxu0
        %s1760 = scalar_lea.vmem [#allocation5], 32
        %v1761 = vld [vmem:[%s1760] sm:$0xff]
        %v1762 = vld [vmem:[%s1760 + $0x8] sm:$0xff]
        %v1764 = vsel %vm1511, %v1761, 0
        %v1767 = vsel %vm1511, %v1762, 0
        %1769 = vmatprep.subr.mxu0 0.0
        %1770 = vmatpush1.msra.mxu0 0.0
        %1771 = vmatprep.subr.mxu0 0.0
        %1772 = vmatpush1.msra.mxu0 0.0
        %1773 = vmatprep.subr.mxu0 0.0
        %1774 = vmatpush1.msra.mxu0 0.0
        %1775 = vmatprep.subr.mxu0 0.0
        %1776 = vmatpush1.msra.mxu0 0.0
        %1777 = vmatprep.subr.mxu0 0.0
        %1778 = vmatpush1.msra.mxu0 0.0
        %1779 = vmatprep.subr.mxu0 0.0
        %1780 = vmatpush1.msra.mxu0 0.0
        %1781 = vmatprep.subr.mxu0 0.0
        %1782 = vmatpush1.msra.mxu0 0.0
        %1783 = vmatprep.subr.mxu0 0.0
        %1784 = vmatpush1.msra.mxu0 0.0
        %1785 = vmatprep.subr.mxu0 0.0
        %1786 = vmatpush1.msra.mxu0 0.0
        %1787 = vmatprep.subr.mxu0 0.0
        %1788 = vmatpush1.msra.mxu0 0.0
        %1789 = vmatprep.subr.mxu0 0.0
        %1790 = vmatpush1.msra.mxu0 0.0
        %1791 = vmatprep.subr.mxu0 0.0
        %1792 = vmatpush1.msra.mxu0 0.0
        %1793 = vmatprep.subr.mxu0 0.0
        %1794 = vmatpush1.msra.mxu0 0.0
        %1795 = vmatprep.subr.mxu0 0.0
        %1796 = vmatpush1.msra.mxu0 0.0
        %1797 = vmatprep.subr.mxu0 0.0
        %1798 = vmatpush1.msra.mxu0 %v1757
        %1799 = vmatprep.subr.mxu0 0.0
        %1800 = vmatpush1.msra.mxu0 %v1752
        %1801 = vmatprep.subr.mxu0 0.0
        %1802 = vmatpush2.msra.mxu0 0.0
        %1803 = vmatprep.subr.mxu0 0.0
        %1804 = vmatpush2.msra.mxu0 0.0
        %1805 = vmatprep.subr.mxu0 0.0
        %1806 = vmatpush2.msra.mxu0 0.0
        %1807 = vmatprep.subr.mxu0 0.0
        %1808 = vmatpush2.msra.mxu0 0.0
        %1809 = vmatprep.subr.mxu0 0.0
        %1810 = vmatpush2.msra.mxu0 0.0
        %1811 = vmatprep.subr.mxu0 0.0
        %1812 = vmatpush2.msra.mxu0 0.0
        %1813 = vmatprep.subr.mxu0 0.0
        %1814 = vmatpush2.msra.mxu0 0.0
        %1815 = vmatprep.subr.mxu0 0.0
        %1816 = vmatpush2.msra.mxu0 0.0
        %1817 = vmatprep.subr.mxu0 0.0
        %1818 = vmatpush2.msra.mxu0 0.0
        %1819 = vmatprep.subr.mxu0 0.0
        %1820 = vmatpush2.msra.mxu0 0.0
        %1821 = vmatprep.subr.mxu0 0.0
        %1822 = vmatpush2.msra.mxu0 0.0
        %1823 = vmatprep.subr.mxu0 0.0
        %1824 = vmatpush2.msra.mxu0 0.0
        %1825 = vmatprep.subr.mxu0 0.0
        %1826 = vmatpush2.msra.mxu0 0.0
        %1827 = vmatprep.subr.mxu0 0.0
        %1828 = vmatpush2.msra.mxu0 0.0
        %1829 = vmatprep.subr.mxu0 0.0
        %1830 = vmatpush2.msra.mxu0 0.0
        %1831 = vmatprep.subr.mxu0 0.0
        %1832 = vmatpush2.msra.mxu0 0.0
        %1833 = vmatprep.mubr.f32.mxu0 0.0
        %1834 = vmatmul.mubr.f32.gmra.mxu0 %v1764
        %v1835 = vpop.f32.mrf.mxu0
        %v1836 = vadd.f32 0.0, %v1835
        %v1837 = vpop.f32.mrf.mxu0
        %1838 = vmatprep.mubr.f32.mxu0 0.0
        %1839 = vmatmul.mubr.f32.gmra.mxu0 %v1767
        %v1840 = vpop.f32.mrf.mxu0
        %v1841 = vadd.f32 0.0, %v1840
        %v1842 = vpop.f32.mrf.mxu0
        %1843 = vdwg.mxu0
        %v1844 = vadd.f32 %v1660, %v1836
        %v1845 = vadd.f32 %v1665, %v1841
        %v1846 = vld [vmem:[%s19] sm:$0x1]
        %v1848 = vlaneseq
        %v1849 = vshrl.u32 %v1848, 7
        %v1850 = vsub.s32 0, %v1849
        %v1851 = vrot.slane %v1846, %v1850
        %v1853 = vmul.f32 %v1844, %v1851
        %v1854 = vmul.f32 %v1845, %v1851
        %v1855 = vld [vmem:[%s21] sm:$0x1]
        %v1857 = vlaneseq
        %v1858 = vshrl.u32 %v1857, 7
        %v1859 = vsub.s32 0, %v1858
        %v1860 = vrot.slane %v1855, %v1859
        %v1862 = vadd.f32 %v1853, %v1860
        %v1863 = vadd.f32 %v1854, %v1860
        %v1864 = vxor.u32 %v1862, 2147483648
        %v1865 = vxor.u32 %v1863, 2147483648
        %v1866 = vmul.f32 %v1864, 1.442695
        %v1867 = vpow.pop %v1866
        %v1868 = vmul.f32 %v1865, 1.442695
        %v1869 = vpow.pop %v1868
        %v1870 = vadd.f32 %v1867, 1.0
        %v1871 = vadd.f32 %v1869, 1.0
        %v1872 = vrcp.pop %v1870
        %v1873 = vmul.f32 1.0, %v1872
        %v1874 = vrcp.pop %v1871
        %v1875 = vmul.f32 1.0, %v1874
        %v1876 = vmul.f32 %v1862, %v1873
        %v1877 = vmul.f32 %v1863, %v1875
        %s1878 = scalar_lea.vmem [#allocation16], 128
        %v1879 = vld [vmem:[%s1878] sm:$0xff]
        %v1880 = vld [vmem:[%s1878 + $0x8] sm:$0xff]
        %v1881 = vld [vmem:[%s1878 + $0x10] sm:$0xff]
        %v1882 = vld [vmem:[%s1878 + $0x18] sm:$0xff]
        %v1883 = vld [vmem:[%s1878 + $0x20] sm:$0xff]
        %v1884 = vld [vmem:[%s1878 + $0x28] sm:$0xff]
        %v1885 = vld [vmem:[%s1878 + $0x30] sm:$0xff]
        %v1886 = vld [vmem:[%s1878 + $0x38] sm:$0xff]
        %v1887 = vld [vmem:[%s1878 + $0x40] sm:$0xff]
        %v1888 = vld [vmem:[%s1878 + $0x48] sm:$0xff]
        %v1889 = vld [vmem:[%s1878 + $0x50] sm:$0xff]
        %v1890 = vld [vmem:[%s1878 + $0x58] sm:$0xff]
        %v1891 = vld [vmem:[%s1878 + $0x60] sm:$0xff]
        %v1892 = vld [vmem:[%s1878 + $0x68] sm:$0xff]
        %v1893 = vld [vmem:[%s1878 + $0x70] sm:$0xff]
        %v1894 = vld [vmem:[%s1878 + $0x78] sm:$0xff]
        %v1895 = vld [vmem:[#allocation16] sm:$0xff]
        %v1896 = vld [vmem:[#allocation16 + $0x8] sm:$0xff]
        %v1897 = vld [vmem:[#allocation16 + $0x10] sm:$0xff]
        %v1898 = vld [vmem:[#allocation16 + $0x18] sm:$0xff]
        %v1899 = vld [vmem:[#allocation16 + $0x20] sm:$0xff]
        %v1900 = vld [vmem:[#allocation16 + $0x28] sm:$0xff]
        %v1901 = vld [vmem:[#allocation16 + $0x30] sm:$0xff]
        %v1902 = vld [vmem:[#allocation16 + $0x38] sm:$0xff]
        %v1903 = vld [vmem:[#allocation16 + $0x40] sm:$0xff]
        %v1904 = vld [vmem:[#allocation16 + $0x48] sm:$0xff]
        %v1905 = vld [vmem:[#allocation16 + $0x50] sm:$0xff]
        %v1906 = vld [vmem:[#allocation16 + $0x58] sm:$0xff]
        %v1907 = vld [vmem:[#allocation16 + $0x60] sm:$0xff]
        %v1908 = vld [vmem:[#allocation16 + $0x68] sm:$0xff]
        %v1909 = vld [vmem:[#allocation16 + $0x70] sm:$0xff]
        %v1910 = vld [vmem:[#allocation16 + $0x78] sm:$0xff]
        %1911 = vmatprep.subr.mxu0 0.0
        %1912 = vmatpush1.msra.mxu0 %v1910
        %1913 = vmatprep.subr.mxu0 0.0
        %1914 = vmatpush1.msra.mxu0 %v1909
        %1915 = vmatprep.subr.mxu0 0.0
        %1916 = vmatpush1.msra.mxu0 %v1908
        %1917 = vmatprep.subr.mxu0 0.0
        %1918 = vmatpush1.msra.mxu0 %v1907
        %1919 = vmatprep.subr.mxu0 0.0
        %1920 = vmatpush1.msra.mxu0 %v1906
        %1921 = vmatprep.subr.mxu0 0.0
        %1922 = vmatpush1.msra.mxu0 %v1905
        %1923 = vmatprep.subr.mxu0 0.0
        %1924 = vmatpush1.msra.mxu0 %v1904
        %1925 = vmatprep.subr.mxu0 0.0
        %1926 = vmatpush1.msra.mxu0 %v1903
        %1927 = vmatprep.subr.mxu0 0.0
        %1928 = vmatpush1.msra.mxu0 %v1902
        %1929 = vmatprep.subr.mxu0 0.0
        %1930 = vmatpush1.msra.mxu0 %v1901
        %1931 = vmatprep.subr.mxu0 0.0
        %1932 = vmatpush1.msra.mxu0 %v1900
        %1933 = vmatprep.subr.mxu0 0.0
        %1934 = vmatpush1.msra.mxu0 %v1899
        %1935 = vmatprep.subr.mxu0 0.0
        %1936 = vmatpush1.msra.mxu0 %v1898
        %1937 = vmatprep.subr.mxu0 0.0
        %1938 = vmatpush1.msra.mxu0 %v1897
        %1939 = vmatprep.subr.mxu0 0.0
        %1940 = vmatpush1.msra.mxu0 %v1896
        %1941 = vmatprep.subr.mxu0 0.0
        %1942 = vmatpush1.msra.mxu0 %v1895
        %1943 = vmatprep.subr.mxu0 0.0
        %1944 = vmatpush2.msra.mxu0 0.0
        %1945 = vmatprep.subr.mxu0 0.0
        %1946 = vmatpush2.msra.mxu0 0.0
        %1947 = vmatprep.subr.mxu0 0.0
        %1948 = vmatpush2.msra.mxu0 0.0
        %1949 = vmatprep.subr.mxu0 0.0
        %1950 = vmatpush2.msra.mxu0 0.0
        %1951 = vmatprep.subr.mxu0 0.0
        %1952 = vmatpush2.msra.mxu0 0.0
        %1953 = vmatprep.subr.mxu0 0.0
        %1954 = vmatpush2.msra.mxu0 0.0
        %1955 = vmatprep.subr.mxu0 0.0
        %1956 = vmatpush2.msra.mxu0 0.0
        %1957 = vmatprep.subr.mxu0 0.0
        %1958 = vmatpush2.msra.mxu0 0.0
        %1959 = vmatprep.subr.mxu0 0.0
        %1960 = vmatpush2.msra.mxu0 0.0
        %1961 = vmatprep.subr.mxu0 0.0
        %1962 = vmatpush2.msra.mxu0 0.0
        %1963 = vmatprep.subr.mxu0 0.0
        %1964 = vmatpush2.msra.mxu0 0.0
        %1965 = vmatprep.subr.mxu0 0.0
        %1966 = vmatpush2.msra.mxu0 0.0
        %1967 = vmatprep.subr.mxu0 0.0
        %1968 = vmatpush2.msra.mxu0 0.0
        %1969 = vmatprep.subr.mxu0 0.0
        %1970 = vmatpush2.msra.mxu0 0.0
        %1971 = vmatprep.subr.mxu0 0.0
        %1972 = vmatpush2.msra.mxu0 0.0
        %1973 = vmatprep.subr.mxu0 0.0
        %1974 = vmatpush2.msra.mxu0 0.0
        %1975 = vmatprep.mubr.f32.mxu0 0.0
        %1976 = vmatmul.mubr.f32.gmra.mxu0 %v1876
        %v1977 = vpop.f32.mrf.mxu0
        %v1978 = vadd.f32 0.0, %v1977
        %v1979 = vpop.f32.mrf.mxu0
        %1980 = vmatprep.mubr.f32.mxu0 0.0
        %1981 = vmatmul.mubr.f32.gmra.mxu0 %v1877
        %v1982 = vpop.f32.mrf.mxu0
        %v1983 = vadd.f32 0.0, %v1982
        %v1984 = vpop.f32.mrf.mxu0
        %1985 = vdwg.mxu0
        %1986 = vmatprep.subr.mxu0 0.0
        %1987 = vmatpush1.msra.mxu0 0.0
        %1988 = vmatprep.subr.mxu0 0.0
        %1989 = vmatpush1.msra.mxu0 0.0
        %1990 = vmatprep.subr.mxu0 0.0
        %1991 = vmatpush1.msra.mxu0 0.0
        %1992 = vmatprep.subr.mxu0 0.0
        %1993 = vmatpush1.msra.mxu0 0.0
        %1994 = vmatprep.subr.mxu0 0.0
        %1995 = vmatpush1.msra.mxu0 0.0
        %1996 = vmatprep.subr.mxu0 0.0
        %1997 = vmatpush1.msra.mxu0 0.0
        %1998 = vmatprep.subr.mxu0 0.0
        %1999 = vmatpush1.msra.mxu0 0.0
        %2000 = vmatprep.subr.mxu0 0.0
        %2001 = vmatpush1.msra.mxu0 0.0
        %2002 = vmatprep.subr.mxu0 0.0
        %2003 = vmatpush1.msra.mxu0 0.0
        %2004 = vmatprep.subr.mxu0 0.0
        %2005 = vmatpush1.msra.mxu0 0.0
        %2006 = vmatprep.subr.mxu0 0.0
        %2007 = vmatpush1.msra.mxu0 0.0
        %2008 = vmatprep.subr.mxu0 0.0
        %2009 = vmatpush1.msra.mxu0 0.0
        %2010 = vmatprep.subr.mxu0 0.0
        %2011 = vmatpush1.msra.mxu0 0.0
        %2012 = vmatprep.subr.mxu0 0.0
        %2013 = vmatpush1.msra.mxu0 0.0
        %2014 = vmatprep.subr.mxu0 0.0
        %2015 = vmatpush1.msra.mxu0 %v1983
        %2016 = vmatprep.subr.mxu0 0.0
        %2017 = vmatpush1.msra.mxu0 %v1978
        %2018 = vmatprep.subr.mxu0 0.0
        %2019 = vmatpush2.msra.mxu0 0.0
        %2020 = vmatprep.subr.mxu0 0.0
        %2021 = vmatpush2.msra.mxu0 0.0
        %2022 = vmatprep.subr.mxu0 0.0
        %2023 = vmatpush2.msra.mxu0 0.0
        %2024 = vmatprep.subr.mxu0 0.0
        %2025 = vmatpush2.msra.mxu0 0.0
        %2026 = vmatprep.subr.mxu0 0.0
        %2027 = vmatpush2.msra.mxu0 0.0
        %2028 = vmatprep.subr.mxu0 0.0
        %2029 = vmatpush2.msra.mxu0 0.0
        %2030 = vmatprep.subr.mxu0 0.0
        %2031 = vmatpush2.msra.mxu0 0.0
        %2032 = vmatprep.subr.mxu0 0.0
        %2033 = vmatpush2.msra.mxu0 0.0
        %2034 = vmatprep.subr.mxu0 0.0
        %2035 = vmatpush2.msra.mxu0 0.0
        %2036 = vmatprep.subr.mxu0 0.0
        %2037 = vmatpush2.msra.mxu0 0.0
        %2038 = vmatprep.subr.mxu0 0.0
        %2039 = vmatpush2.msra.mxu0 0.0
        %2040 = vmatprep.subr.mxu0 0.0
        %2041 = vmatpush2.msra.mxu0 0.0
        %2042 = vmatprep.subr.mxu0 0.0
        %2043 = vmatpush2.msra.mxu0 0.0
        %2044 = vmatprep.subr.mxu0 0.0
        %2045 = vmatpush2.msra.mxu0 0.0
        %2046 = vmatprep.subr.mxu0 0.0
        %2047 = vmatpush2.msra.mxu0 0.0
        %2048 = vmatprep.subr.mxu0 0.0
        %2049 = vmatpush2.msra.mxu0 0.0
        %2050 = vmatprep.mubr.f32.mxu0 0.0
        %2051 = vmatmul.mubr.f32.gmra.mxu0 %v1513
        %v2052 = vpop.f32.mrf.mxu0
        %v2053 = vadd.f32 0.0, %v2052
        %v2054 = vpop.f32.mrf.mxu0
        %2055 = vmatprep.mubr.f32.mxu0 0.0
        %2056 = vmatmul.mubr.f32.gmra.mxu0 %v1516
        %v2057 = vpop.f32.mrf.mxu0
        %v2058 = vadd.f32 0.0, %v2057
        %v2059 = vpop.f32.mrf.mxu0
        %2060 = vdwg.mxu0
        %2061 = vmatprep.subr.mxu0 0.0
        %2062 = vmatpush1.msra.mxu0 %v1894
        %2063 = vmatprep.subr.mxu0 0.0
        %2064 = vmatpush1.msra.mxu0 %v1893
        %2065 = vmatprep.subr.mxu0 0.0
        %2066 = vmatpush1.msra.mxu0 %v1892
        %2067 = vmatprep.subr.mxu0 0.0
        %2068 = vmatpush1.msra.mxu0 %v1891
        %2069 = vmatprep.subr.mxu0 0.0
        %2070 = vmatpush1.msra.mxu0 %v1890
        %2071 = vmatprep.subr.mxu0 0.0
        %2072 = vmatpush1.msra.mxu0 %v1889
        %2073 = vmatprep.subr.mxu0 0.0
        %2074 = vmatpush1.msra.mxu0 %v1888
        %2075 = vmatprep.subr.mxu0 0.0
        %2076 = vmatpush1.msra.mxu0 %v1887
        %2077 = vmatprep.subr.mxu0 0.0
        %2078 = vmatpush1.msra.mxu0 %v1886
        %2079 = vmatprep.subr.mxu0 0.0
        %2080 = vmatpush1.msra.mxu0 %v1885
        %2081 = vmatprep.subr.mxu0 0.0
        %2082 = vmatpush1.msra.mxu0 %v1884
        %2083 = vmatprep.subr.mxu0 0.0
        %2084 = vmatpush1.msra.mxu0 %v1883
        %2085 = vmatprep.subr.mxu0 0.0
        %2086 = vmatpush1.msra.mxu0 %v1882
        %2087 = vmatprep.subr.mxu0 0.0
        %2088 = vmatpush1.msra.mxu0 %v1881
        %2089 = vmatprep.subr.mxu0 0.0
        %2090 = vmatpush1.msra.mxu0 %v1880
        %2091 = vmatprep.subr.mxu0 0.0
        %2092 = vmatpush1.msra.mxu0 %v1879
        %2093 = vmatprep.subr.mxu0 0.0
        %2094 = vmatpush2.msra.mxu0 0.0
        %2095 = vmatprep.subr.mxu0 0.0
        %2096 = vmatpush2.msra.mxu0 0.0
        %2097 = vmatprep.subr.mxu0 0.0
        %2098 = vmatpush2.msra.mxu0 0.0
        %2099 = vmatprep.subr.mxu0 0.0
        %2100 = vmatpush2.msra.mxu0 0.0
        %2101 = vmatprep.subr.mxu0 0.0
        %2102 = vmatpush2.msra.mxu0 0.0
        %2103 = vmatprep.subr.mxu0 0.0
        %2104 = vmatpush2.msra.mxu0 0.0
        %2105 = vmatprep.subr.mxu0 0.0
        %2106 = vmatpush2.msra.mxu0 0.0
        %2107 = vmatprep.subr.mxu0 0.0
        %2108 = vmatpush2.msra.mxu0 0.0
        %2109 = vmatprep.subr.mxu0 0.0
        %2110 = vmatpush2.msra.mxu0 0.0
        %2111 = vmatprep.subr.mxu0 0.0
        %2112 = vmatpush2.msra.mxu0 0.0
        %2113 = vmatprep.subr.mxu0 0.0
        %2114 = vmatpush2.msra.mxu0 0.0
        %2115 = vmatprep.subr.mxu0 0.0
        %2116 = vmatpush2.msra.mxu0 0.0
        %2117 = vmatprep.subr.mxu0 0.0
        %2118 = vmatpush2.msra.mxu0 0.0
        %2119 = vmatprep.subr.mxu0 0.0
        %2120 = vmatpush2.msra.mxu0 0.0
        %2121 = vmatprep.subr.mxu0 0.0
        %2122 = vmatpush2.msra.mxu0 0.0
        %2123 = vmatprep.subr.mxu0 0.0
        %2124 = vmatpush2.msra.mxu0 0.0
        %2125 = vmatprep.mubr.f32.mxu0 0.0
        %2126 = vmatmul.mubr.f32.gmra.mxu0 %v1876
        %v2127 = vpop.f32.mrf.mxu0
        %v2128 = vadd.f32 %v2053, %v2127
        %v2129 = vpop.f32.mrf.mxu0
        %2130 = vmatprep.mubr.f32.mxu0 0.0
        %2131 = vmatmul.mubr.f32.gmra.mxu0 %v1877
        %v2132 = vpop.f32.mrf.mxu0
        %v2133 = vadd.f32 %v2058, %v2132
        %v2134 = vpop.f32.mrf.mxu0
        %2135 = vdwg.mxu0
        %s2136 = scalar_lea.vmem [#allocation16], 256
        %v2137 = vld [vmem:[%s2136] sm:$0xff]
        %v2138 = vld [vmem:[%s2136 + $0x8] sm:$0xff]
        %v2139 = vld [vmem:[%s2136 + $0x10] sm:$0xff]
        %v2140 = vld [vmem:[%s2136 + $0x18] sm:$0xff]
        %v2141 = vld [vmem:[%s2136 + $0x20] sm:$0xff]
        %v2142 = vld [vmem:[%s2136 + $0x28] sm:$0xff]
        %v2143 = vld [vmem:[%s2136 + $0x30] sm:$0xff]
        %v2144 = vld [vmem:[%s2136 + $0x38] sm:$0xff]
        %v2145 = vld [vmem:[%s2136 + $0x40] sm:$0xff]
        %v2146 = vld [vmem:[%s2136 + $0x48] sm:$0xff]
        %v2147 = vld [vmem:[%s2136 + $0x50] sm:$0xff]
        %v2148 = vld [vmem:[%s2136 + $0x58] sm:$0xff]
        %v2149 = vld [vmem:[%s2136 + $0x60] sm:$0xff]
        %v2150 = vld [vmem:[%s2136 + $0x68] sm:$0xff]
        %v2151 = vld [vmem:[%s2136 + $0x70] sm:$0xff]
        %v2152 = vld [vmem:[%s2136 + $0x78] sm:$0xff]
        %2153 = vmatprep.subr.mxu0 0.0
        %2154 = vmatpush1.msra.mxu0 %v2152
        %2155 = vmatprep.subr.mxu0 0.0
        %2156 = vmatpush1.msra.mxu0 %v2151
        %2157 = vmatprep.subr.mxu0 0.0
        %2158 = vmatpush1.msra.mxu0 %v2150
        %2159 = vmatprep.subr.mxu0 0.0
        %2160 = vmatpush1.msra.mxu0 %v2149
        %2161 = vmatprep.subr.mxu0 0.0
        %2162 = vmatpush1.msra.mxu0 %v2148
        %2163 = vmatprep.subr.mxu0 0.0
        %2164 = vmatpush1.msra.mxu0 %v2147
        %2165 = vmatprep.subr.mxu0 0.0
        %2166 = vmatpush1.msra.mxu0 %v2146
        %2167 = vmatprep.subr.mxu0 0.0
        %2168 = vmatpush1.msra.mxu0 %v2145
        %2169 = vmatprep.subr.mxu0 0.0
        %2170 = vmatpush1.msra.mxu0 %v2144
        %2171 = vmatprep.subr.mxu0 0.0
        %2172 = vmatpush1.msra.mxu0 %v2143
        %2173 = vmatprep.subr.mxu0 0.0
        %2174 = vmatpush1.msra.mxu0 %v2142
        %2175 = vmatprep.subr.mxu0 0.0
        %2176 = vmatpush1.msra.mxu0 %v2141
        %2177 = vmatprep.subr.mxu0 0.0
        %2178 = vmatpush1.msra.mxu0 %v2140
        %2179 = vmatprep.subr.mxu0 0.0
        %2180 = vmatpush1.msra.mxu0 %v2139
        %2181 = vmatprep.subr.mxu0 0.0
        %2182 = vmatpush1.msra.mxu0 %v2138
        %2183 = vmatprep.subr.mxu0 0.0
        %2184 = vmatpush1.msra.mxu0 %v2137
        %2185 = vmatprep.subr.mxu0 0.0
        %2186 = vmatpush2.msra.mxu0 0.0
        %2187 = vmatprep.subr.mxu0 0.0
        %2188 = vmatpush2.msra.mxu0 0.0
        %2189 = vmatprep.subr.mxu0 0.0
        %2190 = vmatpush2.msra.mxu0 0.0
        %2191 = vmatprep.subr.mxu0 0.0
        %2192 = vmatpush2.msra.mxu0 0.0
        %2193 = vmatprep.subr.mxu0 0.0
        %2194 = vmatpush2.msra.mxu0 0.0
        %2195 = vmatprep.subr.mxu0 0.0
        %2196 = vmatpush2.msra.mxu0 0.0
        %2197 = vmatprep.subr.mxu0 0.0
        %2198 = vmatpush2.msra.mxu0 0.0
        %2199 = vmatprep.subr.mxu0 0.0
        %2200 = vmatpush2.msra.mxu0 0.0
        %2201 = vmatprep.subr.mxu0 0.0
        %2202 = vmatpush2.msra.mxu0 0.0
        %2203 = vmatprep.subr.mxu0 0.0
        %2204 = vmatpush2.msra.mxu0 0.0
        %2205 = vmatprep.subr.mxu0 0.0
        %2206 = vmatpush2.msra.mxu0 0.0
        %2207 = vmatprep.subr.mxu0 0.0
        %2208 = vmatpush2.msra.mxu0 0.0
        %2209 = vmatprep.subr.mxu0 0.0
        %2210 = vmatpush2.msra.mxu0 0.0
        %2211 = vmatprep.subr.mxu0 0.0
        %2212 = vmatpush2.msra.mxu0 0.0
        %2213 = vmatprep.subr.mxu0 0.0
        %2214 = vmatpush2.msra.mxu0 0.0
        %2215 = vmatprep.subr.mxu0 0.0
        %2216 = vmatpush2.msra.mxu0 0.0
        %2217 = vmatprep.mubr.f32.mxu0 0.0
        %2218 = vmatmul.mubr.f32.gmra.mxu0 %v1876
        %v2219 = vpop.f32.mrf.mxu0
        %v2220 = vadd.f32 0.0, %v2219
        %v2221 = vpop.f32.mrf.mxu0
        %2222 = vmatprep.mubr.f32.mxu0 0.0
        %2223 = vmatmul.mubr.f32.gmra.mxu0 %v1877
        %v2224 = vpop.f32.mrf.mxu0
        %v2225 = vadd.f32 0.0, %v2224
        %v2226 = vpop.f32.mrf.mxu0
        %2227 = vdwg.mxu0
        %2228 = vmatprep.subr.mxu0 0.0
        %2229 = vmatpush1.msra.mxu0 0.0
        %2230 = vmatprep.subr.mxu0 0.0
        %2231 = vmatpush1.msra.mxu0 0.0
        %2232 = vmatprep.subr.mxu0 0.0
        %2233 = vmatpush1.msra.mxu0 0.0
        %2234 = vmatprep.subr.mxu0 0.0
        %2235 = vmatpush1.msra.mxu0 0.0
        %2236 = vmatprep.subr.mxu0 0.0
        %2237 = vmatpush1.msra.mxu0 0.0
        %2238 = vmatprep.subr.mxu0 0.0
        %2239 = vmatpush1.msra.mxu0 0.0
        %2240 = vmatprep.subr.mxu0 0.0
        %2241 = vmatpush1.msra.mxu0 0.0
        %2242 = vmatprep.subr.mxu0 0.0
        %2243 = vmatpush1.msra.mxu0 0.0
        %2244 = vmatprep.subr.mxu0 0.0
        %2245 = vmatpush1.msra.mxu0 0.0
        %2246 = vmatprep.subr.mxu0 0.0
        %2247 = vmatpush1.msra.mxu0 0.0
        %2248 = vmatprep.subr.mxu0 0.0
        %2249 = vmatpush1.msra.mxu0 0.0
        %2250 = vmatprep.subr.mxu0 0.0
        %2251 = vmatpush1.msra.mxu0 0.0
        %2252 = vmatprep.subr.mxu0 0.0
        %2253 = vmatpush1.msra.mxu0 0.0
        %2254 = vmatprep.subr.mxu0 0.0
        %2255 = vmatpush1.msra.mxu0 0.0
        %2256 = vmatprep.subr.mxu0 0.0
        %2257 = vmatpush1.msra.mxu0 %v2225
        %2258 = vmatprep.subr.mxu0 0.0
        %2259 = vmatpush1.msra.mxu0 %v2220
        %2260 = vmatprep.subr.mxu0 0.0
        %2261 = vmatpush2.msra.mxu0 0.0
        %2262 = vmatprep.subr.mxu0 0.0
        %2263 = vmatpush2.msra.mxu0 0.0
        %2264 = vmatprep.subr.mxu0 0.0
        %2265 = vmatpush2.msra.mxu0 0.0
        %2266 = vmatprep.subr.mxu0 0.0
        %2267 = vmatpush2.msra.mxu0 0.0
        %2268 = vmatprep.subr.mxu0 0.0
        %2269 = vmatpush2.msra.mxu0 0.0
        %2270 = vmatprep.subr.mxu0 0.0
        %2271 = vmatpush2.msra.mxu0 0.0
        %2272 = vmatprep.subr.mxu0 0.0
        %2273 = vmatpush2.msra.mxu0 0.0
        %2274 = vmatprep.subr.mxu0 0.0
        %2275 = vmatpush2.msra.mxu0 0.0
        %2276 = vmatprep.subr.mxu0 0.0
        %2277 = vmatpush2.msra.mxu0 0.0
        %2278 = vmatprep.subr.mxu0 0.0
        %2279 = vmatpush2.msra.mxu0 0.0
        %2280 = vmatprep.subr.mxu0 0.0
        %2281 = vmatpush2.msra.mxu0 0.0
        %2282 = vmatprep.subr.mxu0 0.0
        %2283 = vmatpush2.msra.mxu0 0.0
        %2284 = vmatprep.subr.mxu0 0.0
        %2285 = vmatpush2.msra.mxu0 0.0
        %2286 = vmatprep.subr.mxu0 0.0
        %2287 = vmatpush2.msra.mxu0 0.0
        %2288 = vmatprep.subr.mxu0 0.0
        %2289 = vmatpush2.msra.mxu0 0.0
        %2290 = vmatprep.subr.mxu0 0.0
        %2291 = vmatpush2.msra.mxu0 0.0
        %2292 = vmatprep.mubr.f32.mxu0 0.0
        %2293 = vmatmul.mubr.f32.gmra.mxu0 %v1764
        %v2294 = vpop.f32.mrf.mxu0
        %v2295 = vadd.f32 0.0, %v2294
        %v2296 = vpop.f32.mrf.mxu0
        %2297 = vmatprep.mubr.f32.mxu0 0.0
        %2298 = vmatmul.mubr.f32.gmra.mxu0 %v1767
        %v2299 = vpop.f32.mrf.mxu0
        %v2300 = vadd.f32 0.0, %v2299
        %v2301 = vpop.f32.mrf.mxu0
        %2302 = vdwg.mxu0
        %v2303 = vadd.f32 %v2128, %v2295
        %v2304 = vadd.f32 %v2133, %v2300
        %v2305 = vld [vmem:[%s25] sm:$0x1]
        %v2307 = vlaneseq
        %v2308 = vshrl.u32 %v2307, 7
        %v2309 = vsub.s32 0, %v2308
        %v2310 = vrot.slane %v2305, %v2309
        %v2312 = vmul.f32 %v2303, %v2310
        %v2313 = vmul.f32 %v2304, %v2310
        %v2314 = vld [vmem:[%s27] sm:$0x1]
        %v2316 = vlaneseq
        %v2317 = vshrl.u32 %v2316, 7
        %v2318 = vsub.s32 0, %v2317
        %v2319 = vrot.slane %v2314, %v2318
        %v2321 = vadd.f32 %v2312, %v2319
        %v2322 = vadd.f32 %v2313, %v2319
        %v2323 = vxor.u32 %v2321, 2147483648
        %v2324 = vxor.u32 %v2322, 2147483648
        %v2325 = vmul.f32 %v2323, 1.442695
        %v2326 = vpow.pop %v2325
        %v2327 = vmul.f32 %v2324, 1.442695
        %v2328 = vpow.pop %v2327
        %v2329 = vadd.f32 %v2326, 1.0
        %v2330 = vadd.f32 %v2328, 1.0
        %v2331 = vrcp.pop %v2329
        %v2332 = vmul.f32 1.0, %v2331
        %v2333 = vrcp.pop %v2330
        %v2334 = vmul.f32 1.0, %v2333
        %v2335 = vmul.f32 %v2321, %v2332
        %v2336 = vmul.f32 %v2322, %v2334
        %v2337 = vld [vmem:[#allocation17] sm:$0xff]
        %v2338 = vld [vmem:[#allocation17 + $0x8] sm:$0xff]
        %v2339 = vld [vmem:[#allocation17 + $0x10] sm:$0xff]
        %v2340 = vld [vmem:[#allocation17 + $0x18] sm:$0xff]
        %v2341 = vld [vmem:[#allocation17 + $0x20] sm:$0xff]
        %v2342 = vld [vmem:[#allocation17 + $0x28] sm:$0xff]
        %v2343 = vld [vmem:[#allocation17 + $0x30] sm:$0xff]
        %v2344 = vld [vmem:[#allocation17 + $0x38] sm:$0xff]
        %v2345 = vld [vmem:[#allocation17 + $0x40] sm:$0xff]
        %v2346 = vld [vmem:[#allocation17 + $0x48] sm:$0xff]
        %v2347 = vld [vmem:[#allocation17 + $0x50] sm:$0xff]
        %v2348 = vld [vmem:[#allocation17 + $0x58] sm:$0xff]
        %v2349 = vld [vmem:[#allocation17 + $0x60] sm:$0xff]
        %v2350 = vld [vmem:[#allocation17 + $0x68] sm:$0xff]
        %v2351 = vld [vmem:[#allocation17 + $0x70] sm:$0xff]
        %v2352 = vld [vmem:[#allocation17 + $0x78] sm:$0xff]
        %v2353 = vld [vmem:[%s31] sm:$0x1]
        %v2355 = vlaneseq
        %v2356 = vshrl.u32 %v2355, 7
        %v2357 = vsub.s32 0, %v2356
        %v2358 = vrot.slane %v2353, %v2357
        %2360 = vmatprep.subr.mxu0 0.0
        %2361 = vmatpush1.msra.mxu0 %v2352
        %2362 = vmatprep.subr.mxu0 0.0
        %2363 = vmatpush1.msra.mxu0 %v2351
        %2364 = vmatprep.subr.mxu0 0.0
        %2365 = vmatpush1.msra.mxu0 %v2350
        %2366 = vmatprep.subr.mxu0 0.0
        %2367 = vmatpush1.msra.mxu0 %v2349
        %2368 = vmatprep.subr.mxu0 0.0
        %2369 = vmatpush1.msra.mxu0 %v2348
        %2370 = vmatprep.subr.mxu0 0.0
        %2371 = vmatpush1.msra.mxu0 %v2347
        %2372 = vmatprep.subr.mxu0 0.0
        %2373 = vmatpush1.msra.mxu0 %v2346
        %2374 = vmatprep.subr.mxu0 0.0
        %2375 = vmatpush1.msra.mxu0 %v2345
        %2376 = vmatprep.subr.mxu0 0.0
        %2377 = vmatpush1.msra.mxu0 %v2344
        %2378 = vmatprep.subr.mxu0 0.0
        %2379 = vmatpush1.msra.mxu0 %v2343
        %2380 = vmatprep.subr.mxu0 0.0
        %2381 = vmatpush1.msra.mxu0 %v2342
        %2382 = vmatprep.subr.mxu0 0.0
        %2383 = vmatpush1.msra.mxu0 %v2341
        %2384 = vmatprep.subr.mxu0 0.0
        %2385 = vmatpush1.msra.mxu0 %v2340
        %2386 = vmatprep.subr.mxu0 0.0
        %2387 = vmatpush1.msra.mxu0 %v2339
        %2388 = vmatprep.subr.mxu0 0.0
        %2389 = vmatpush1.msra.mxu0 %v2338
        %2390 = vmatprep.subr.mxu0 0.0
        %2391 = vmatpush1.msra.mxu0 %v2337
        %2392 = vmatprep.subr.mxu0 0.0
        %2393 = vmatpush2.msra.mxu0 0.0
        %2394 = vmatprep.subr.mxu0 0.0
        %2395 = vmatpush2.msra.mxu0 0.0
        %2396 = vmatprep.subr.mxu0 0.0
        %2397 = vmatpush2.msra.mxu0 0.0
        %2398 = vmatprep.subr.mxu0 0.0
        %2399 = vmatpush2.msra.mxu0 0.0
        %2400 = vmatprep.subr.mxu0 0.0
        %2401 = vmatpush2.msra.mxu0 0.0
        %2402 = vmatprep.subr.mxu0 0.0
        %2403 = vmatpush2.msra.mxu0 0.0
        %2404 = vmatprep.subr.mxu0 0.0
        %2405 = vmatpush2.msra.mxu0 0.0
        %2406 = vmatprep.subr.mxu0 0.0
        %2407 = vmatpush2.msra.mxu0 0.0
        %2408 = vmatprep.subr.mxu0 0.0
        %2409 = vmatpush2.msra.mxu0 0.0
        %2410 = vmatprep.subr.mxu0 0.0
        %2411 = vmatpush2.msra.mxu0 0.0
        %2412 = vmatprep.subr.mxu0 0.0
        %2413 = vmatpush2.msra.mxu0 0.0
        %2414 = vmatprep.subr.mxu0 0.0
        %2415 = vmatpush2.msra.mxu0 0.0
        %2416 = vmatprep.subr.mxu0 0.0
        %2417 = vmatpush2.msra.mxu0 0.0
        %2418 = vmatprep.subr.mxu0 0.0
        %2419 = vmatpush2.msra.mxu0 0.0
        %2420 = vmatprep.subr.mxu0 0.0
        %2421 = vmatpush2.msra.mxu0 0.0
        %2422 = vmatprep.subr.mxu0 0.0
        %2423 = vmatpush2.msra.mxu0 0.0
        %2424 = vmatprep.mubr.f32.mxu0 0.0
        %2425 = vmatmul.mubr.f32.gmra.mxu0 %v2335
        %v2426 = vpop.f32.mrf.mxu0
        %v2427 = vadd.f32 %v2358, %v2426
        %v2428 = vpop.f32.mrf.mxu0
        %2429 = vmatprep.mubr.f32.mxu0 0.0
        %2430 = vmatmul.mubr.f32.gmra.mxu0 %v2336
        %v2431 = vpop.f32.mrf.mxu0
        %v2432 = vadd.f32 %v2358, %v2431
        %v2433 = vpop.f32.mrf.mxu0
        %2434 = vdwg.mxu0
        %s2435 = scalar_lea.vmem %s33, 1
        %v2436 = vld [vmem:[%s2435] sm:$0x1]
        %v2438 = vlaneseq
        %v2439 = vshrl.u32 %v2438, 7
        %v2440 = vsub.s32 0, %v2439
        %v2441 = vrot.slane %v2436, %v2440
        %v2443 = vmul.f32 %v2427, %v2441
        %v2444 = vmul.f32 %v2432, %v2441
        %v2445 = vld [vmem:[%s33] sm:$0x1]
        %v2447 = vlaneseq
        %v2448 = vshrl.u32 %v2447, 7
        %v2449 = vsub.s32 0, %v2448
        %v2450 = vrot.slane %v2445, %v2449
        %v2452 = vmul.f32 %v2427, %v2450
        %v2453 = vmul.f32 %v2432, %v2450
        %2454 = vmatprep.subr.mxu0 0.0
        %2455 = vmatpush1.msra.mxu0 0.0
        %2456 = vmatprep.subr.mxu0 0.0
        %2457 = vmatpush1.msra.mxu0 0.0
        %2458 = vmatprep.subr.mxu0 0.0
        %2459 = vmatpush1.msra.mxu0 0.0
        %2460 = vmatprep.subr.mxu0 0.0
        %2461 = vmatpush1.msra.mxu0 0.0
        %2462 = vmatprep.subr.mxu0 0.0
        %2463 = vmatpush1.msra.mxu0 0.0
        %2464 = vmatprep.subr.mxu0 0.0
        %2465 = vmatpush1.msra.mxu0 0.0
        %2466 = vmatprep.subr.mxu0 0.0
        %2467 = vmatpush1.msra.mxu0 0.0
        %2468 = vmatprep.subr.mxu0 0.0
        %2469 = vmatpush1.msra.mxu0 0.0
        %2470 = vmatprep.subr.mxu0 0.0
        %2471 = vmatpush1.msra.mxu0 0.0
        %2472 = vmatprep.subr.mxu0 0.0
        %2473 = vmatpush1.msra.mxu0 0.0
        %2474 = vmatprep.subr.mxu0 0.0
        %2475 = vmatpush1.msra.mxu0 0.0
        %2476 = vmatprep.subr.mxu0 0.0
        %2477 = vmatpush1.msra.mxu0 0.0
        %2478 = vmatprep.subr.mxu0 0.0
        %2479 = vmatpush1.msra.mxu0 0.0
        %2480 = vmatprep.subr.mxu0 0.0
        %2481 = vmatpush1.msra.mxu0 0.0
        %2482 = vmatprep.subr.mxu0 0.0
        %2483 = vmatpush1.msra.mxu0 %v2453
        %2484 = vmatprep.subr.mxu0 0.0
        %2485 = vmatpush1.msra.mxu0 %v2452
        %2486 = vmatprep.subr.mxu0 0.0
        %2487 = vmatpush2.msra.mxu0 0.0
        %2488 = vmatprep.subr.mxu0 0.0
        %2489 = vmatpush2.msra.mxu0 0.0
        %2490 = vmatprep.subr.mxu0 0.0
        %2491 = vmatpush2.msra.mxu0 0.0
        %2492 = vmatprep.subr.mxu0 0.0
        %2493 = vmatpush2.msra.mxu0 0.0
        %2494 = vmatprep.subr.mxu0 0.0
        %2495 = vmatpush2.msra.mxu0 0.0
        %2496 = vmatprep.subr.mxu0 0.0
        %2497 = vmatpush2.msra.mxu0 0.0
        %2498 = vmatprep.subr.mxu0 0.0
        %2499 = vmatpush2.msra.mxu0 0.0
        %2500 = vmatprep.subr.mxu0 0.0
        %2501 = vmatpush2.msra.mxu0 0.0
        %2502 = vmatprep.subr.mxu0 0.0
        %2503 = vmatpush2.msra.mxu0 0.0
        %2504 = vmatprep.subr.mxu0 0.0
        %2505 = vmatpush2.msra.mxu0 0.0
        %2506 = vmatprep.subr.mxu0 0.0
        %2507 = vmatpush2.msra.mxu0 0.0
        %2508 = vmatprep.subr.mxu0 0.0
        %2509 = vmatpush2.msra.mxu0 0.0
        %2510 = vmatprep.subr.mxu0 0.0
        %2511 = vmatpush2.msra.mxu0 0.0
        %2512 = vmatprep.subr.mxu0 0.0
        %2513 = vmatpush2.msra.mxu0 0.0
        %2514 = vmatprep.subr.mxu0 0.0
        %2515 = vmatpush2.msra.mxu0 0.0
        %2516 = vmatprep.subr.mxu0 0.0
        %2517 = vmatpush2.msra.mxu0 0.0
        %2518 = vmatprep.mubr.f32.mxu0 0.0
        %2519 = vmatmul.mubr.f32.gmra.mxu0 %v1513
        %v2520 = vpop.f32.mrf.mxu0
        %v2521 = vadd.f32 0.0, %v2520
        %v2522 = vpop.f32.mrf.mxu0
        %2523 = vmatprep.mubr.f32.mxu0 0.0
        %2524 = vmatmul.mubr.f32.gmra.mxu0 %v1516
        %v2525 = vpop.f32.mrf.mxu0
        %v2526 = vadd.f32 0.0, %v2525
        %v2527 = vpop.f32.mrf.mxu0
        %2528 = vdwg.mxu0
        %v2529 = vadd.f32 %v2443, %v2521
        %v2530 = vadd.f32 %v2444, %v2526
        %s2531 = scalar_lea.vmem %s33, 2
        %v2532 = vld [vmem:[%s2531] sm:$0x1]
        %v2534 = vlaneseq
        %v2535 = vshrl.u32 %v2534, 7
        %v2536 = vsub.s32 0, %v2535
        %v2537 = vrot.slane %v2532, %v2536
        %v2539 = vmul.f32 %v2427, %v2537
        %v2540 = vmul.f32 %v2432, %v2537
        %2541 = vmatprep.subr.mxu0 0.0
        %2542 = vmatpush1.msra.mxu0 0.0
        %2543 = vmatprep.subr.mxu0 0.0
        %2544 = vmatpush1.msra.mxu0 0.0
        %2545 = vmatprep.subr.mxu0 0.0
        %2546 = vmatpush1.msra.mxu0 0.0
        %2547 = vmatprep.subr.mxu0 0.0
        %2548 = vmatpush1.msra.mxu0 0.0
        %2549 = vmatprep.subr.mxu0 0.0
        %2550 = vmatpush1.msra.mxu0 0.0
        %2551 = vmatprep.subr.mxu0 0.0
        %2552 = vmatpush1.msra.mxu0 0.0
        %2553 = vmatprep.subr.mxu0 0.0
        %2554 = vmatpush1.msra.mxu0 0.0
        %2555 = vmatprep.subr.mxu0 0.0
        %2556 = vmatpush1.msra.mxu0 0.0
        %2557 = vmatprep.subr.mxu0 0.0
        %2558 = vmatpush1.msra.mxu0 0.0
        %2559 = vmatprep.subr.mxu0 0.0
        %2560 = vmatpush1.msra.mxu0 0.0
        %2561 = vmatprep.subr.mxu0 0.0
        %2562 = vmatpush1.msra.mxu0 0.0
        %2563 = vmatprep.subr.mxu0 0.0
        %2564 = vmatpush1.msra.mxu0 0.0
        %2565 = vmatprep.subr.mxu0 0.0
        %2566 = vmatpush1.msra.mxu0 0.0
        %2567 = vmatprep.subr.mxu0 0.0
        %2568 = vmatpush1.msra.mxu0 0.0
        %2569 = vmatprep.subr.mxu0 0.0
        %2570 = vmatpush1.msra.mxu0 %v2540
        %2571 = vmatprep.subr.mxu0 0.0
        %2572 = vmatpush1.msra.mxu0 %v2539
        %2573 = vmatprep.subr.mxu0 0.0
        %2574 = vmatpush2.msra.mxu0 0.0
        %2575 = vmatprep.subr.mxu0 0.0
        %2576 = vmatpush2.msra.mxu0 0.0
        %2577 = vmatprep.subr.mxu0 0.0
        %2578 = vmatpush2.msra.mxu0 0.0
        %2579 = vmatprep.subr.mxu0 0.0
        %2580 = vmatpush2.msra.mxu0 0.0
        %2581 = vmatprep.subr.mxu0 0.0
        %2582 = vmatpush2.msra.mxu0 0.0
        %2583 = vmatprep.subr.mxu0 0.0
        %2584 = vmatpush2.msra.mxu0 0.0
        %2585 = vmatprep.subr.mxu0 0.0
        %2586 = vmatpush2.msra.mxu0 0.0
        %2587 = vmatprep.subr.mxu0 0.0
        %2588 = vmatpush2.msra.mxu0 0.0
        %2589 = vmatprep.subr.mxu0 0.0
        %2590 = vmatpush2.msra.mxu0 0.0
        %2591 = vmatprep.subr.mxu0 0.0
        %2592 = vmatpush2.msra.mxu0 0.0
        %2593 = vmatprep.subr.mxu0 0.0
        %2594 = vmatpush2.msra.mxu0 0.0
        %2595 = vmatprep.subr.mxu0 0.0
        %2596 = vmatpush2.msra.mxu0 0.0
        %2597 = vmatprep.subr.mxu0 0.0
        %2598 = vmatpush2.msra.mxu0 0.0
        %2599 = vmatprep.subr.mxu0 0.0
        %2600 = vmatpush2.msra.mxu0 0.0
        %2601 = vmatprep.subr.mxu0 0.0
        %2602 = vmatpush2.msra.mxu0 0.0
        %2603 = vmatprep.subr.mxu0 0.0
        %2604 = vmatpush2.msra.mxu0 0.0
        %2605 = vmatprep.mubr.f32.mxu0 0.0
        %2606 = vmatmul.mubr.f32.gmra.mxu0 %v1764
        %v2607 = vpop.f32.mrf.mxu0
        %v2608 = vadd.f32 0.0, %v2607
        %v2609 = vpop.f32.mrf.mxu0
        %2610 = vmatprep.mubr.f32.mxu0 0.0
        %2611 = vmatmul.mubr.f32.gmra.mxu0 %v1767
        %v2612 = vpop.f32.mrf.mxu0
        %v2613 = vadd.f32 0.0, %v2612
        %v2614 = vpop.f32.mrf.mxu0
        %2615 = vdwg.mxu0
        %v2616 = vadd.f32 %v2529, %v2608
        %v2617 = vadd.f32 %v2530, %v2613
        %v2618 = vld [vmem:[%s35] sm:$0x1]
        %v2620 = vlaneseq
        %v2621 = vshrl.u32 %v2620, 7
        %v2622 = vsub.s32 0, %v2621
        %v2623 = vrot.slane %v2618, %v2622
        %v2625 = vadd.f32 %v2616, %v2623
        %v2626 = vadd.f32 %v2617, %v2623
        %v2627 = vld [vmem:[#allocation19] sm:$0xff]
        %v2628 = vld [vmem:[#allocation19 + $0x8] sm:$0xff]
        %v2629 = vld [vmem:[#allocation19 + $0x10] sm:$0xff]
        %v2630 = vld [vmem:[#allocation19 + $0x18] sm:$0xff]
        %v2631 = vld [vmem:[#allocation19 + $0x20] sm:$0xff]
        %v2632 = vld [vmem:[#allocation19 + $0x28] sm:$0xff]
        %v2633 = vld [vmem:[#allocation19 + $0x30] sm:$0xff]
        %v2634 = vld [vmem:[#allocation19 + $0x38] sm:$0xff]
        %v2635 = vld [vmem:[#allocation19 + $0x40] sm:$0xff]
        %v2636 = vld [vmem:[#allocation19 + $0x48] sm:$0xff]
        %v2637 = vld [vmem:[#allocation19 + $0x50] sm:$0xff]
        %v2638 = vld [vmem:[#allocation19 + $0x58] sm:$0xff]
        %v2639 = vld [vmem:[#allocation19 + $0x60] sm:$0xff]
        %v2640 = vld [vmem:[#allocation19 + $0x68] sm:$0xff]
        %v2641 = vld [vmem:[#allocation19 + $0x70] sm:$0xff]
        %v2642 = vld [vmem:[#allocation19 + $0x78] sm:$0xff]
        %v2643 = vld [vmem:[%s39] sm:$0x1]
        %v2645 = vlaneseq
        %v2646 = vshrl.u32 %v2645, 7
        %v2647 = vsub.s32 0, %v2646
        %v2648 = vrot.slane %v2643, %v2647
        %2650 = vmatprep.subr.mxu0 0.0
        %2651 = vmatpush1.msra.mxu0 %v2642
        %2652 = vmatprep.subr.mxu0 0.0
        %2653 = vmatpush1.msra.mxu0 %v2641
        %2654 = vmatprep.subr.mxu0 0.0
        %2655 = vmatpush1.msra.mxu0 %v2640
        %2656 = vmatprep.subr.mxu0 0.0
        %2657 = vmatpush1.msra.mxu0 %v2639
        %2658 = vmatprep.subr.mxu0 0.0
        %2659 = vmatpush1.msra.mxu0 %v2638
        %2660 = vmatprep.subr.mxu0 0.0
        %2661 = vmatpush1.msra.mxu0 %v2637
        %2662 = vmatprep.subr.mxu0 0.0
        %2663 = vmatpush1.msra.mxu0 %v2636
        %2664 = vmatprep.subr.mxu0 0.0
        %2665 = vmatpush1.msra.mxu0 %v2635
        %2666 = vmatprep.subr.mxu0 0.0
        %2667 = vmatpush1.msra.mxu0 %v2634
        %2668 = vmatprep.subr.mxu0 0.0
        %2669 = vmatpush1.msra.mxu0 %v2633
        %2670 = vmatprep.subr.mxu0 0.0
        %2671 = vmatpush1.msra.mxu0 %v2632
        %2672 = vmatprep.subr.mxu0 0.0
        %2673 = vmatpush1.msra.mxu0 %v2631
        %2674 = vmatprep.subr.mxu0 0.0
        %2675 = vmatpush1.msra.mxu0 %v2630
        %2676 = vmatprep.subr.mxu0 0.0
        %2677 = vmatpush1.msra.mxu0 %v2629
        %2678 = vmatprep.subr.mxu0 0.0
        %2679 = vmatpush1.msra.mxu0 %v2628
        %2680 = vmatprep.subr.mxu0 0.0
        %2681 = vmatpush1.msra.mxu0 %v2627
        %2682 = vmatprep.subr.mxu0 0.0
        %2683 = vmatpush2.msra.mxu0 0.0
        %2684 = vmatprep.subr.mxu0 0.0
        %2685 = vmatpush2.msra.mxu0 0.0
        %2686 = vmatprep.subr.mxu0 0.0
        %2687 = vmatpush2.msra.mxu0 0.0
        %2688 = vmatprep.subr.mxu0 0.0
        %2689 = vmatpush2.msra.mxu0 0.0
        %2690 = vmatprep.subr.mxu0 0.0
        %2691 = vmatpush2.msra.mxu0 0.0
        %2692 = vmatprep.subr.mxu0 0.0
        %2693 = vmatpush2.msra.mxu0 0.0
        %2694 = vmatprep.subr.mxu0 0.0
        %2695 = vmatpush2.msra.mxu0 0.0
        %2696 = vmatprep.subr.mxu0 0.0
        %2697 = vmatpush2.msra.mxu0 0.0
        %2698 = vmatprep.subr.mxu0 0.0
        %2699 = vmatpush2.msra.mxu0 0.0
        %2700 = vmatprep.subr.mxu0 0.0
        %2701 = vmatpush2.msra.mxu0 0.0
        %2702 = vmatprep.subr.mxu0 0.0
        %2703 = vmatpush2.msra.mxu0 0.0
        %2704 = vmatprep.subr.mxu0 0.0
        %2705 = vmatpush2.msra.mxu0 0.0
        %2706 = vmatprep.subr.mxu0 0.0
        %2707 = vmatpush2.msra.mxu0 0.0
        %2708 = vmatprep.subr.mxu0 0.0
        %2709 = vmatpush2.msra.mxu0 0.0
        %2710 = vmatprep.subr.mxu0 0.0
        %2711 = vmatpush2.msra.mxu0 0.0
        %2712 = vmatprep.subr.mxu0 0.0
        %2713 = vmatpush2.msra.mxu0 0.0
        %2714 = vmatprep.mubr.f32.mxu0 0.0
        %2715 = vmatmul.mubr.f32.gmra.mxu0 %v2625
        %v2716 = vpop.f32.mrf.mxu0
        %v2717 = vadd.f32 %v2648, %v2716
        %v2718 = vpop.f32.mrf.mxu0
        %2719 = vmatprep.mubr.f32.mxu0 0.0
        %2720 = vmatmul.mubr.f32.gmra.mxu0 %v2626
        %v2721 = vpop.f32.mrf.mxu0
        %v2722 = vadd.f32 %v2648, %v2721
        %v2723 = vpop.f32.mrf.mxu0
        %2724 = vdwg.mxu0
        %s2725 = scalar_lea.vmem %s41, 1
        %v2726 = vld [vmem:[%s2725] sm:$0x1]
        %v2728 = vlaneseq
        %v2729 = vshrl.u32 %v2728, 7
        %v2730 = vsub.s32 0, %v2729
        %v2731 = vrot.slane %v2726, %v2730
        %v2733 = vmul.f32 %v2717, %v2731
        %v2734 = vmul.f32 %v2722, %v2731
        %v2735 = vld [vmem:[%s41] sm:$0x1]
        %v2737 = vlaneseq
        %v2738 = vshrl.u32 %v2737, 7
        %v2739 = vsub.s32 0, %v2738
        %v2740 = vrot.slane %v2735, %v2739
        %v2742 = vmul.f32 %v2717, %v2740
        %v2743 = vmul.f32 %v2722, %v2740
        %v2744 = vld [vmem:[#allocation5] sm:$0xff]
        %v2745 = vld [vmem:[#allocation5 + $0x8] sm:$0xff]
        %v2747 = vsel %vm1511, %v2744, 0
        %v2750 = vsel %vm1511, %v2745, 0
        %2752 = vmatprep.subr.mxu0 0.0
        %2753 = vmatpush1.msra.mxu0 0.0
        %2754 = vmatprep.subr.mxu0 0.0
        %2755 = vmatpush1.msra.mxu0 0.0
        %2756 = vmatprep.subr.mxu0 0.0
        %2757 = vmatpush1.msra.mxu0 0.0
        %2758 = vmatprep.subr.mxu0 0.0
        %2759 = vmatpush1.msra.mxu0 0.0
        %2760 = vmatprep.subr.mxu0 0.0
        %2761 = vmatpush1.msra.mxu0 0.0
        %2762 = vmatprep.subr.mxu0 0.0
        %2763 = vmatpush1.msra.mxu0 0.0
        %2764 = vmatprep.subr.mxu0 0.0
        %2765 = vmatpush1.msra.mxu0 0.0
        %2766 = vmatprep.subr.mxu0 0.0
        %2767 = vmatpush1.msra.mxu0 0.0
        %2768 = vmatprep.subr.mxu0 0.0
        %2769 = vmatpush1.msra.mxu0 0.0
        %2770 = vmatprep.subr.mxu0 0.0
        %2771 = vmatpush1.msra.mxu0 0.0
        %2772 = vmatprep.subr.mxu0 0.0
        %2773 = vmatpush1.msra.mxu0 0.0
        %2774 = vmatprep.subr.mxu0 0.0
        %2775 = vmatpush1.msra.mxu0 0.0
        %2776 = vmatprep.subr.mxu0 0.0
        %2777 = vmatpush1.msra.mxu0 0.0
        %2778 = vmatprep.subr.mxu0 0.0
        %2779 = vmatpush1.msra.mxu0 0.0
        %2780 = vmatprep.subr.mxu0 0.0
        %2781 = vmatpush1.msra.mxu0 %v2743
        %2782 = vmatprep.subr.mxu0 0.0
        %2783 = vmatpush1.msra.mxu0 %v2742
        %2784 = vmatprep.subr.mxu0 0.0
        %2785 = vmatpush2.msra.mxu0 0.0
        %2786 = vmatprep.subr.mxu0 0.0
        %2787 = vmatpush2.msra.mxu0 0.0
        %2788 = vmatprep.subr.mxu0 0.0
        %2789 = vmatpush2.msra.mxu0 0.0
        %2790 = vmatprep.subr.mxu0 0.0
        %2791 = vmatpush2.msra.mxu0 0.0
        %2792 = vmatprep.subr.mxu0 0.0
        %2793 = vmatpush2.msra.mxu0 0.0
        %2794 = vmatprep.subr.mxu0 0.0
        %2795 = vmatpush2.msra.mxu0 0.0
        %2796 = vmatprep.subr.mxu0 0.0
        %2797 = vmatpush2.msra.mxu0 0.0
        %2798 = vmatprep.subr.mxu0 0.0
        %2799 = vmatpush2.msra.mxu0 0.0
        %2800 = vmatprep.subr.mxu0 0.0
        %2801 = vmatpush2.msra.mxu0 0.0
        %2802 = vmatprep.subr.mxu0 0.0
        %2803 = vmatpush2.msra.mxu0 0.0
        %2804 = vmatprep.subr.mxu0 0.0
        %2805 = vmatpush2.msra.mxu0 0.0
        %2806 = vmatprep.subr.mxu0 0.0
        %2807 = vmatpush2.msra.mxu0 0.0
        %2808 = vmatprep.subr.mxu0 0.0
        %2809 = vmatpush2.msra.mxu0 0.0
        %2810 = vmatprep.subr.mxu0 0.0
        %2811 = vmatpush2.msra.mxu0 0.0
        %2812 = vmatprep.subr.mxu0 0.0
        %2813 = vmatpush2.msra.mxu0 0.0
        %2814 = vmatprep.subr.mxu0 0.0
        %2815 = vmatpush2.msra.mxu0 0.0
        %2816 = vmatprep.mubr.f32.mxu0 0.0
        %2817 = vmatmul.mubr.f32.gmra.mxu0 %v2747
        %v2818 = vpop.f32.mrf.mxu0
        %v2819 = vadd.f32 0.0, %v2818
        %v2820 = vpop.f32.mrf.mxu0
        %2821 = vmatprep.mubr.f32.mxu0 0.0
        %2822 = vmatmul.mubr.f32.gmra.mxu0 %v2750
        %v2823 = vpop.f32.mrf.mxu0
        %v2824 = vadd.f32 0.0, %v2823
        %v2825 = vpop.f32.mrf.mxu0
        %2826 = vdwg.mxu0
        %v2827 = vadd.f32 %v2733, %v2819
        %v2828 = vadd.f32 %v2734, %v2824
        %s2829 = scalar_lea.vmem %s41, 2
        %v2830 = vld [vmem:[%s2829] sm:$0x1]
        %v2832 = vlaneseq
        %v2833 = vshrl.u32 %v2832, 7
        %v2834 = vsub.s32 0, %v2833
        %v2835 = vrot.slane %v2830, %v2834
        %v2837 = vmul.f32 %v2717, %v2835
        %v2838 = vmul.f32 %v2722, %v2835
        %s2839 = scalar_lea.vmem [#allocation5], 48
        %v2840 = vld [vmem:[%s2839] sm:$0xff]
        %v2841 = vld [vmem:[%s2839 + $0x8] sm:$0xff]
        %v2843 = vsel %vm1511, %v2840, 0
        %v2846 = vsel %vm1511, %v2841, 0
        %2848 = vmatprep.subr.mxu0 0.0
        %2849 = vmatpush1.msra.mxu0 0.0
        %2850 = vmatprep.subr.mxu0 0.0
        %2851 = vmatpush1.msra.mxu0 0.0
        %2852 = vmatprep.subr.mxu0 0.0
        %2853 = vmatpush1.msra.mxu0 0.0
        %2854 = vmatprep.subr.mxu0 0.0
        %2855 = vmatpush1.msra.mxu0 0.0
        %2856 = vmatprep.subr.mxu0 0.0
        %2857 = vmatpush1.msra.mxu0 0.0
        %2858 = vmatprep.subr.mxu0 0.0
        %2859 = vmatpush1.msra.mxu0 0.0
        %2860 = vmatprep.subr.mxu0 0.0
        %2861 = vmatpush1.msra.mxu0 0.0
        %2862 = vmatprep.subr.mxu0 0.0
        %2863 = vmatpush1.msra.mxu0 0.0
        %2864 = vmatprep.subr.mxu0 0.0
        %2865 = vmatpush1.msra.mxu0 0.0
        %2866 = vmatprep.subr.mxu0 0.0
        %2867 = vmatpush1.msra.mxu0 0.0
        %2868 = vmatprep.subr.mxu0 0.0
        %2869 = vmatpush1.msra.mxu0 0.0
        %2870 = vmatprep.subr.mxu0 0.0
        %2871 = vmatpush1.msra.mxu0 0.0
        %2872 = vmatprep.subr.mxu0 0.0
        %2873 = vmatpush1.msra.mxu0 0.0
        %2874 = vmatprep.subr.mxu0 0.0
        %2875 = vmatpush1.msra.mxu0 0.0
        %2876 = vmatprep.subr.mxu0 0.0
        %2877 = vmatpush1.msra.mxu0 %v2838
        %2878 = vmatprep.subr.mxu0 0.0
        %2879 = vmatpush1.msra.mxu0 %v2837
        %2880 = vmatprep.subr.mxu0 0.0
        %2881 = vmatpush2.msra.mxu0 0.0
        %2882 = vmatprep.subr.mxu0 0.0
        %2883 = vmatpush2.msra.mxu0 0.0
        %2884 = vmatprep.subr.mxu0 0.0
        %2885 = vmatpush2.msra.mxu0 0.0
        %2886 = vmatprep.subr.mxu0 0.0
        %2887 = vmatpush2.msra.mxu0 0.0
        %2888 = vmatprep.subr.mxu0 0.0
        %2889 = vmatpush2.msra.mxu0 0.0
        %2890 = vmatprep.subr.mxu0 0.0
        %2891 = vmatpush2.msra.mxu0 0.0
        %2892 = vmatprep.subr.mxu0 0.0
        %2893 = vmatpush2.msra.mxu0 0.0
        %2894 = vmatprep.subr.mxu0 0.0
        %2895 = vmatpush2.msra.mxu0 0.0
        %2896 = vmatprep.subr.mxu0 0.0
        %2897 = vmatpush2.msra.mxu0 0.0
        %2898 = vmatprep.subr.mxu0 0.0
        %2899 = vmatpush2.msra.mxu0 0.0
        %2900 = vmatprep.subr.mxu0 0.0
        %2901 = vmatpush2.msra.mxu0 0.0
        %2902 = vmatprep.subr.mxu0 0.0
        %2903 = vmatpush2.msra.mxu0 0.0
        %2904 = vmatprep.subr.mxu0 0.0
        %2905 = vmatpush2.msra.mxu0 0.0
        %2906 = vmatprep.subr.mxu0 0.0
        %2907 = vmatpush2.msra.mxu0 0.0
        %2908 = vmatprep.subr.mxu0 0.0
        %2909 = vmatpush2.msra.mxu0 0.0
        %2910 = vmatprep.subr.mxu0 0.0
        %2911 = vmatpush2.msra.mxu0 0.0
        %2912 = vmatprep.mubr.f32.mxu0 0.0
        %2913 = vmatmul.mubr.f32.gmra.mxu0 %v2843
        %v2914 = vpop.f32.mrf.mxu0
        %v2915 = vadd.f32 0.0, %v2914
        %v2916 = vpop.f32.mrf.mxu0
        %2917 = vmatprep.mubr.f32.mxu0 0.0
        %2918 = vmatmul.mubr.f32.gmra.mxu0 %v2846
        %v2919 = vpop.f32.mrf.mxu0
        %v2920 = vadd.f32 0.0, %v2919
        %v2921 = vpop.f32.mrf.mxu0
        %2922 = vdwg.mxu0
        %v2923 = vadd.f32 %v2827, %v2915
        %v2924 = vadd.f32 %v2828, %v2920
        %v2925 = vld [vmem:[%s43] sm:$0x1]
        %v2927 = vlaneseq
        %v2928 = vshrl.u32 %v2927, 7
        %v2929 = vsub.s32 0, %v2928
        %v2930 = vrot.slane %v2925, %v2929
        %v2932 = vadd.f32 %v2923, %v2930
        %v2933 = vadd.f32 %v2924, %v2930
        %v2934 = vld [vmem:[#allocation20] sm:$0xff]
        %v2935 = vld [vmem:[#allocation20 + $0x8] sm:$0xff]
        %v2936 = vld [vmem:[#allocation20 + $0x10] sm:$0xff]
        %v2937 = vld [vmem:[#allocation20 + $0x18] sm:$0xff]
        %v2938 = vld [vmem:[#allocation20 + $0x20] sm:$0xff]
        %v2939 = vld [vmem:[#allocation20 + $0x28] sm:$0xff]
        %v2940 = vld [vmem:[#allocation20 + $0x30] sm:$0xff]
        %v2941 = vld [vmem:[#allocation20 + $0x38] sm:$0xff]
        %v2942 = vld [vmem:[#allocation20 + $0x40] sm:$0xff]
        %v2943 = vld [vmem:[#allocation20 + $0x48] sm:$0xff]
        %v2944 = vld [vmem:[#allocation20 + $0x50] sm:$0xff]
        %v2945 = vld [vmem:[#allocation20 + $0x58] sm:$0xff]
        %v2946 = vld [vmem:[#allocation20 + $0x60] sm:$0xff]
        %v2947 = vld [vmem:[#allocation20 + $0x68] sm:$0xff]
        %v2948 = vld [vmem:[#allocation20 + $0x70] sm:$0xff]
        %v2949 = vld [vmem:[#allocation20 + $0x78] sm:$0xff]
        %v2950 = vld [vmem:[%s47] sm:$0x1]
        %v2952 = vlaneseq
        %v2953 = vshrl.u32 %v2952, 7
        %v2954 = vsub.s32 0, %v2953
        %v2955 = vrot.slane %v2950, %v2954
        %2957 = vmatprep.subr.mxu0 0.0
        %2958 = vmatpush1.msra.mxu0 %v2949
        %2959 = vmatprep.subr.mxu0 0.0
        %2960 = vmatpush1.msra.mxu0 %v2948
        %2961 = vmatprep.subr.mxu0 0.0
        %2962 = vmatpush1.msra.mxu0 %v2947
        %2963 = vmatprep.subr.mxu0 0.0
        %2964 = vmatpush1.msra.mxu0 %v2946
        %2965 = vmatprep.subr.mxu0 0.0
        %2966 = vmatpush1.msra.mxu0 %v2945
        %2967 = vmatprep.subr.mxu0 0.0
        %2968 = vmatpush1.msra.mxu0 %v2944
        %2969 = vmatprep.subr.mxu0 0.0
        %2970 = vmatpush1.msra.mxu0 %v2943
        %2971 = vmatprep.subr.mxu0 0.0
        %2972 = vmatpush1.msra.mxu0 %v2942
        %2973 = vmatprep.subr.mxu0 0.0
        %2974 = vmatpush1.msra.mxu0 %v2941
        %2975 = vmatprep.subr.mxu0 0.0
        %2976 = vmatpush1.msra.mxu0 %v2940
        %2977 = vmatprep.subr.mxu0 0.0
        %2978 = vmatpush1.msra.mxu0 %v2939
        %2979 = vmatprep.subr.mxu0 0.0
        %2980 = vmatpush1.msra.mxu0 %v2938
        %2981 = vmatprep.subr.mxu0 0.0
        %2982 = vmatpush1.msra.mxu0 %v2937
        %2983 = vmatprep.subr.mxu0 0.0
        %2984 = vmatpush1.msra.mxu0 %v2936
        %2985 = vmatprep.subr.mxu0 0.0
        %2986 = vmatpush1.msra.mxu0 %v2935
        %2987 = vmatprep.subr.mxu0 0.0
        %2988 = vmatpush1.msra.mxu0 %v2934
        %2989 = vmatprep.subr.mxu0 0.0
        %2990 = vmatpush2.msra.mxu0 0.0
        %2991 = vmatprep.subr.mxu0 0.0
        %2992 = vmatpush2.msra.mxu0 0.0
        %2993 = vmatprep.subr.mxu0 0.0
        %2994 = vmatpush2.msra.mxu0 0.0
        %2995 = vmatprep.subr.mxu0 0.0
        %2996 = vmatpush2.msra.mxu0 0.0
        %2997 = vmatprep.subr.mxu0 0.0
        %2998 = vmatpush2.msra.mxu0 0.0
        %2999 = vmatprep.subr.mxu0 0.0
        %3000 = vmatpush2.msra.mxu0 0.0
        %3001 = vmatprep.subr.mxu0 0.0
        %3002 = vmatpush2.msra.mxu0 0.0
        %3003 = vmatprep.subr.mxu0 0.0
        %3004 = vmatpush2.msra.mxu0 0.0
        %3005 = vmatprep.subr.mxu0 0.0
        %3006 = vmatpush2.msra.mxu0 0.0
        %3007 = vmatprep.subr.mxu0 0.0
        %3008 = vmatpush2.msra.mxu0 0.0
        %3009 = vmatprep.subr.mxu0 0.0
        %3010 = vmatpush2.msra.mxu0 0.0
        %3011 = vmatprep.subr.mxu0 0.0
        %3012 = vmatpush2.msra.mxu0 0.0
        %3013 = vmatprep.subr.mxu0 0.0
        %3014 = vmatpush2.msra.mxu0 0.0
        %3015 = vmatprep.subr.mxu0 0.0
        %3016 = vmatpush2.msra.mxu0 0.0
        %3017 = vmatprep.subr.mxu0 0.0
        %3018 = vmatpush2.msra.mxu0 0.0
        %3019 = vmatprep.subr.mxu0 0.0
        %3020 = vmatpush2.msra.mxu0 0.0
        %3021 = vmatprep.mubr.f32.mxu0 0.0
        %3022 = vmatmul.mubr.f32.gmra.mxu0 %v2932
        %v3023 = vpop.f32.mrf.mxu0
        %v3024 = vadd.f32 %v2955, %v3023
        %v3025 = vpop.f32.mrf.mxu0
        %3026 = vmatprep.mubr.f32.mxu0 0.0
        %3027 = vmatmul.mubr.f32.gmra.mxu0 %v2933
        %v3028 = vpop.f32.mrf.mxu0
        %v3029 = vadd.f32 %v2955, %v3028
        %v3030 = vpop.f32.mrf.mxu0
        %3031 = vdwg.mxu0
        %v3032 = vmul.f32 %v2335, %v3024
        %v3033 = vmul.f32 %v2336, %v3029
        %v3034 = vld [vmem:[#allocation22] sm:$0xff]
        %v3035 = vld [vmem:[#allocation22 + $0x8] sm:$0xff]
        %v3036 = vld [vmem:[#allocation22 + $0x10] sm:$0xff]
        %v3037 = vld [vmem:[#allocation22 + $0x18] sm:$0xff]
        %v3038 = vld [vmem:[#allocation22 + $0x20] sm:$0xff]
        %v3039 = vld [vmem:[#allocation22 + $0x28] sm:$0xff]
        %v3040 = vld [vmem:[#allocation22 + $0x30] sm:$0xff]
        %v3041 = vld [vmem:[#allocation22 + $0x38] sm:$0xff]
        %v3042 = vld [vmem:[#allocation22 + $0x40] sm:$0xff]
        %v3043 = vld [vmem:[#allocation22 + $0x48] sm:$0xff]
        %v3044 = vld [vmem:[#allocation22 + $0x50] sm:$0xff]
        %v3045 = vld [vmem:[#allocation22 + $0x58] sm:$0xff]
        %v3046 = vld [vmem:[#allocation22 + $0x60] sm:$0xff]
        %v3047 = vld [vmem:[#allocation22 + $0x68] sm:$0xff]
        %v3048 = vld [vmem:[#allocation22 + $0x70] sm:$0xff]
        %v3049 = vld [vmem:[#allocation22 + $0x78] sm:$0xff]
        %v3050 = vld [vmem:[#allocation22 + $0x80] sm:$0xff]
        %v3051 = vld [vmem:[#allocation22 + $0x88] sm:$0xff]
        %v3052 = vld [vmem:[#allocation22 + $0x90] sm:$0xff]
        %v3053 = vld [vmem:[#allocation22 + $0x98] sm:$0xff]
        %v3054 = vld [vmem:[#allocation22 + $0xa0] sm:$0xff]
        %v3055 = vld [vmem:[#allocation22 + $0xa8] sm:$0xff]
        %v3056 = vld [vmem:[#allocation22 + $0xb0] sm:$0xff]
        %v3057 = vld [vmem:[#allocation22 + $0xb8] sm:$0xff]
        %v3058 = vld [vmem:[#allocation22 + $0xc0] sm:$0xff]
        %v3059 = vld [vmem:[#allocation22 + $0xc8] sm:$0xff]
        %v3060 = vld [vmem:[#allocation22 + $0xd0] sm:$0xff]
        %v3061 = vld [vmem:[#allocation22 + $0xd8] sm:$0xff]
        %v3062 = vld [vmem:[#allocation22 + $0xe0] sm:$0xff]
        %v3063 = vld [vmem:[#allocation22 + $0xe8] sm:$0xff]
        %v3064 = vld [vmem:[#allocation22 + $0xf0] sm:$0xff]
        %v3065 = vld [vmem:[#allocation22 + $0xf8] sm:$0xff]
        %v3066 = vld [vmem:[#allocation23] sm:$0xff]
        %v3067 = vld [vmem:[#allocation23 + $0x8] sm:$0xff]
        %v3068 = vld [vmem:[#allocation23 + $0x10] sm:$0xff]
        %v3069 = vld [vmem:[#allocation23 + $0x18] sm:$0xff]
        %v3070 = vld [vmem:[#allocation23 + $0x20] sm:$0xff]
        %v3071 = vld [vmem:[#allocation23 + $0x28] sm:$0xff]
        %v3072 = vld [vmem:[#allocation23 + $0x30] sm:$0xff]
        %v3073 = vld [vmem:[#allocation23 + $0x38] sm:$0xff]
        %v3074 = vld [vmem:[#allocation23 + $0x40] sm:$0xff]
        %v3075 = vld [vmem:[#allocation23 + $0x48] sm:$0xff]
        %v3076 = vld [vmem:[#allocation23 + $0x50] sm:$0xff]
        %v3077 = vld [vmem:[#allocation23 + $0x58] sm:$0xff]
        %v3078 = vld [vmem:[#allocation23 + $0x60] sm:$0xff]
        %v3079 = vld [vmem:[#allocation23 + $0x68] sm:$0xff]
        %v3080 = vld [vmem:[#allocation23 + $0x70] sm:$0xff]
        %v3081 = vld [vmem:[#allocation23 + $0x78] sm:$0xff]
        %v3082 = vld [vmem:[#allocation23 + $0x80] sm:$0xff]
        %v3083 = vld [vmem:[#allocation23 + $0x88] sm:$0xff]
        %v3084 = vld [vmem:[#allocation23 + $0x90] sm:$0xff]
        %v3085 = vld [vmem:[#allocation23 + $0x98] sm:$0xff]
        %v3086 = vld [vmem:[#allocation23 + $0xa0] sm:$0xff]
        %v3087 = vld [vmem:[#allocation23 + $0xa8] sm:$0xff]
        %v3088 = vld [vmem:[#allocation23 + $0xb0] sm:$0xff]
        %v3089 = vld [vmem:[#allocation23 + $0xb8] sm:$0xff]
        %v3090 = vld [vmem:[#allocation23 + $0xc0] sm:$0xff]
        %v3091 = vld [vmem:[#allocation23 + $0xc8] sm:$0xff]
        %v3092 = vld [vmem:[#allocation23 + $0xd0] sm:$0xff]
        %v3093 = vld [vmem:[#allocation23 + $0xd8] sm:$0xff]
        %v3094 = vld [vmem:[#allocation23 + $0xe0] sm:$0xff]
        %v3095 = vld [vmem:[#allocation23 + $0xe8] sm:$0xff]
        %v3096 = vld [vmem:[#allocation23 + $0xf0] sm:$0xff]
        %v3097 = vld [vmem:[#allocation23 + $0xf8] sm:$0xff]
        %3098 = vmatprep.subr.mxu0 %v3097
        %3099 = vmatpush1.msra.mxu0 %v3096
        %3100 = vmatprep.subr.mxu0 %v3095
        %3101 = vmatpush1.msra.mxu0 %v3094
        %3102 = vmatprep.subr.mxu0 %v3093
        %3103 = vmatpush1.msra.mxu0 %v3092
        %3104 = vmatprep.subr.mxu0 %v3091
        %3105 = vmatpush1.msra.mxu0 %v3090
        %3106 = vmatprep.subr.mxu0 %v3089
        %3107 = vmatpush1.msra.mxu0 %v3088
        %3108 = vmatprep.subr.mxu0 %v3087
        %3109 = vmatpush1.msra.mxu0 %v3086
        %3110 = vmatprep.subr.mxu0 %v3085
        %3111 = vmatpush1.msra.mxu0 %v3084
        %3112 = vmatprep.subr.mxu0 %v3083
        %3113 = vmatpush1.msra.mxu0 %v3082
        %3114 = vmatprep.subr.mxu0 %v3081
        %3115 = vmatpush1.msra.mxu0 %v3080
        %3116 = vmatprep.subr.mxu0 %v3079
        %3117 = vmatpush1.msra.mxu0 %v3078
        %3118 = vmatprep.subr.mxu0 %v3077
        %3119 = vmatpush1.msra.mxu0 %v3076
        %3120 = vmatprep.subr.mxu0 %v3075
        %3121 = vmatpush1.msra.mxu0 %v3074
        %3122 = vmatprep.subr.mxu0 %v3073
        %3123 = vmatpush1.msra.mxu0 %v3072
        %3124 = vmatprep.subr.mxu0 %v3071
        %3125 = vmatpush1.msra.mxu0 %v3070
        %3126 = vmatprep.subr.mxu0 %v3069
        %3127 = vmatpush1.msra.mxu0 %v3068
        %3128 = vmatprep.subr.mxu0 %v3067
        %3129 = vmatpush1.msra.mxu0 %v3066
        %3130 = vmatprep.subr.mxu0 0.0
        %3131 = vmatpush2.msra.mxu0 0.0
        %3132 = vmatprep.subr.mxu0 0.0
        %3133 = vmatpush2.msra.mxu0 0.0
        %3134 = vmatprep.subr.mxu0 0.0
        %3135 = vmatpush2.msra.mxu0 0.0
        %3136 = vmatprep.subr.mxu0 0.0
        %3137 = vmatpush2.msra.mxu0 0.0
        %3138 = vmatprep.subr.mxu0 0.0
        %3139 = vmatpush2.msra.mxu0 0.0
        %3140 = vmatprep.subr.mxu0 0.0
        %3141 = vmatpush2.msra.mxu0 0.0
        %3142 = vmatprep.subr.mxu0 0.0
        %3143 = vmatpush2.msra.mxu0 0.0
        %3144 = vmatprep.subr.mxu0 0.0
        %3145 = vmatpush2.msra.mxu0 0.0
        %3146 = vmatprep.subr.mxu0 0.0
        %3147 = vmatpush2.msra.mxu0 0.0
        %3148 = vmatprep.subr.mxu0 0.0
        %3149 = vmatpush2.msra.mxu0 0.0
        %3150 = vmatprep.subr.mxu0 0.0
        %3151 = vmatpush2.msra.mxu0 0.0
        %3152 = vmatprep.subr.mxu0 0.0
        %3153 = vmatpush2.msra.mxu0 0.0
        %3154 = vmatprep.subr.mxu0 0.0
        %3155 = vmatpush2.msra.mxu0 0.0
        %3156 = vmatprep.subr.mxu0 0.0
        %3157 = vmatpush2.msra.mxu0 0.0
        %3158 = vmatprep.subr.mxu0 0.0
        %3159 = vmatpush2.msra.mxu0 0.0
        %3160 = vmatprep.subr.mxu0 0.0
        %3161 = vmatpush2.msra.mxu0 0.0
        %3162 = vmatprep.mubr.f32.mxu0 0.0
        %3163 = vmatmul.mubr.f32.gmra.mxu0 %v1398
        %v3164 = vpop.f32.mrf.mxu0
        %v3165 = vadd.f32 0.0, %v3164
        %v3166 = vpop.f32.mrf.mxu0
        %v3167 = vadd.f32 0.0, %v3166
        %3168 = vmatprep.mubr.f32.mxu0 0.0
        %3169 = vmatmul.mubr.f32.gmra.mxu0 %v1399
        %v3170 = vpop.f32.mrf.mxu0
        %v3171 = vadd.f32 0.0, %v3170
        %v3172 = vpop.f32.mrf.mxu0
        %v3173 = vadd.f32 0.0, %v3172
        %3174 = vdwg.mxu0
        %3175 = vmatprep.subr.mxu0 %v3065
        %3176 = vmatpush1.msra.mxu0 %v3064
        %3177 = vmatprep.subr.mxu0 %v3063
        %3178 = vmatpush1.msra.mxu0 %v3062
        %3179 = vmatprep.subr.mxu0 %v3061
        %3180 = vmatpush1.msra.mxu0 %v3060
        %3181 = vmatprep.subr.mxu0 %v3059
        %3182 = vmatpush1.msra.mxu0 %v3058
        %3183 = vmatprep.subr.mxu0 %v3057
        %3184 = vmatpush1.msra.mxu0 %v3056
        %3185 = vmatprep.subr.mxu0 %v3055
        %3186 = vmatpush1.msra.mxu0 %v3054
        %3187 = vmatprep.subr.mxu0 %v3053
        %3188 = vmatpush1.msra.mxu0 %v3052
        %3189 = vmatprep.subr.mxu0 %v3051
        %3190 = vmatpush1.msra.mxu0 %v3050
        %3191 = vmatprep.subr.mxu0 %v3049
        %3192 = vmatpush1.msra.mxu0 %v3048
        %3193 = vmatprep.subr.mxu0 %v3047
        %3194 = vmatpush1.msra.mxu0 %v3046
        %3195 = vmatprep.subr.mxu0 %v3045
        %3196 = vmatpush1.msra.mxu0 %v3044
        %3197 = vmatprep.subr.mxu0 %v3043
        %3198 = vmatpush1.msra.mxu0 %v3042
        %3199 = vmatprep.subr.mxu0 %v3041
        %3200 = vmatpush1.msra.mxu0 %v3040
        %3201 = vmatprep.subr.mxu0 %v3039
        %3202 = vmatpush1.msra.mxu0 %v3038
        %3203 = vmatprep.subr.mxu0 %v3037
        %3204 = vmatpush1.msra.mxu0 %v3036
        %3205 = vmatprep.subr.mxu0 %v3035
        %3206 = vmatpush1.msra.mxu0 %v3034
        %3207 = vmatprep.subr.mxu0 0.0
        %3208 = vmatpush2.msra.mxu0 0.0
        %3209 = vmatprep.subr.mxu0 0.0
        %3210 = vmatpush2.msra.mxu0 0.0
        %3211 = vmatprep.subr.mxu0 0.0
        %3212 = vmatpush2.msra.mxu0 0.0
        %3213 = vmatprep.subr.mxu0 0.0
        %3214 = vmatpush2.msra.mxu0 0.0
        %3215 = vmatprep.subr.mxu0 0.0
        %3216 = vmatpush2.msra.mxu0 0.0
        %3217 = vmatprep.subr.mxu0 0.0
        %3218 = vmatpush2.msra.mxu0 0.0
        %3219 = vmatprep.subr.mxu0 0.0
        %3220 = vmatpush2.msra.mxu0 0.0
        %3221 = vmatprep.subr.mxu0 0.0
        %3222 = vmatpush2.msra.mxu0 0.0
        %3223 = vmatprep.subr.mxu0 0.0
        %3224 = vmatpush2.msra.mxu0 0.0
        %3225 = vmatprep.subr.mxu0 0.0
        %3226 = vmatpush2.msra.mxu0 0.0
        %3227 = vmatprep.subr.mxu0 0.0
        %3228 = vmatpush2.msra.mxu0 0.0
        %3229 = vmatprep.subr.mxu0 0.0
        %3230 = vmatpush2.msra.mxu0 0.0
        %3231 = vmatprep.subr.mxu0 0.0
        %3232 = vmatpush2.msra.mxu0 0.0
        %3233 = vmatprep.subr.mxu0 0.0
        %3234 = vmatpush2.msra.mxu0 0.0
        %3235 = vmatprep.subr.mxu0 0.0
        %3236 = vmatpush2.msra.mxu0 0.0
        %3237 = vmatprep.subr.mxu0 0.0
        %3238 = vmatpush2.msra.mxu0 0.0
        %3239 = vmatprep.mubr.f32.mxu0 0.0
        %3240 = vmatmul.mubr.f32.gmra.mxu0 %v1259
        %v3241 = vpop.f32.mrf.mxu0
        %v3242 = vadd.f32 %v3165, %v3241
        %v3243 = vpop.f32.mrf.mxu0
        %v3244 = vadd.f32 %v3167, %v3243
        %3245 = vmatprep.mubr.f32.mxu0 0.0
        %3246 = vmatmul.mubr.f32.gmra.mxu0 %v1260
        %v3247 = vpop.f32.mrf.mxu0
        %v3248 = vadd.f32 %v3171, %v3247
        %v3249 = vpop.f32.mrf.mxu0
        %v3250 = vadd.f32 %v3173, %v3249
        %3251 = vdwg.mxu0
        %v3252 = vld [vmem:[#allocation25] sm:$0xff]
        %v3253 = vld [vmem:[#allocation25 + $0x8] sm:$0xff]
        %v3254 = vld [vmem:[#allocation25 + $0x10] sm:$0xff]
        %v3255 = vld [vmem:[#allocation25 + $0x18] sm:$0xff]
        %v3256 = vld [vmem:[#allocation25 + $0x20] sm:$0xff]
        %v3257 = vld [vmem:[#allocation25 + $0x28] sm:$0xff]
        %v3258 = vld [vmem:[#allocation25 + $0x30] sm:$0xff]
        %v3259 = vld [vmem:[#allocation25 + $0x38] sm:$0xff]
        %v3260 = vld [vmem:[#allocation25 + $0x40] sm:$0xff]
        %v3261 = vld [vmem:[#allocation25 + $0x48] sm:$0xff]
        %v3262 = vld [vmem:[#allocation25 + $0x50] sm:$0xff]
        %v3263 = vld [vmem:[#allocation25 + $0x58] sm:$0xff]
        %v3264 = vld [vmem:[#allocation25 + $0x60] sm:$0xff]
        %v3265 = vld [vmem:[#allocation25 + $0x68] sm:$0xff]
        %v3266 = vld [vmem:[#allocation25 + $0x70] sm:$0xff]
        %v3267 = vld [vmem:[#allocation25 + $0x78] sm:$0xff]
        %v3268 = vld [vmem:[#allocation25 + $0x80] sm:$0xff]
        %v3269 = vld [vmem:[#allocation25 + $0x88] sm:$0xff]
        %v3270 = vld [vmem:[#allocation25 + $0x90] sm:$0xff]
        %v3271 = vld [vmem:[#allocation25 + $0x98] sm:$0xff]
        %v3272 = vld [vmem:[#allocation25 + $0xa0] sm:$0xff]
        %v3273 = vld [vmem:[#allocation25 + $0xa8] sm:$0xff]
        %v3274 = vld [vmem:[#allocation25 + $0xb0] sm:$0xff]
        %v3275 = vld [vmem:[#allocation25 + $0xb8] sm:$0xff]
        %v3276 = vld [vmem:[#allocation25 + $0xc0] sm:$0xff]
        %v3277 = vld [vmem:[#allocation25 + $0xc8] sm:$0xff]
        %v3278 = vld [vmem:[#allocation25 + $0xd0] sm:$0xff]
        %v3279 = vld [vmem:[#allocation25 + $0xd8] sm:$0xff]
        %v3280 = vld [vmem:[#allocation25 + $0xe0] sm:$0xff]
        %v3281 = vld [vmem:[#allocation25 + $0xe8] sm:$0xff]
        %v3282 = vld [vmem:[#allocation25 + $0xf0] sm:$0xff]
        %v3283 = vld [vmem:[#allocation25 + $0xf8] sm:$0xff]
        %3284 = vmatprep.subr.mxu0 %v3283
        %3285 = vmatpush1.msra.mxu0 %v3282
        %3286 = vmatprep.subr.mxu0 %v3281
        %3287 = vmatpush1.msra.mxu0 %v3280
        %3288 = vmatprep.subr.mxu0 %v3279
        %3289 = vmatpush1.msra.mxu0 %v3278
        %3290 = vmatprep.subr.mxu0 %v3277
        %3291 = vmatpush1.msra.mxu0 %v3276
        %3292 = vmatprep.subr.mxu0 %v3275
        %3293 = vmatpush1.msra.mxu0 %v3274
        %3294 = vmatprep.subr.mxu0 %v3273
        %3295 = vmatpush1.msra.mxu0 %v3272
        %3296 = vmatprep.subr.mxu0 %v3271
        %3297 = vmatpush1.msra.mxu0 %v3270
        %3298 = vmatprep.subr.mxu0 %v3269
        %3299 = vmatpush1.msra.mxu0 %v3268
        %3300 = vmatprep.subr.mxu0 %v3267
        %3301 = vmatpush1.msra.mxu0 %v3266
        %3302 = vmatprep.subr.mxu0 %v3265
        %3303 = vmatpush1.msra.mxu0 %v3264
        %3304 = vmatprep.subr.mxu0 %v3263
        %3305 = vmatpush1.msra.mxu0 %v3262
        %3306 = vmatprep.subr.mxu0 %v3261
        %3307 = vmatpush1.msra.mxu0 %v3260
        %3308 = vmatprep.subr.mxu0 %v3259
        %3309 = vmatpush1.msra.mxu0 %v3258
        %3310 = vmatprep.subr.mxu0 %v3257
        %3311 = vmatpush1.msra.mxu0 %v3256
        %3312 = vmatprep.subr.mxu0 %v3255
        %3313 = vmatpush1.msra.mxu0 %v3254
        %3314 = vmatprep.subr.mxu0 %v3253
        %3315 = vmatpush1.msra.mxu0 %v3252
        %3316 = vmatprep.subr.mxu0 0.0
        %3317 = vmatpush2.msra.mxu0 0.0
        %3318 = vmatprep.subr.mxu0 0.0
        %3319 = vmatpush2.msra.mxu0 0.0
        %3320 = vmatprep.subr.mxu0 0.0
        %3321 = vmatpush2.msra.mxu0 0.0
        %3322 = vmatprep.subr.mxu0 0.0
        %3323 = vmatpush2.msra.mxu0 0.0
        %3324 = vmatprep.subr.mxu0 0.0
        %3325 = vmatpush2.msra.mxu0 0.0
        %3326 = vmatprep.subr.mxu0 0.0
        %3327 = vmatpush2.msra.mxu0 0.0
        %3328 = vmatprep.subr.mxu0 0.0
        %3329 = vmatpush2.msra.mxu0 0.0
        %3330 = vmatprep.subr.mxu0 0.0
        %3331 = vmatpush2.msra.mxu0 0.0
        %3332 = vmatprep.subr.mxu0 0.0
        %3333 = vmatpush2.msra.mxu0 0.0
        %3334 = vmatprep.subr.mxu0 0.0
        %3335 = vmatpush2.msra.mxu0 0.0
        %3336 = vmatprep.subr.mxu0 0.0
        %3337 = vmatpush2.msra.mxu0 0.0
        %3338 = vmatprep.subr.mxu0 0.0
        %3339 = vmatpush2.msra.mxu0 0.0
        %3340 = vmatprep.subr.mxu0 0.0
        %3341 = vmatpush2.msra.mxu0 0.0
        %3342 = vmatprep.subr.mxu0 0.0
        %3343 = vmatpush2.msra.mxu0 0.0
        %3344 = vmatprep.subr.mxu0 0.0
        %3345 = vmatpush2.msra.mxu0 0.0
        %3346 = vmatprep.subr.mxu0 0.0
        %3347 = vmatpush2.msra.mxu0 0.0
        %3348 = vmatprep.mubr.f32.mxu0 0.0
        %3349 = vmatmul.mubr.f32.gmra.mxu0 %v3032
        %v3350 = vpop.f32.mrf.mxu0
        %v3351 = vadd.f32 0.0, %v3350
        %v3352 = vpop.f32.mrf.mxu0
        %v3353 = vadd.f32 0.0, %v3352
        %3354 = vmatprep.mubr.f32.mxu0 0.0
        %3355 = vmatmul.mubr.f32.gmra.mxu0 %v3033
        %v3356 = vpop.f32.mrf.mxu0
        %v3357 = vadd.f32 0.0, %v3356
        %v3358 = vpop.f32.mrf.mxu0
        %v3359 = vadd.f32 0.0, %v3358
        %3360 = vdwg.mxu0
        %v3361 = vadd.f32 %v3242, %v3351
        %v3362 = vadd.f32 %v3244, %v3353
        %v3363 = vadd.f32 %v3248, %v3357
        %v3364 = vadd.f32 %v3250, %v3359
        %v3365 = vld [vmem:[%s55] sm:$0x3]
        %v3367 = vlaneseq
        %v3368 = vshrl.u32 %v3367, 7
        %v3369 = vsub.s32 0, %v3368
        %v3370 = vrot.slane %v3365, %v3369
        %v3371 = vlaneseq
        %v3372 = vshrl.u32 %v3371, 7
        %v3373 = vsub.s32 1, %v3372
        %v3374 = vrot.slane %v3365, %v3373
        %v3377 = vmul.f32 %v3361, %v3370
        %v3378 = vmul.f32 %v3362, %v3374
        %v3379 = vmul.f32 %v3363, %v3370
        %v3380 = vmul.f32 %v3364, %v3374
        %v3381 = vld [vmem:[%s57] sm:$0x3]
        %v3383 = vlaneseq
        %v3384 = vshrl.u32 %v3383, 7
        %v3385 = vsub.s32 0, %v3384
        %v3386 = vrot.slane %v3381, %v3385
        %v3387 = vlaneseq
        %v3388 = vshrl.u32 %v3387, 7
        %v3389 = vsub.s32 1, %v3388
        %v3390 = vrot.slane %v3381, %v3389
        %v3393 = vadd.f32 %v3377, %v3386
        %v3394 = vadd.f32 %v3378, %v3390
        %v3395 = vadd.f32 %v3379, %v3386
        %v3396 = vadd.f32 %v3380, %v3390
        %v3397 = vxor.u32 %v3393, 2147483648
        %v3398 = vxor.u32 %v3394, 2147483648
        %v3399 = vxor.u32 %v3395, 2147483648
        %v3400 = vxor.u32 %v3396, 2147483648
        %v3401 = vmul.f32 %v3397, 1.442695
        %v3402 = vpow.pop %v3401
        %v3403 = vmul.f32 %v3398, 1.442695
        %v3404 = vpow.pop %v3403
        %v3405 = vmul.f32 %v3399, 1.442695
        %v3406 = vpow.pop %v3405
        %v3407 = vmul.f32 %v3400, 1.442695
        %v3408 = vpow.pop %v3407
        %v3409 = vadd.f32 %v3402, 1.0
        %v3410 = vadd.f32 %v3404, 1.0
        %v3411 = vadd.f32 %v3406, 1.0
        %v3412 = vadd.f32 %v3408, 1.0
        %v3413 = vrcp.pop %v3409
        %v3414 = vmul.f32 1.0, %v3413
        %v3415 = vrcp.pop %v3410
        %v3416 = vmul.f32 1.0, %v3415
        %v3417 = vrcp.pop %v3411
        %v3418 = vmul.f32 1.0, %v3417
        %v3419 = vrcp.pop %v3412
        %v3420 = vmul.f32 1.0, %v3419
        %v3421 = vmul.f32 %v3393, %v3414
        %v3422 = vmul.f32 %v3394, %v3416
        %v3423 = vmul.f32 %v3395, %v3418
        %v3424 = vmul.f32 %v3396, %v3420
        %3425 = vst [vmem:[%s1117] sm:$0xff] %v3421
        %3426 = vst [vmem:[%s1117 + $0x8] sm:$0xff] %v3422
        %3427 = vst [vmem:[%s1117 + $0x10] sm:$0xff] %v3423
        %3428 = vst [vmem:[%s1117 + $0x18] sm:$0xff] %v3424
        %s3429 = sand.u32 %s705, 1
        %s3430 = scalar_lea.sflag [#allocation4], %s3429
        %s3431 = sand.u32 %s705, 1
        %s3432 = smul.addr %s3431, 32
        %s3433 = scalar_lea.vmem [#allocation26], %s3432
        // Predicated region
        $region197: #{tpu_custom_call.1} parent=135 // pred_check
          %p3434 = pneg %p715
        $region198: #{tpu_custom_call.1} parent=135 // pred_check_branch
          %3436 = sbr.rel (%p3434) target = $region200
        $region199: #{tpu_custom_call.1} parent=135 // pred_region
          %s3438 = ssub.s32 512, 512
          %3439 = vsyncadd %s3430, %s3438
          %s3440 = smul.addr %s83, 4
          %s3441 = smul.addr %s3440, 128
          %s3442 = scalar_lea.hbm %s59, %s3441
          %s3443 = sshll.u32 %s3433, 4
          %s3444 = int_to_ptr.vmem [resolvable:$true] %s3443
          %3449 = dma.vmem_to_hbm [thread:$0]  %s3444, 512, %s3442, %s3430, 256, 256, 16
        $region200: #{tpu_custom_call.1} parent=135 // pred_fallthru
          _
      $region136: #{tpu_custom_call.1} parent=5 // pred_fallthru
        _
      %p3450 = scmp.le.s32.totalorder 2, %s78
      // Predicated region
      $region201: #{tpu_custom_call.1} parent=5 // pred_check
        %p3451 = pneg %p3450
      $region202: #{tpu_custom_call.1} parent=5 // pred_check_branch
        %3453 = sbr.rel (%p3451) target = $region204
      $region203: #{tpu_custom_call.1} parent=5 // pred_region
        %s3454 = ssub.s32 %s78, 2
        // Predicated region
        $region205: #{tpu_custom_call.1} parent=203 // pred_check
          %p3455 = pneg %p721
        $region206: #{tpu_custom_call.1} parent=203 // pred_check_branch
          %3457 = sbr.rel (%p3455) target = $region208
        $region207: #{tpu_custom_call.1} parent=203 // pred_region
          %s3458 = sand.u32 %s706, 1
          %s3459 = scalar_lea.sflag [#allocation4], %s3458
          %s3460 = sand.u32 %s706, 1
          %s3461 = smul.addr %s3460, 32
          %s3462 = scalar_lea.vmem [#allocation26], %s3461
          %3463 = dma.done %s3459, 512
        $region208: #{tpu_custom_call.1} parent=203 // pred_fallthru
          _
      $region204: #{tpu_custom_call.1} parent=5 // pred_fallthru
        _
    $region6: #{tpu_custom_call.1} parent=1 // loop_footer
      %s82 = sadd.s32 1, %s78
    $region7: #{tpu_custom_call.1} parent=1 // loop_footer_branch
      %77 = sbr.rel target = $region3
    $region8: #{tpu_custom_call.1} parent=1 // loop_exit
      _
    %3464 = vsyncpa [#allocation3], 1
    %s3465 = scalar_lea.sflag [#allocation3], 1
    %3466 = vsyncpa %s3465, 1
    %3467 = vsyncpa [#allocation6], 1
    %3468 = vsyncpa [#allocation9], 1
    %3469 = vsyncpa [#allocation12], 1
    %3470 = vsyncpa [#allocation15], 1
    %3471 = vsyncpa [#allocation18], 1
    %3472 = vsyncpa [#allocation21], 1
    %3473 = vsyncpa [#allocation24], 1
    %3474 = vsyncpa [#allocation4], 1
    %s3475 = scalar_lea.sflag [#allocation4], 1
    %3476 = vsyncpa %s3475, 1

</llo_original>
